<compile_context>
chip_gen: v7x
topology: tpu7x:2x2x1
jax: 0.10.0
libtpu: 0.0.40
codegen_flags: <defaults>
</compile_context>

<pallas_src>
import functools

import jax
import jax.numpy as jnp
from jax.experimental import pallas as pl
from jax.experimental.pallas import tpu as pltpu

LN_EPS = 1e-5


def _layer_norm(x, gamma, beta):
    mu = jnp.mean(x, axis=-1, keepdims=True)
    xc = x - mu
    var = jnp.mean(xc * xc, axis=-1, keepdims=True)
    return xc * jax.lax.rsqrt(var + LN_EPS) * gamma + beta


# ----------------------------- fused forward kernel --------------------------
def _graph_encoder_kernel(
    # inputs -------------------------------------------------------------
    h0_hbm, he0_hbm,                    # initial node / edge states  (HBM, pl.ANY)
    gath_hbm,                           # [2E, N] bf16 one-hot gather (HBM, pl.ANY)
    scat_hbm,                           # [N, 2E] bf16 one-hot scatter(HBM, pl.ANY)
    invc_ref,                           # [N, 1] f32  1/clamp(count,1)
    phi_w1_ref, phi_b1_ref, phi_w2_ref, phi_b2_ref,   # stacked (phis, phio, phip)
    ln_g_ref, ln_b_ref,                 # per-layer LayerNorm affine
    gru_w_ref, gru_b_ref,               # fused (node, edge) GRU weights [2, 2D, 4D]
    fln_g_ref, fln_b_ref,               # final LayerNorm affine
    # outputs ------------------------------------------------------------
    h_out_ref, he_out_ref,
    # VMEM scratch (persists across the layer grid) ------------------------
    h_sc, he_sc, hsum_sc, hesum_sc, gath_sc, scat_sc, init_sem,
    *, D, E,
):
    l = pl.program_id(0)

    @pl.when(l == 0)
    def _init():
        # One-time DMA of layer-invariant operands into single-buffered VMEM scratch.
        copies = [
            pltpu.make_async_copy(h0_hbm, h_sc, init_sem.at[0]),
            pltpu.make_async_copy(he0_hbm, he_sc, init_sem.at[1]),
            pltpu.make_async_copy(gath_hbm, gath_sc, init_sem.at[2]),
            pltpu.make_async_copy(scat_hbm, scat_sc, init_sem.at[3]),
        ]
        for c in copies:
            c.start()
        for c in copies:
            c.wait()
        hsum_sc[...] = jnp.zeros_like(hsum_sc)
        hesum_sc[...] = jnp.zeros_like(hesum_sc)

    h_f32 = h_sc[...]
    he_f32 = he_sc[...]
    h_bf = h_f32.astype(jnp.bfloat16)     # cast once, reused by gather + node GRU
    he_bf = he_f32.astype(jnp.bfloat16)   # reused by phip + edge GRU

    # Fused in-kernel gather: one [2E,N] x [N,D] MXU contraction; Hs/Ho are static slices.
    HsHo = jnp.dot(gath_sc[...], h_bf, preferred_element_type=jnp.float32)  # [2E, D]

    def mlp(x_bf, j):  # Linear -> ReLU -> Linear, bf16 MXU / f32 accumulation
        z = jnp.dot(x_bf, phi_w1_ref[j], preferred_element_type=jnp.float32) + phi_b1_ref[j]
        z = jnp.maximum(z, 0.0).astype(jnp.bfloat16)
        return jnp.dot(z, phi_w2_ref[j], preferred_element_type=jnp.float32) + phi_b2_ref[j]

    ps = mlp(HsHo[:E].astype(jnp.bfloat16), 0)    # phis(Hs)
    po = mlp(HsHo[E:].astype(jnp.bfloat16), 1)    # phio(Ho)
    pp = mlp(he_bf, 2)                            # phip(Hp)

    g = ln_g_ref[...]   # [1, D] (shared LN for Ms/Mo/Mp, as in SceneGraphConv)
    b = ln_b_ref[...]
    Ms = _layer_norm(po + pp, g, b)
    Mo = _layer_norm(ps + pp, g, b)
    Mp = _layer_norm(ps + po, g, b)

    # Fused average pooling (scatter_add): one [N,2E] x [2E,D] contraction,
    # divide replaced by a precomputed 1/clamp(count,1) f32 multiply.
    MsMo_bf = jnp.concatenate([Ms, Mo], axis=0).astype(jnp.bfloat16)         # [2E, D]
    Mn = jnp.dot(scat_sc[...], MsMo_bf, preferred_element_type=jnp.float32) * invc_ref[...]

    def gru(x_bf, hprev_bf, hprev_f32, j):
        # torch.nn.GRUCell, gate order (r, z, n); single fused [rows,2D] x [2D,4D] matmul:
        #   cols [0:D)=r, [D:2D)=z, [2D:3D)=n_i (x-only), [3D:4D)=n_h (h-only)
        xh = jnp.concatenate([x_bf, hprev_bf], axis=-1)                       # [rows, 2D]
        gg = jnp.dot(xh, gru_w_ref[j], preferred_element_type=jnp.float32) + gru_b_ref[j]
        r = jax.nn.sigmoid(gg[:, :D])
        z = jax.nn.sigmoid(gg[:, D:2 * D])
        n = jnp.tanh(gg[:, 2 * D:3 * D] + r * gg[:, 3 * D:])
        return (1.0 - z) * n + z * hprev_f32

    h_new = gru(Mn.astype(jnp.bfloat16), h_bf, h_f32, 0)     # node_GRU
    he_new = gru(Mp.astype(jnp.bfloat16), he_bf, he_f32, 1)  # edge_GRU

    h_sc[...] = h_new
    he_sc[...] = he_new
    hsum_sc[...] = hsum_sc[...] + h_new      # == h_outputs.sum(dim=0)
    hesum_sc[...] = hesum_sc[...] + he_new   # == h_edge_outputs.sum(dim=0)

    @pl.when(l == pl.num_programs(0) - 1)
    def _finalize():
        fg = fln_g_ref[...]
        fb = fln_b_ref[...]
        h_out_ref[...] = _layer_norm(hsum_sc[...], fg, fb).astype(h_out_ref.dtype)
        he_out_ref[...] = _layer_norm(hesum_sc[...], fg, fb).astype(he_out_ref.dtype)


# --------------------------- VMEM budget (per review) -------------------------
def _estimate_vmem_bytes(N, E, D):
    f32, bf16 = 4, 2

    def pad(r, c, item, sub):
        return (-(-r // sub) * sub) * (-(-c // 128) * 128) * item

    b = 0
    # persistent single-buffered scratch
    b += 2 * pad(N, D, f32, 8) + 2 * pad(E, D, f32, 8)             # h, hsum, he, hesum
    b += pad(2 * E, N, bf16, 16) + pad(N, 2 * E, bf16, 16)         # gather/scatter one-hots
    # resident outputs + small constants
    b += pad(N, D, f32, 8) + pad(E, D, f32, 8)
    b += 2 * pad(N, 1, f32, 8) + 6 * pad(1, D, f32, 8)
    # per-layer weights (double-buffered by the pipeline)
    per_layer = 6 * pad(D, D, bf16, 16) + 6 * pad(1, D, f32, 8)            # phi
    per_layer += 2 * pad(2 * D, 4 * D, bf16, 16) + 2 * pad(1, 4 * D, f32, 8)  # fused GRUs
    per_layer += 2 * pad(1, D, f32, 8)                                      # per-layer LN
    b += 2 * per_layer
    # rough live f32 intermediates
    b += 3 * pad(2 * E, D, f32, 8) + 8 * pad(E, D, f32, 8) + 4 * pad(N, D, f32, 8)
    b += pad(N, 4 * D, f32, 8) + pad(E, 4 * D, f32, 8)
    return b


def _vmem_limit_bytes(N, E, D):
    est = _estimate_vmem_bytes(N, E, D)
    try:
        phys = int(pltpu.get_tpu_info().vmem_capacity_bytes)
    except Exception:
        phys = 64 * 1024 * 1024  # conservative: v7x per-core VMEM
    return int(min(0.9 * phys, max(32 * 1024 * 1024, 1.5 * est)))


# ------------------------------ host-side wrapper -----------------------------
def graph_encoder_forward(h, h_edge, edge_index, params, *, ndim, nlayer):
    N, D = h.shape
    E = h_edge.shape[0]
    assert D == ndim and D % 128 == 0, "hidden dim must be a multiple of 128"
    assert N % 8 == 0 and E % 8 == 0, "pad node/edge counts to multiples of 8"

    s_idx = edge_index[0, :]
    o_idx = edge_index[1, :]

    # Layer-invariant gather / scatter operands (built once, DMAed once into scratch).
    s_oh_f = jax.nn.one_hot(s_idx, N, dtype=jnp.float32)             # [E, N]
    o_oh_f = jax.nn.one_hot(o_idx, N, dtype=jnp.float32)             # [E, N]
    counts = jnp.sum(s_oh_f, axis=0) + jnp.sum(o_oh_f, axis=0)       # [N]
    inv_counts = (1.0 / jnp.maximum(counts, 1.0)).reshape(N, 1)      # clamp(min=1), f32
    gath_oh = jnp.concatenate([s_oh_f, o_oh_f], axis=0).astype(jnp.bfloat16)    # [2E, N]
    scat_oh = jnp.concatenate([s_oh_f.T, o_oh_f.T], axis=1).astype(jnp.bfloat16)  # [N, 2E]

    # Fuse GRU ih/hh weights into one [2D, 4D] contraction per GRU (r | z | n_i | n_h).
    wih, whh = params["gru_wih"], params["gru_whh"]      # [L, 2, D, 3D]
    bih, bhh = params["gru_bih"], params["gru_bhh"]      # [L, 2, 1, 3D]
    L = wih.shape[0]
    zblk = jnp.zeros((L, 2, D, D), jnp.float32)
    gru_w = jnp.concatenate(
        [jnp.concatenate([wih[..., :2 * D], wih[..., 2 * D:], zblk], axis=-1),   # x rows
         jnp.concatenate([whh[..., :2 * D], zblk, whh[..., 2 * D:]], axis=-1)],  # h rows
        axis=-2).astype(jnp.bfloat16)                                            # [L,2,2D,4D]
    gru_b = jnp.concatenate(
        [bih[..., :2 * D] + bhh[..., :2 * D], bih[..., 2 * D:], bhh[..., 2 * D:]],
        axis=-1)                                                                 # [L,2,1,4D]

    bf = lambda x: x.astype(jnp.bfloat16)
    const2 = lambda l: (0, 0)
    wmap3 = lambda l: (l, 0, 0)
    wmap4 = lambda l: (l, 0, 0, 0)

    grid_spec = pltpu.PrefetchScalarGridSpec(
        num_scalar_prefetch=0,
        grid=(nlayer,),
        in_specs=[
            pl.BlockSpec(memory_space=pl.ANY),                          # h0      (HBM)
            pl.BlockSpec(memory_space=pl.ANY),                          # h_edge0 (HBM)
            pl.BlockSpec(memory_space=pl.ANY),                          # gather one-hot
            pl.BlockSpec(memory_space=pl.ANY),                          # scatter one-hot
            pl.BlockSpec((N, 1), const2),                               # inv_counts
            pl.BlockSpec((None, 3, D, D), wmap4),                       # phi_w1
            pl.BlockSpec((None, 3, 1, D), wmap4),                       # phi_b1
            pl.BlockSpec((None, 3, D, D), wmap4),                       # phi_w2
            pl.BlockSpec((None, 3, 1, D), wmap4),                       # phi_b2
            pl.BlockSpec((None, 1, D), wmap3),                          # ln_g
            pl.BlockSpec((None, 1, D), wmap3),                          # ln_b
            pl.BlockSpec((None, 2, 2 * D, 4 * D), wmap4),               # fused gru_w
            pl.BlockSpec((None, 2, 1, 4 * D), wmap4),                   # fused gru_b
            pl.BlockSpec((1, D), const2),                               # final ln gamma
            pl.BlockSpec((1, D), const2),                               # final ln beta
        ],
        out_specs=[
            pl.BlockSpec((N, D), const2),
            pl.BlockSpec((E, D), const2),
        ],
        scratch_shapes=[
            pltpu.VMEM((N, D), jnp.float32),        # h
            pltpu.VMEM((E, D), jnp.float32),        # h_edge
            pltpu.VMEM((N, D), jnp.float32),        # running sum of h
            pltpu.VMEM((E, D), jnp.float32),        # running sum of h_edge
            pltpu.VMEM((2 * E, N), jnp.bfloat16),   # gather one-hot (single-buffered)
            pltpu.VMEM((N, 2 * E), jnp.bfloat16),   # scatter one-hot (single-buffered)
            pltpu.SemaphoreType.DMA((4,)),          # init DMAs
        ],
    )

    return pl.pallas_call(
        functools.partial(_graph_encoder_kernel, D=D, E=E),
        out_shape=(jax.ShapeDtypeStruct((N, D), jnp.float32),
                   jax.ShapeDtypeStruct((E, D), jnp.float32)),
        grid_spec=grid_spec,
        compiler_params=pltpu.CompilerParams(
            dimension_semantics=("arbitrary",),          # layer axis is sequential
            vmem_limit_bytes=_vmem_limit_bytes(N, E, D),
        ),
    )(
        h, h_edge, gath_oh, scat_oh, inv_counts,
        bf(params["phi_w1"]), params["phi_b1"], bf(params["phi_w2"]), params["phi_b2"],
        params["ln_g"], params["ln_b"],
        gru_w, gru_b,
        params["fln_g"], params["fln_b"],
    )


# --------------------------- parameter construction --------------------------
def init_graph_encoder(key, ndim, nlayer, scale=0.05):
    d = ndim

    def linear(k, din, dout):
        kw, kb = jax.random.split(k)
        return (jax.random.normal(kw, (din, dout), jnp.float32) * scale,
                jax.random.normal(kb, (1, dout), jnp.float32) * scale)

    phi_w1, phi_b1, phi_w2, phi_b2 = [], [], [], []
    ln_g, ln_b = [], []
    gru_wih, gru_bih, gru_whh, gru_bhh = [], [], [], []

    keys = jax.random.split(key, nlayer)
    for i in range(nlayer):
        ks = jax.random.split(keys[i], 10)
        w1s, b1s, w2s, b2s = [], [], [], []
        for j in range(3):  # phis, phio, phip
            w1, b1 = linear(ks[2 * j], d, d)
            w2, b2 = linear(ks[2 * j + 1], d, d)
            w1s.append(w1); b1s.append(b1); w2s.append(w2); b2s.append(b2)
        phi_w1.append(jnp.stack(w1s)); phi_b1.append(jnp.stack(b1s))
        phi_w2.append(jnp.stack(w2s)); phi_b2.append(jnp.stack(b2s))
        ln_g.append(jnp.ones((1, d), jnp.float32))
        ln_b.append(jnp.zeros((1, d), jnp.float32))
        wihs, bihs, whhs, bhhs = [], [], [], []
        for j in range(2):  # node_GRU, edge_GRU  (torch layout: gates ordered r, z, n)
            kk = jax.random.split(ks[6 + 2 * j], 4)
            wihs.append(jax.random.normal(kk[0], (d, 3 * d), jnp.float32) * scale)
            bihs.append(jax.random.normal(kk[1], (1, 3 * d), jnp.float32) * scale)
            whhs.append(jax.random.normal(kk[2], (d, 3 * d), jnp.float32) * scale)
            bhhs.append(jax.random.normal(kk[3], (1, 3 * d), jnp.float32) * scale)
        gru_wih.append(jnp.stack(wihs)); gru_bih.append(jnp.stack(bihs))
        gru_whh.append(jnp.stack(whhs)); gru_bhh.append(jnp.stack(bhhs))

    return dict(
        phi_w1=jnp.stack(phi_w1), phi_b1=jnp.stack(phi_b1),
        phi_w2=jnp.stack(phi_w2), phi_b2=jnp.stack(phi_b2),
        ln_g=jnp.stack(ln_g), ln_b=jnp.stack(ln_b),
        gru_wih=jnp.stack(gru_wih), gru_bih=jnp.stack(gru_bih),
        gru_whh=jnp.stack(gru_whh), gru_bhh=jnp.stack(gru_bhh),
        fln_g=jnp.ones((1, d), jnp.float32),
        fln_b=jnp.zeros((1, d), jnp.float32),
    )


# ------------------------------------ main ------------------------------------
if __name__ == "__main__":
    NDIM = 128      # hidden size (module default 512; small for the demo)
    NLAYER = 5      # GraphEncoder default
    N_NODES = 16
    N_EDGES = 32

    root = jax.random.PRNGKey(0)
    k_h, k_he, k_e, k_p = jax.random.split(root, 4)

    h0 = jax.random.normal(k_h, (N_NODES, NDIM), jnp.float32)
    h_edge0 = jax.random.normal(k_he, (N_EDGES, NDIM), jnp.float32)
    edge_index = jax.random.randint(k_e, (2, N_EDGES), 0, N_NODES, dtype=jnp.int32)

    params = init_graph_encoder(k_p, NDIM, NLAYER)

    fwd = jax.jit(functools.partial(graph_encoder_forward, ndim=NDIM, nlayer=NLAYER))
    h_final, h_edge_final = fwd(h0, h_edge0, edge_index, params)
    jax.block_until_ready((h_final, h_edge_final))

    assert h_final.shape == (N_NODES, NDIM)
    assert h_edge_final.shape == (N_EDGES, NDIM)
    assert bool(jnp.all(jnp.isfinite(h_final))) and bool(jnp.all(jnp.isfinite(h_edge_final)))

    print("KERNEL_OK")
</pallas_src>

<mosaic_0001>
module attributes {stable_mosaic.version = 11 : i64} {
  func.func @_graph_encoder_kernel(%arg0: i32, %arg1: memref<16x128xf32, #tpu.memory_space<any>>, %arg2: memref<32x128xf32, #tpu.memory_space<any>>, %arg3: memref<64x16xbf16, #tpu.memory_space<any>>, %arg4: memref<16x64xbf16, #tpu.memory_space<any>>, %arg5: memref<16x1xf32, #tpu.memory_space<vmem>>, %arg6: memref<1x3x128x128xbf16, #tpu.memory_space<vmem>>, %arg7: memref<1x3x1x128xf32, #tpu.memory_space<vmem>>, %arg8: memref<1x3x128x128xbf16, #tpu.memory_space<vmem>>, %arg9: memref<1x3x1x128xf32, #tpu.memory_space<vmem>>, %arg10: memref<1x1x128xf32, #tpu.memory_space<vmem>>, %arg11: memref<1x1x128xf32, #tpu.memory_space<vmem>>, %arg12: memref<1x2x256x512xbf16, #tpu.memory_space<vmem>>, %arg13: memref<1x2x1x512xf32, #tpu.memory_space<vmem>>, %arg14: memref<1x128xf32, #tpu.memory_space<vmem>>, %arg15: memref<1x128xf32, #tpu.memory_space<vmem>>, %arg16: memref<16x128xf32, #tpu.memory_space<vmem>>, %arg17: memref<32x128xf32, #tpu.memory_space<vmem>>, %arg18: memref<16x128xf32, #tpu.memory_space<vmem>>, %arg19: memref<32x128xf32, #tpu.memory_space<vmem>>, %arg20: memref<16x128xf32, #tpu.memory_space<vmem>>, %arg21: memref<32x128xf32, #tpu.memory_space<vmem>>, %arg22: memref<64x16xbf16, #tpu.memory_space<vmem>>, %arg23: memref<16x64xbf16, #tpu.memory_space<vmem>>, %arg24: memref<4x!tpu.dma_semaphore, #tpu.memory_space<semaphore_mem>>) attributes {dimension_semantics = [#tpu.dimension_semantics<arbitrary>], iteration_bounds = array<i64: 5>, scalar_prefetch = 0 : i64, scratch_operands = 7 : i64, tpu.core_type = #tpu.core_type<tc>, window_params = [{}, {}, {}, {}, {pipeline_mode = #tpu.pipeline_mode<synchronous>, transform_indices = @transform_4, window_bounds = array<i64: 16, 1>}, {transform_indices = @transform_5, window_bounds = array<i64: 1, 3, 128, 128>}, {transform_indices = @transform_6, window_bounds = array<i64: 1, 3, 1, 128>}, {transform_indices = @transform_7, window_bounds = array<i64: 1, 3, 128, 128>}, {transform_indices = @transform_8, window_bounds = array<i64: 1, 3, 1, 128>}, {transform_indices = @transform_9, window_bounds = array<i64: 1, 1, 128>}, {transform_indices = @transform_10, window_bounds = array<i64: 1, 1, 128>}, {transform_indices = @transform_11, window_bounds = array<i64: 1, 2, 256, 512>}, {transform_indices = @transform_12, window_bounds = array<i64: 1, 2, 1, 512>}, {pipeline_mode = #tpu.pipeline_mode<synchronous>, transform_indices = @transform_13, window_bounds = array<i64: 1, 128>}, {pipeline_mode = #tpu.pipeline_mode<synchronous>, transform_indices = @transform_14, window_bounds = array<i64: 1, 128>}, {pipeline_mode = #tpu.pipeline_mode<synchronous>, transform_indices = @transform_15, window_bounds = array<i64: 16, 128>}, {pipeline_mode = #tpu.pipeline_mode<synchronous>, transform_indices = @transform_16, window_bounds = array<i64: 32, 128>}]} {
    %c0_i32 = arith.constant 0 : i32
    %0 = arith.cmpi eq, %arg0, %c0_i32 : i32
    %1 = arith.extui %0 : i1 to i32
    %c0_i32_0 = arith.constant 0 : i32
    %2 = arith.cmpi ne, %1, %c0_i32_0 : i32
    scf.if %2 {
      %c0_i32_124 = arith.constant 0 : i32
      %211 = tpu.memref_slice %arg24[%c0_i32_124] : memref<4x!tpu.dma_semaphore, #tpu.memory_space<semaphore_mem>> -> memref<1x!tpu.dma_semaphore, #tpu.memory_space<semaphore_mem>>
      %212 = tpu.memref_squeeze %211 : memref<1x!tpu.dma_semaphore, #tpu.memory_space<semaphore_mem>> -> memref<!tpu.dma_semaphore, #tpu.memory_space<semaphore_mem>>
      tpu.enqueue_dma source(%arg1 : memref<16x128xf32, #tpu.memory_space<any>>) target(%arg18 : memref<16x128xf32, #tpu.memory_space<vmem>>) target_semaphore(%212 : memref<!tpu.dma_semaphore, #tpu.memory_space<semaphore_mem>>)
      %c1_i32 = arith.constant 1 : i32
      %213 = tpu.memref_slice %arg24[%c1_i32] : memref<4x!tpu.dma_semaphore, #tpu.memory_space<semaphore_mem>> -> memref<1x!tpu.dma_semaphore, #tpu.memory_space<semaphore_mem>>
      %214 = tpu.memref_squeeze %213 : memref<1x!tpu.dma_semaphore, #tpu.memory_space<semaphore_mem>> -> memref<!tpu.dma_semaphore, #tpu.memory_space<semaphore_mem>>
      tpu.enqueue_dma source(%arg2 : memref<32x128xf32, #tpu.memory_space<any>>) target(%arg19 : memref<32x128xf32, #tpu.memory_space<vmem>>) target_semaphore(%214 : memref<!tpu.dma_semaphore, #tpu.memory_space<semaphore_mem>>)
      %c2_i32 = arith.constant 2 : i32
      %215 = tpu.memref_slice %arg24[%c2_i32] : memref<4x!tpu.dma_semaphore, #tpu.memory_space<semaphore_mem>> -> memref<1x!tpu.dma_semaphore, #tpu.memory_space<semaphore_mem>>
      %216 = tpu.memref_squeeze %215 : memref<1x!tpu.dma_semaphore, #tpu.memory_space<semaphore_mem>> -> memref<!tpu.dma_semaphore, #tpu.memory_space<semaphore_mem>>
      tpu.enqueue_dma source(%arg3 : memref<64x16xbf16, #tpu.memory_space<any>>) target(%arg22 : memref<64x16xbf16, #tpu.memory_space<vmem>>) target_semaphore(%216 : memref<!tpu.dma_semaphore, #tpu.memory_space<semaphore_mem>>)
      %c3_i32 = arith.constant 3 : i32
      %217 = tpu.memref_slice %arg24[%c3_i32] : memref<4x!tpu.dma_semaphore, #tpu.memory_space<semaphore_mem>> -> memref<1x!tpu.dma_semaphore, #tpu.memory_space<semaphore_mem>>
      %218 = tpu.memref_squeeze %217 : memref<1x!tpu.dma_semaphore, #tpu.memory_space<semaphore_mem>> -> memref<!tpu.dma_semaphore, #tpu.memory_space<semaphore_mem>>
      tpu.enqueue_dma source(%arg4 : memref<16x64xbf16, #tpu.memory_space<any>>) target(%arg23 : memref<16x64xbf16, #tpu.memory_space<vmem>>) target_semaphore(%218 : memref<!tpu.dma_semaphore, #tpu.memory_space<semaphore_mem>>)
      %c0_i32_125 = arith.constant 0 : i32
      %219 = tpu.memref_slice %arg24[%c0_i32_125] : memref<4x!tpu.dma_semaphore, #tpu.memory_space<semaphore_mem>> -> memref<1x!tpu.dma_semaphore, #tpu.memory_space<semaphore_mem>>
      %220 = tpu.memref_squeeze %219 : memref<1x!tpu.dma_semaphore, #tpu.memory_space<semaphore_mem>> -> memref<!tpu.dma_semaphore, #tpu.memory_space<semaphore_mem>>
      tpu.wait_dma2 semaphore(%220 : memref<!tpu.dma_semaphore, #tpu.memory_space<semaphore_mem>>) src(%arg1 : memref<16x128xf32, #tpu.memory_space<any>>) dst(%arg18 : memref<16x128xf32, #tpu.memory_space<vmem>>)
      %c1_i32_126 = arith.constant 1 : i32
      %221 = tpu.memref_slice %arg24[%c1_i32_126] : memref<4x!tpu.dma_semaphore, #tpu.memory_space<semaphore_mem>> -> memref<1x!tpu.dma_semaphore, #tpu.memory_space<semaphore_mem>>
      %222 = tpu.memref_squeeze %221 : memref<1x!tpu.dma_semaphore, #tpu.memory_space<semaphore_mem>> -> memref<!tpu.dma_semaphore, #tpu.memory_space<semaphore_mem>>
      tpu.wait_dma2 semaphore(%222 : memref<!tpu.dma_semaphore, #tpu.memory_space<semaphore_mem>>) src(%arg2 : memref<32x128xf32, #tpu.memory_space<any>>) dst(%arg19 : memref<32x128xf32, #tpu.memory_space<vmem>>)
      %c2_i32_127 = arith.constant 2 : i32
      %223 = tpu.memref_slice %arg24[%c2_i32_127] : memref<4x!tpu.dma_semaphore, #tpu.memory_space<semaphore_mem>> -> memref<1x!tpu.dma_semaphore, #tpu.memory_space<semaphore_mem>>
      %224 = tpu.memref_squeeze %223 : memref<1x!tpu.dma_semaphore, #tpu.memory_space<semaphore_mem>> -> memref<!tpu.dma_semaphore, #tpu.memory_space<semaphore_mem>>
      tpu.wait_dma2 semaphore(%224 : memref<!tpu.dma_semaphore, #tpu.memory_space<semaphore_mem>>) src(%arg3 : memref<64x16xbf16, #tpu.memory_space<any>>) dst(%arg22 : memref<64x16xbf16, #tpu.memory_space<vmem>>)
      %c3_i32_128 = arith.constant 3 : i32
      %225 = tpu.memref_slice %arg24[%c3_i32_128] : memref<4x!tpu.dma_semaphore, #tpu.memory_space<semaphore_mem>> -> memref<1x!tpu.dma_semaphore, #tpu.memory_space<semaphore_mem>>
      %226 = tpu.memref_squeeze %225 : memref<1x!tpu.dma_semaphore, #tpu.memory_space<semaphore_mem>> -> memref<!tpu.dma_semaphore, #tpu.memory_space<semaphore_mem>>
      tpu.wait_dma2 semaphore(%226 : memref<!tpu.dma_semaphore, #tpu.memory_space<semaphore_mem>>) src(%arg4 : memref<16x64xbf16, #tpu.memory_space<any>>) dst(%arg23 : memref<16x64xbf16, #tpu.memory_space<vmem>>)
      %cst_129 = arith.constant 0.000000e+00 : f32
      %227 = vector.broadcast %cst_129 : f32 to vector<16x128xf32>
      %c0_130 = arith.constant 0 : index
      %c0_131 = arith.constant 0 : index
      %228 = vector.load %arg20[%c0_130, %c0_131] : memref<16x128xf32, #tpu.memory_space<vmem>>, vector<16x128xf32>
      tpu.vector_store %arg20[%c0_130, %c0_131], %227 {strides = array<i32>} : memref<16x128xf32, #tpu.memory_space<vmem>>, vector<16x128xf32>,
      %cst_132 = arith.constant 0.000000e+00 : f32
      %229 = vector.broadcast %cst_132 : f32 to vector<32x128xf32>
      %c0_133 = arith.constant 0 : index
      %c0_134 = arith.constant 0 : index
      %230 = vector.load %arg21[%c0_133, %c0_134] : memref<32x128xf32, #tpu.memory_space<vmem>>, vector<32x128xf32>
      tpu.vector_store %arg21[%c0_133, %c0_134], %229 {strides = array<i32>} : memref<32x128xf32, #tpu.memory_space<vmem>>, vector<32x128xf32>,
    } else {
    }
    %c0 = arith.constant 0 : index
    %c0_1 = arith.constant 0 : index
    %3 = vector.load %arg18[%c0, %c0_1] : memref<16x128xf32, #tpu.memory_space<vmem>>, vector<16x128xf32>
    %c0_2 = arith.constant 0 : index
    %c0_3 = arith.constant 0 : index
    %4 = vector.load %arg19[%c0_2, %c0_3] : memref<32x128xf32, #tpu.memory_space<vmem>>, vector<32x128xf32>
    %5 = arith.truncf %3 : vector<16x128xf32> to vector<16x128xbf16>
    %6 = arith.truncf %4 : vector<32x128xf32> to vector<32x128xbf16>
    %c0_4 = arith.constant 0 : index
    %c0_5 = arith.constant 0 : index
    %7 = vector.load %arg22[%c0_4, %c0_5] : memref<64x16xbf16, #tpu.memory_space<vmem>>, vector<64x16xbf16>
    %cst = arith.constant dense<0.000000e+00> : vector<64x128xf32>
    %8 = tpu.matmul %7, %5, %cst {dimension_numbers = #tpu.dot_dimension_numbers<[1], [0], [0], [1], [0, 0, 1, 1], [], []>} : vector<64x16xbf16>, vector<16x128xbf16>, vector<64x128xf32> -> vector<64x128xf32>
    %9 = vector.extract_strided_slice %8 {offsets = [0, 0], sizes = [32, 128], strides = [1, 1]} : vector<64x128xf32> to vector<32x128xf32>
    %10 = arith.truncf %9 : vector<32x128xf32> to vector<32x128xbf16>
    %c0_6 = arith.constant 0 : index
    %c0_7 = arith.constant 0 : index
    %c0_8 = arith.constant 0 : index
    %c0_9 = arith.constant 0 : index
    %11 = vector.load %arg6[%c0_6, %c0_7, %c0_8, %c0_9] : memref<1x3x128x128xbf16, #tpu.memory_space<vmem>>, vector<1x1x128x128xbf16>
    %12 = vector.shape_cast %11 : vector<1x1x128x128xbf16> to vector<128x128xbf16>
    %cst_10 = arith.constant dense<0.000000e+00> : vector<32x128xf32>
    %13 = tpu.matmul %10, %12, %cst_10 {dimension_numbers = #tpu.dot_dimension_numbers<[1], [0], [0], [1], [0, 0, 1, 1], [], []>} : vector<32x128xbf16>, vector<128x128xbf16>, vector<32x128xf32> -> vector<32x128xf32>
    %c0_11 = arith.constant 0 : index
    %c0_12 = arith.constant 0 : index
    %c0_13 = arith.constant 0 : index
    %c0_14 = arith.constant 0 : index
    %14 = vector.load %arg7[%c0_11, %c0_12, %c0_13, %c0_14] : memref<1x3x1x128xf32, #tpu.memory_space<vmem>>, vector<1x1x1x128xf32>
    %15 = vector.shape_cast %14 : vector<1x1x1x128xf32> to vector<1x128xf32>
    %16 = vector.broadcast %15 : vector<1x128xf32> to vector<32x128xf32>
    %17 = arith.addf %13, %16 : vector<32x128xf32>
    %cst_15 = arith.constant 0.000000e+00 : f32
    %18 = vector.broadcast %cst_15 : f32 to vector<32x128xf32>
    %19 = arith.maximumf %17, %18 : vector<32x128xf32>
    %20 = arith.truncf %19 : vector<32x128xf32> to vector<32x128xbf16>
    %c0_16 = arith.constant 0 : index
    %c0_17 = arith.constant 0 : index
    %c0_18 = arith.constant 0 : index
    %c0_19 = arith.constant 0 : index
    %21 = vector.load %arg8[%c0_16, %c0_17, %c0_18, %c0_19] : memref<1x3x128x128xbf16, #tpu.memory_space<vmem>>, vector<1x1x128x128xbf16>
    %22 = vector.shape_cast %21 : vector<1x1x128x128xbf16> to vector<128x128xbf16>
    %cst_20 = arith.constant dense<0.000000e+00> : vector<32x128xf32>
    %23 = tpu.matmul %20, %22, %cst_20 {dimension_numbers = #tpu.dot_dimension_numbers<[1], [0], [0], [1], [0, 0, 1, 1], [], []>} : vector<32x128xbf16>, vector<128x128xbf16>, vector<32x128xf32> -> vector<32x128xf32>
    %c0_21 = arith.constant 0 : index
    %c0_22 = arith.constant 0 : index
    %c0_23 = arith.constant 0 : index
    %c0_24 = arith.constant 0 : index
    %24 = vector.load %arg9[%c0_21, %c0_22, %c0_23, %c0_24] : memref<1x3x1x128xf32, #tpu.memory_space<vmem>>, vector<1x1x1x128xf32>
    %25 = vector.shape_cast %24 : vector<1x1x1x128xf32> to vector<1x128xf32>
    %26 = vector.broadcast %25 : vector<1x128xf32> to vector<32x128xf32>
    %27 = arith.addf %23, %26 : vector<32x128xf32>
    %28 = vector.extract_strided_slice %8 {offsets = [32, 0], sizes = [32, 128], strides = [1, 1]} : vector<64x128xf32> to vector<32x128xf32>
    %29 = arith.truncf %28 : vector<32x128xf32> to vector<32x128xbf16>
    %c0_25 = arith.constant 0 : index
    %c1 = arith.constant 1 : index
    %c0_26 = arith.constant 0 : index
    %c0_27 = arith.constant 0 : index
    %30 = vector.load %arg6[%c0_25, %c1, %c0_26, %c0_27] : memref<1x3x128x128xbf16, #tpu.memory_space<vmem>>, vector<1x1x128x128xbf16>
    %31 = vector.shape_cast %30 : vector<1x1x128x128xbf16> to vector<128x128xbf16>
    %cst_28 = arith.constant dense<0.000000e+00> : vector<32x128xf32>
    %32 = tpu.matmul %29, %31, %cst_28 {dimension_numbers = #tpu.dot_dimension_numbers<[1], [0], [0], [1], [0, 0, 1, 1], [], []>} : vector<32x128xbf16>, vector<128x128xbf16>, vector<32x128xf32> -> vector<32x128xf32>
    %c0_29 = arith.constant 0 : index
    %c1_30 = arith.constant 1 : index
    %c0_31 = arith.constant 0 : index
    %c0_32 = arith.constant 0 : index
    %33 = vector.load %arg7[%c0_29, %c1_30, %c0_31, %c0_32] : memref<1x3x1x128xf32, #tpu.memory_space<vmem>>, vector<1x1x1x128xf32>
    %34 = vector.shape_cast %33 : vector<1x1x1x128xf32> to vector<1x128xf32>
    %35 = vector.broadcast %34 : vector<1x128xf32> to vector<32x128xf32>
    %36 = arith.addf %32, %35 : vector<32x128xf32>
    %cst_33 = arith.constant 0.000000e+00 : f32
    %37 = vector.broadcast %cst_33 : f32 to vector<32x128xf32>
    %38 = arith.maximumf %36, %37 : vector<32x128xf32>
    %39 = arith.truncf %38 : vector<32x128xf32> to vector<32x128xbf16>
    %c0_34 = arith.constant 0 : index
    %c1_35 = arith.constant 1 : index
    %c0_36 = arith.constant 0 : index
    %c0_37 = arith.constant 0 : index
    %40 = vector.load %arg8[%c0_34, %c1_35, %c0_36, %c0_37] : memref<1x3x128x128xbf16, #tpu.memory_space<vmem>>, vector<1x1x128x128xbf16>
    %41 = vector.shape_cast %40 : vector<1x1x128x128xbf16> to vector<128x128xbf16>
    %cst_38 = arith.constant dense<0.000000e+00> : vector<32x128xf32>
    %42 = tpu.matmul %39, %41, %cst_38 {dimension_numbers = #tpu.dot_dimension_numbers<[1], [0], [0], [1], [0, 0, 1, 1], [], []>} : vector<32x128xbf16>, vector<128x128xbf16>, vector<32x128xf32> -> vector<32x128xf32>
    %c0_39 = arith.constant 0 : index
    %c1_40 = arith.constant 1 : index
    %c0_41 = arith.constant 0 : index
    %c0_42 = arith.constant 0 : index
    %43 = vector.load %arg9[%c0_39, %c1_40, %c0_41, %c0_42] : memref<1x3x1x128xf32, #tpu.memory_space<vmem>>, vector<1x1x1x128xf32>
    %44 = vector.shape_cast %43 : vector<1x1x1x128xf32> to vector<1x128xf32>
    %45 = vector.broadcast %44 : vector<1x128xf32> to vector<32x128xf32>
    %46 = arith.addf %42, %45 : vector<32x128xf32>
    %c0_43 = arith.constant 0 : index
    %c2 = arith.constant 2 : index
    %c0_44 = arith.constant 0 : index
    %c0_45 = arith.constant 0 : index
    %47 = vector.load %arg6[%c0_43, %c2, %c0_44, %c0_45] : memref<1x3x128x128xbf16, #tpu.memory_space<vmem>>, vector<1x1x128x128xbf16>
    %48 = vector.shape_cast %47 : vector<1x1x128x128xbf16> to vector<128x128xbf16>
    %cst_46 = arith.constant dense<0.000000e+00> : vector<32x128xf32>
    %49 = tpu.matmul %6, %48, %cst_46 {dimension_numbers = #tpu.dot_dimension_numbers<[1], [0], [0], [1], [0, 0, 1, 1], [], []>} : vector<32x128xbf16>, vector<128x128xbf16>, vector<32x128xf32> -> vector<32x128xf32>
    %c0_47 = arith.constant 0 : index
    %c2_48 = arith.constant 2 : index
    %c0_49 = arith.constant 0 : index
    %c0_50 = arith.constant 0 : index
    %50 = vector.load %arg7[%c0_47, %c2_48, %c0_49, %c0_50] : memref<1x3x1x128xf32, #tpu.memory_space<vmem>>, vector<1x1x1x128xf32>
    %51 = vector.shape_cast %50 : vector<1x1x1x128xf32> to vector<1x128xf32>
    %52 = vector.broadcast %51 : vector<1x128xf32> to vector<32x128xf32>
    %53 = arith.addf %49, %52 : vector<32x128xf32>
    %cst_51 = arith.constant 0.000000e+00 : f32
    %54 = vector.broadcast %cst_51 : f32 to vector<32x128xf32>
    %55 = arith.maximumf %53, %54 : vector<32x128xf32>
    %56 = arith.truncf %55 : vector<32x128xf32> to vector<32x128xbf16>
    %c0_52 = arith.constant 0 : index
    %c2_53 = arith.constant 2 : index
    %c0_54 = arith.constant 0 : index
    %c0_55 = arith.constant 0 : index
    %57 = vector.load %arg8[%c0_52, %c2_53, %c0_54, %c0_55] : memref<1x3x128x128xbf16, #tpu.memory_space<vmem>>, vector<1x1x128x128xbf16>
    %58 = vector.shape_cast %57 : vector<1x1x128x128xbf16> to vector<128x128xbf16>
    %cst_56 = arith.constant dense<0.000000e+00> : vector<32x128xf32>
    %59 = tpu.matmul %56, %58, %cst_56 {dimension_numbers = #tpu.dot_dimension_numbers<[1], [0], [0], [1], [0, 0, 1, 1], [], []>} : vector<32x128xbf16>, vector<128x128xbf16>, vector<32x128xf32> -> vector<32x128xf32>
    %c0_57 = arith.constant 0 : index
    %c2_58 = arith.constant 2 : index
    %c0_59 = arith.constant 0 : index
    %c0_60 = arith.constant 0 : index
    %60 = vector.load %arg9[%c0_57, %c2_58, %c0_59, %c0_60] : memref<1x3x1x128xf32, #tpu.memory_space<vmem>>, vector<1x1x1x128xf32>
    %61 = vector.shape_cast %60 : vector<1x1x1x128xf32> to vector<1x128xf32>
    %62 = vector.broadcast %61 : vector<1x128xf32> to vector<32x128xf32>
    %63 = arith.addf %59, %62 : vector<32x128xf32>
    %c0_61 = arith.constant 0 : index
    %c0_62 = arith.constant 0 : index
    %c0_63 = arith.constant 0 : index
    %64 = vector.load %arg10[%c0_61, %c0_62, %c0_63] : memref<1x1x128xf32, #tpu.memory_space<vmem>>, vector<1x1x128xf32>
    %65 = vector.shape_cast %64 : vector<1x1x128xf32> to vector<1x128xf32>
    %c0_64 = arith.constant 0 : index
    %c0_65 = arith.constant 0 : index
    %c0_66 = arith.constant 0 : index
    %66 = vector.load %arg11[%c0_64, %c0_65, %c0_66] : memref<1x1x128xf32, #tpu.memory_space<vmem>>, vector<1x1x128xf32>
    %67 = vector.shape_cast %66 : vector<1x1x128xf32> to vector<1x128xf32>
    %68 = arith.addf %46, %63 : vector<32x128xf32>
    %cst_67 = arith.constant dense<0.000000e+00> : vector<32xf32>
    %69 = vector.multi_reduction <add>, %68, %cst_67 [1] : vector<32x128xf32> to vector<32xf32>
    %70 = vector.shape_cast %69 : vector<32xf32> to vector<32x1xf32>
    %cst_68 = arith.constant 1.280000e+02 : f32
    %71 = vector.broadcast %cst_68 : f32 to vector<32x1xf32>
    %72 = arith.divf %70, %71 : vector<32x1xf32>
    %73 = vector.broadcast %72 : vector<32x1xf32> to vector<32x128xf32>
    %74 = arith.subf %68, %73 : vector<32x128xf32>
    %75 = arith.mulf %74, %74 : vector<32x128xf32>
    %cst_69 = arith.constant dense<0.000000e+00> : vector<32xf32>
    %76 = vector.multi_reduction <add>, %75, %cst_69 [1] : vector<32x128xf32> to vector<32xf32>
    %77 = vector.shape_cast %76 : vector<32xf32> to vector<32x1xf32>
    %cst_70 = arith.constant 1.280000e+02 : f32
    %78 = vector.broadcast %cst_70 : f32 to vector<32x1xf32>
    %79 = arith.divf %77, %78 : vector<32x1xf32>
    %cst_71 = arith.constant 9.99999974E-6 : f32
    %80 = vector.broadcast %cst_71 : f32 to vector<32x1xf32>
    %81 = arith.addf %79, %80 : vector<32x1xf32>
    %82 = math.rsqrt %81 : vector<32x1xf32>
    %83 = vector.broadcast %82 : vector<32x1xf32> to vector<32x128xf32>
    %84 = arith.mulf %74, %83 : vector<32x128xf32>
    %85 = vector.broadcast %65 : vector<1x128xf32> to vector<32x128xf32>
    %86 = arith.mulf %84, %85 : vector<32x128xf32>
    %87 = vector.broadcast %67 : vector<1x128xf32> to vector<32x128xf32>
    %88 = arith.addf %86, %87 : vector<32x128xf32>
    %89 = arith.addf %27, %63 : vector<32x128xf32>
    %cst_72 = arith.constant dense<0.000000e+00> : vector<32xf32>
    %90 = vector.multi_reduction <add>, %89, %cst_72 [1] : vector<32x128xf32> to vector<32xf32>
    %91 = vector.shape_cast %90 : vector<32xf32> to vector<32x1xf32>
    %cst_73 = arith.constant 1.280000e+02 : f32
    %92 = vector.broadcast %cst_73 : f32 to vector<32x1xf32>
    %93 = arith.divf %91, %92 : vector<32x1xf32>
    %94 = vector.broadcast %93 : vector<32x1xf32> to vector<32x128xf32>
    %95 = arith.subf %89, %94 : vector<32x128xf32>
    %96 = arith.mulf %95, %95 : vector<32x128xf32>
    %cst_74 = arith.constant dense<0.000000e+00> : vector<32xf32>
    %97 = vector.multi_reduction <add>, %96, %cst_74 [1] : vector<32x128xf32> to vector<32xf32>
    %98 = vector.shape_cast %97 : vector<32xf32> to vector<32x1xf32>
    %cst_75 = arith.constant 1.280000e+02 : f32
    %99 = vector.broadcast %cst_75 : f32 to vector<32x1xf32>
    %100 = arith.divf %98, %99 : vector<32x1xf32>
    %cst_76 = arith.constant 9.99999974E-6 : f32
    %101 = vector.broadcast %cst_76 : f32 to vector<32x1xf32>
    %102 = arith.addf %100, %101 : vector<32x1xf32>
    %103 = math.rsqrt %102 : vector<32x1xf32>
    %104 = vector.broadcast %103 : vector<32x1xf32> to vector<32x128xf32>
    %105 = arith.mulf %95, %104 : vector<32x128xf32>
    %106 = vector.broadcast %65 : vector<1x128xf32> to vector<32x128xf32>
    %107 = arith.mulf %105, %106 : vector<32x128xf32>
    %108 = vector.broadcast %67 : vector<1x128xf32> to vector<32x128xf32>
    %109 = arith.addf %107, %108 : vector<32x128xf32>
    %110 = arith.addf %27, %46 : vector<32x128xf32>
    %cst_77 = arith.constant dense<0.000000e+00> : vector<32xf32>
    %111 = vector.multi_reduction <add>, %110, %cst_77 [1] : vector<32x128xf32> to vector<32xf32>
    %112 = vector.shape_cast %111 : vector<32xf32> to vector<32x1xf32>
    %cst_78 = arith.constant 1.280000e+02 : f32
    %113 = vector.broadcast %cst_78 : f32 to vector<32x1xf32>
    %114 = arith.divf %112, %113 : vector<32x1xf32>
    %115 = vector.broadcast %114 : vector<32x1xf32> to vector<32x128xf32>
    %116 = arith.subf %110, %115 : vector<32x128xf32>
    %117 = arith.mulf %116, %116 : vector<32x128xf32>
    %cst_79 = arith.constant dense<0.000000e+00> : vector<32xf32>
    %118 = vector.multi_reduction <add>, %117, %cst_79 [1] : vector<32x128xf32> to vector<32xf32>
    %119 = vector.shape_cast %118 : vector<32xf32> to vector<32x1xf32>
    %cst_80 = arith.constant 1.280000e+02 : f32
    %120 = vector.broadcast %cst_80 : f32 to vector<32x1xf32>
    %121 = arith.divf %119, %120 : vector<32x1xf32>
    %cst_81 = arith.constant 9.99999974E-6 : f32
    %122 = vector.broadcast %cst_81 : f32 to vector<32x1xf32>
    %123 = arith.addf %121, %122 : vector<32x1xf32>
    %124 = math.rsqrt %123 : vector<32x1xf32>
    %125 = vector.broadcast %124 : vector<32x1xf32> to vector<32x128xf32>
    %126 = arith.mulf %116, %125 : vector<32x128xf32>
    %127 = vector.broadcast %65 : vector<1x128xf32> to vector<32x128xf32>
    %128 = arith.mulf %126, %127 : vector<32x128xf32>
    %129 = vector.broadcast %67 : vector<1x128xf32> to vector<32x128xf32>
    %130 = arith.addf %128, %129 : vector<32x128xf32>
    %131 = tpu.concatenate %88, %109 in 0 : vector<32x128xf32>, vector<32x128xf32> -> vector<64x128xf32>
    %132 = arith.truncf %131 : vector<64x128xf32> to vector<64x128xbf16>
    %c0_82 = arith.constant 0 : index
    %c0_83 = arith.constant 0 : index
    %133 = vector.load %arg23[%c0_82, %c0_83] : memref<16x64xbf16, #tpu.memory_space<vmem>>, vector<16x64xbf16>
    %cst_84 = arith.constant dense<0.000000e+00> : vector<16x128xf32>
    %134 = tpu.matmul %133, %132, %cst_84 {dimension_numbers = #tpu.dot_dimension_numbers<[1], [0], [0], [1], [0, 0, 1, 1], [], []>} : vector<16x64xbf16>, vector<64x128xbf16>, vector<16x128xf32> -> vector<16x128xf32>
    %c0_85 = arith.constant 0 : index
    %c0_86 = arith.constant 0 : index
    %135 = vector.load %arg5[%c0_85, %c0_86] : memref<16x1xf32, #tpu.memory_space<vmem>>, vector<16x1xf32>
    %136 = vector.broadcast %135 : vector<16x1xf32> to vector<16x128xf32>
    %137 = arith.mulf %134, %136 : vector<16x128xf32>
    %138 = arith.truncf %137 : vector<16x128xf32> to vector<16x128xbf16>
    %139 = tpu.concatenate %138, %5 in 1 : vector<16x128xbf16>, vector<16x128xbf16> -> vector<16x256xbf16>
    %c0_87 = arith.constant 0 : index
    %c0_88 = arith.constant 0 : index
    %c0_89 = arith.constant 0 : index
    %c0_90 = arith.constant 0 : index
    %140 = vector.load %arg12[%c0_87, %c0_88, %c0_89, %c0_90] : memref<1x2x256x512xbf16, #tpu.memory_space<vmem>>, vector<1x1x256x512xbf16>
    %141 = vector.shape_cast %140 : vector<1x1x256x512xbf16> to vector<256x512xbf16>
    %cst_91 = arith.constant dense<0.000000e+00> : vector<16x512xf32>
    %142 = tpu.matmul %139, %141, %cst_91 {dimension_numbers = #tpu.dot_dimension_numbers<[1], [0], [0], [1], [0, 0, 1, 1], [], []>} : vector<16x256xbf16>, vector<256x512xbf16>, vector<16x512xf32> -> vector<16x512xf32>
    %c0_92 = arith.constant 0 : index
    %c0_93 = arith.constant 0 : index
    %c0_94 = arith.constant 0 : index
    %c0_95 = arith.constant 0 : index
    %143 = vector.load %arg13[%c0_92, %c0_93, %c0_94, %c0_95] : memref<1x2x1x512xf32, #tpu.memory_space<vmem>>, vector<1x1x1x512xf32>
    %144 = vector.shape_cast %143 : vector<1x1x1x512xf32> to vector<1x512xf32>
    %145 = vector.broadcast %144 : vector<1x512xf32> to vector<16x512xf32>
    %146 = arith.addf %142, %145 : vector<16x512xf32>
    %147 = vector.extract_strided_slice %146 {offsets = [0, 0], sizes = [16, 128], strides = [1, 1]} : vector<16x512xf32> to vector<16x128xf32>
    %148 = arith.negf %147 : vector<16x128xf32>
    %149 = math.exp %148 : vector<16x128xf32>
    %cst_96 = arith.constant 1.000000e+00 : f32
    %150 = vector.broadcast %cst_96 : f32 to vector<16x128xf32>
    %151 = arith.addf %150, %149 : vector<16x128xf32>
    %152 = arith.divf %150, %151 : vector<16x128xf32>
    %153 = vector.extract_strided_slice %146 {offsets = [0, 128], sizes = [16, 128], strides = [1, 1]} : vector<16x512xf32> to vector<16x128xf32>
    %154 = arith.negf %153 : vector<16x128xf32>
    %155 = math.exp %154 : vector<16x128xf32>
    %cst_97 = arith.constant 1.000000e+00 : f32
    %156 = vector.broadcast %cst_97 : f32 to vector<16x128xf32>
    %157 = arith.addf %156, %155 : vector<16x128xf32>
    %158 = arith.divf %156, %157 : vector<16x128xf32>
    %159 = vector.extract_strided_slice %146 {offsets = [0, 256], sizes = [16, 128], strides = [1, 1]} : vector<16x512xf32> to vector<16x128xf32>
    %160 = vector.extract_strided_slice %146 {offsets = [0, 384], sizes = [16, 128], strides = [1, 1]} : vector<16x512xf32> to vector<16x128xf32>
    %161 = arith.mulf %152, %160 : vector<16x128xf32>
    %162 = arith.addf %159, %161 : vector<16x128xf32>
    %163 = math.tanh %162 : vector<16x128xf32>
    %cst_98 = arith.constant 1.000000e+00 : f32
    %164 = vector.broadcast %cst_98 : f32 to vector<16x128xf32>
    %165 = arith.subf %164, %158 : vector<16x128xf32>
    %166 = arith.mulf %165, %163 : vector<16x128xf32>
    %167 = arith.mulf %158, %3 : vector<16x128xf32>
    %168 = arith.addf %166, %167 : vector<16x128xf32>
    %169 = arith.truncf %130 : vector<32x128xf32> to vector<32x128xbf16>
    %170 = tpu.concatenate %169, %6 in 1 : vector<32x128xbf16>, vector<32x128xbf16> -> vector<32x256xbf16>
    %c0_99 = arith.constant 0 : index
    %c1_100 = arith.constant 1 : index
    %c0_101 = arith.constant 0 : index
    %c0_102 = arith.constant 0 : index
    %171 = vector.load %arg12[%c0_99, %c1_100, %c0_101, %c0_102] : memref<1x2x256x512xbf16, #tpu.memory_space<vmem>>, vector<1x1x256x512xbf16>
    %172 = vector.shape_cast %171 : vector<1x1x256x512xbf16> to vector<256x512xbf16>
    %cst_103 = arith.constant dense<0.000000e+00> : vector<32x512xf32>
    %173 = tpu.matmul %170, %172, %cst_103 {dimension_numbers = #tpu.dot_dimension_numbers<[1], [0], [0], [1], [0, 0, 1, 1], [], []>} : vector<32x256xbf16>, vector<256x512xbf16>, vector<32x512xf32> -> vector<32x512xf32>
    %c0_104 = arith.constant 0 : index
    %c1_105 = arith.constant 1 : index
    %c0_106 = arith.constant 0 : index
    %c0_107 = arith.constant 0 : index
    %174 = vector.load %arg13[%c0_104, %c1_105, %c0_106, %c0_107] : memref<1x2x1x512xf32, #tpu.memory_space<vmem>>, vector<1x1x1x512xf32>
    %175 = vector.shape_cast %174 : vector<1x1x1x512xf32> to vector<1x512xf32>
    %176 = vector.broadcast %175 : vector<1x512xf32> to vector<32x512xf32>
    %177 = arith.addf %173, %176 : vector<32x512xf32>
    %178 = vector.extract_strided_slice %177 {offsets = [0, 0], sizes = [32, 128], strides = [1, 1]} : vector<32x512xf32> to vector<32x128xf32>
    %179 = arith.negf %178 : vector<32x128xf32>
    %180 = math.exp %179 : vector<32x128xf32>
    %cst_108 = arith.constant 1.000000e+00 : f32
    %181 = vector.broadcast %cst_108 : f32 to vector<32x128xf32>
    %182 = arith.addf %181, %180 : vector<32x128xf32>
    %183 = arith.divf %181, %182 : vector<32x128xf32>
    %184 = vector.extract_strided_slice %177 {offsets = [0, 128], sizes = [32, 128], strides = [1, 1]} : vector<32x512xf32> to vector<32x128xf32>
    %185 = arith.negf %184 : vector<32x128xf32>
    %186 = math.exp %185 : vector<32x128xf32>
    %cst_109 = arith.constant 1.000000e+00 : f32
    %187 = vector.broadcast %cst_109 : f32 to vector<32x128xf32>
    %188 = arith.addf %187, %186 : vector<32x128xf32>
    %189 = arith.divf %187, %188 : vector<32x128xf32>
    %190 = vector.extract_strided_slice %177 {offsets = [0, 256], sizes = [32, 128], strides = [1, 1]} : vector<32x512xf32> to vector<32x128xf32>
    %191 = vector.extract_strided_slice %177 {offsets = [0, 384], sizes = [32, 128], strides = [1, 1]} : vector<32x512xf32> to vector<32x128xf32>
    %192 = arith.mulf %183, %191 : vector<32x128xf32>
    %193 = arith.addf %190, %192 : vector<32x128xf32>
    %194 = math.tanh %193 : vector<32x128xf32>
    %cst_110 = arith.constant 1.000000e+00 : f32
    %195 = vector.broadcast %cst_110 : f32 to vector<32x128xf32>
    %196 = arith.subf %195, %189 : vector<32x128xf32>
    %197 = arith.mulf %196, %194 : vector<32x128xf32>
    %198 = arith.mulf %189, %4 : vector<32x128xf32>
    %199 = arith.addf %197, %198 : vector<32x128xf32>
    %c0_111 = arith.constant 0 : index
    %c0_112 = arith.constant 0 : index
    %200 = vector.load %arg18[%c0_111, %c0_112] : memref<16x128xf32, #tpu.memory_space<vmem>>, vector<16x128xf32>
    tpu.vector_store %arg18[%c0_111, %c0_112], %168 {strides = array<i32>} : memref<16x128xf32, #tpu.memory_space<vmem>>, vector<16x128xf32>,
    %c0_113 = arith.constant 0 : index
    %c0_114 = arith.constant 0 : index
    %201 = vector.load %arg19[%c0_113, %c0_114] : memref<32x128xf32, #tpu.memory_space<vmem>>, vector<32x128xf32>
    tpu.vector_store %arg19[%c0_113, %c0_114], %199 {strides = array<i32>} : memref<32x128xf32, #tpu.memory_space<vmem>>, vector<32x128xf32>,
    %c0_115 = arith.constant 0 : index
    %c0_116 = arith.constant 0 : index
    %202 = vector.load %arg20[%c0_115, %c0_116] : memref<16x128xf32, #tpu.memory_space<vmem>>, vector<16x128xf32>
    %203 = arith.addf %202, %168 : vector<16x128xf32>
    %c0_117 = arith.constant 0 : index
    %c0_118 = arith.constant 0 : index
    %204 = vector.load %arg20[%c0_117, %c0_118] : memref<16x128xf32, #tpu.memory_space<vmem>>, vector<16x128xf32>
    tpu.vector_store %arg20[%c0_117, %c0_118], %203 {strides = array<i32>} : memref<16x128xf32, #tpu.memory_space<vmem>>, vector<16x128xf32>,
    %c0_119 = arith.constant 0 : index
    %c0_120 = arith.constant 0 : index
    %205 = vector.load %arg21[%c0_119, %c0_120] : memref<32x128xf32, #tpu.memory_space<vmem>>, vector<32x128xf32>
    %206 = arith.addf %205, %199 : vector<32x128xf32>
    %c0_121 = arith.constant 0 : index
    %c0_122 = arith.constant 0 : index
    %207 = vector.load %arg21[%c0_121, %c0_122] : memref<32x128xf32, #tpu.memory_space<vmem>>, vector<32x128xf32>
    tpu.vector_store %arg21[%c0_121, %c0_122], %206 {strides = array<i32>} : memref<32x128xf32, #tpu.memory_space<vmem>>, vector<32x128xf32>,
    %c4_i32 = arith.constant 4 : i32
    %208 = arith.cmpi eq, %arg0, %c4_i32 : i32
    %209 = arith.extui %208 : i1 to i32
    %c0_i32_123 = arith.constant 0 : i32
    %210 = arith.cmpi ne, %209, %c0_i32_123 : i32
    scf.if %210 {
      %c0_124 = arith.constant 0 : index
      %c0_125 = arith.constant 0 : index
      %211 = vector.load %arg14[%c0_124, %c0_125] : memref<1x128xf32, #tpu.memory_space<vmem>>, vector<1x128xf32>
      %c0_126 = arith.constant 0 : index
      %c0_127 = arith.constant 0 : index
      %212 = vector.load %arg15[%c0_126, %c0_127] : memref<1x128xf32, #tpu.memory_space<vmem>>, vector<1x128xf32>
      %c0_128 = arith.constant 0 : index
      %c0_129 = arith.constant 0 : index
      %213 = vector.load %arg20[%c0_128, %c0_129] : memref<16x128xf32, #tpu.memory_space<vmem>>, vector<16x128xf32>
      %cst_130 = arith.constant dense<0.000000e+00> : vector<16xf32>
      %214 = vector.multi_reduction <add>, %213, %cst_130 [1] : vector<16x128xf32> to vector<16xf32>
      %215 = vector.shape_cast %214 : vector<16xf32> to vector<16x1xf32>
      %cst_131 = arith.constant 1.280000e+02 : f32
      %216 = vector.broadcast %cst_131 : f32 to vector<16x1xf32>
      %217 = arith.divf %215, %216 : vector<16x1xf32>
      %218 = vector.broadcast %217 : vector<16x1xf32> to vector<16x128xf32>
      %219 = arith.subf %213, %218 : vector<16x128xf32>
      %220 = arith.mulf %219, %219 : vector<16x128xf32>
      %cst_132 = arith.constant dense<0.000000e+00> : vector<16xf32>
      %221 = vector.multi_reduction <add>, %220, %cst_132 [1] : vector<16x128xf32> to vector<16xf32>
      %222 = vector.shape_cast %221 : vector<16xf32> to vector<16x1xf32>
      %cst_133 = arith.constant 1.280000e+02 : f32
      %223 = vector.broadcast %cst_133 : f32 to vector<16x1xf32>
      %224 = arith.divf %222, %223 : vector<16x1xf32>
      %cst_134 = arith.constant 9.99999974E-6 : f32
      %225 = vector.broadcast %cst_134 : f32 to vector<16x1xf32>
      %226 = arith.addf %224, %225 : vector<16x1xf32>
      %227 = math.rsqrt %226 : vector<16x1xf32>
      %228 = vector.broadcast %227 : vector<16x1xf32> to vector<16x128xf32>
      %229 = arith.mulf %219, %228 : vector<16x128xf32>
      %230 = vector.broadcast %211 : vector<1x128xf32> to vector<16x128xf32>
      %231 = arith.mulf %229, %230 : vector<16x128xf32>
      %232 = vector.broadcast %212 : vector<1x128xf32> to vector<16x128xf32>
      %233 = arith.addf %231, %232 : vector<16x128xf32>
      %c0_135 = arith.constant 0 : index
      %c0_136 = arith.constant 0 : index
      %234 = vector.load %arg16[%c0_135, %c0_136] : memref<16x128xf32, #tpu.memory_space<vmem>>, vector<16x128xf32>
      tpu.vector_store %arg16[%c0_135, %c0_136], %233 {strides = array<i32>} : memref<16x128xf32, #tpu.memory_space<vmem>>, vector<16x128xf32>,
      %c0_137 = arith.constant 0 : index
      %c0_138 = arith.constant 0 : index
      %235 = vector.load %arg21[%c0_137, %c0_138] : memref<32x128xf32, #tpu.memory_space<vmem>>, vector<32x128xf32>
      %cst_139 = arith.constant dense<0.000000e+00> : vector<32xf32>
      %236 = vector.multi_reduction <add>, %235, %cst_139 [1] : vector<32x128xf32> to vector<32xf32>
      %237 = vector.shape_cast %236 : vector<32xf32> to vector<32x1xf32>
      %cst_140 = arith.constant 1.280000e+02 : f32
      %238 = vector.broadcast %cst_140 : f32 to vector<32x1xf32>
      %239 = arith.divf %237, %238 : vector<32x1xf32>
      %240 = vector.broadcast %239 : vector<32x1xf32> to vector<32x128xf32>
      %241 = arith.subf %235, %240 : vector<32x128xf32>
      %242 = arith.mulf %241, %241 : vector<32x128xf32>
      %cst_141 = arith.constant dense<0.000000e+00> : vector<32xf32>
      %243 = vector.multi_reduction <add>, %242, %cst_141 [1] : vector<32x128xf32> to vector<32xf32>
      %244 = vector.shape_cast %243 : vector<32xf32> to vector<32x1xf32>
      %cst_142 = arith.constant 1.280000e+02 : f32
      %245 = vector.broadcast %cst_142 : f32 to vector<32x1xf32>
      %246 = arith.divf %244, %245 : vector<32x1xf32>
      %cst_143 = arith.constant 9.99999974E-6 : f32
      %247 = vector.broadcast %cst_143 : f32 to vector<32x1xf32>
      %248 = arith.addf %246, %247 : vector<32x1xf32>
      %249 = math.rsqrt %248 : vector<32x1xf32>
      %250 = vector.broadcast %249 : vector<32x1xf32> to vector<32x128xf32>
      %251 = arith.mulf %241, %250 : vector<32x128xf32>
      %252 = vector.broadcast %211 : vector<1x128xf32> to vector<32x128xf32>
      %253 = arith.mulf %251, %252 : vector<32x128xf32>
      %254 = vector.broadcast %212 : vector<1x128xf32> to vector<32x128xf32>
      %255 = arith.addf %253, %254 : vector<32x128xf32>
      %c0_144 = arith.constant 0 : index
      %c0_145 = arith.constant 0 : index
      %256 = vector.load %arg17[%c0_144, %c0_145] : memref<32x128xf32, #tpu.memory_space<vmem>>, vector<32x128xf32>
      tpu.vector_store %arg17[%c0_144, %c0_145], %255 {strides = array<i32>} : memref<32x128xf32, #tpu.memory_space<vmem>>, vector<32x128xf32>,
    } else {
    }
    return
  }
  func.func @transform_4(%arg0: i32) -> (i32, i32) {
    %c0_i32 = arith.constant 0 : i32
    %c0_i32_0 = arith.constant 0 : i32
    %c0_i32_1 = arith.constant 0 : i32
    return %c0_i32, %c0_i32_0 : i32, i32
  }
  func.func @transform_5(%arg0: i32) -> (i32, i32, i32, i32) {
    %c0_i32 = arith.constant 0 : i32
    %c0_i32_0 = arith.constant 0 : i32
    %c0_i32_1 = arith.constant 0 : i32
    %c0_i32_2 = arith.constant 0 : i32
    return %arg0, %c0_i32, %c0_i32_0, %c0_i32_1 : i32, i32, i32, i32
  }
  func.func @transform_6(%arg0: i32) -> (i32, i32, i32, i32) {
    %c0_i32 = arith.constant 0 : i32
    %c0_i32_0 = arith.constant 0 : i32
    %c0_i32_1 = arith.constant 0 : i32
    %c0_i32_2 = arith.constant 0 : i32
    return %arg0, %c0_i32, %c0_i32_0, %c0_i32_1 : i32, i32, i32, i32
  }
  func.func @transform_7(%arg0: i32) -> (i32, i32, i32, i32) {
    %c0_i32 = arith.constant 0 : i32
    %c0_i32_0 = arith.constant 0 : i32
    %c0_i32_1 = arith.constant 0 : i32
    %c0_i32_2 = arith.constant 0 : i32
    return %arg0, %c0_i32, %c0_i32_0, %c0_i32_1 : i32, i32, i32, i32
  }
  func.func @transform_8(%arg0: i32) -> (i32, i32, i32, i32) {
    %c0_i32 = arith.constant 0 : i32
    %c0_i32_0 = arith.constant 0 : i32
    %c0_i32_1 = arith.constant 0 : i32
    %c0_i32_2 = arith.constant 0 : i32
    return %arg0, %c0_i32, %c0_i32_0, %c0_i32_1 : i32, i32, i32, i32
  }
  func.func @transform_9(%arg0: i32) -> (i32, i32, i32) {
    %c0_i32 = arith.constant 0 : i32
    %c0_i32_0 = arith.constant 0 : i32
    %c0_i32_1 = arith.constant 0 : i32
    return %arg0, %c0_i32, %c0_i32_0 : i32, i32, i32
  }
  func.func @transform_10(%arg0: i32) -> (i32, i32, i32) {
    %c0_i32 = arith.constant 0 : i32
    %c0_i32_0 = arith.constant 0 : i32
    %c0_i32_1 = arith.constant 0 : i32
    return %arg0, %c0_i32, %c0_i32_0 : i32, i32, i32
  }
  func.func @transform_11(%arg0: i32) -> (i32, i32, i32, i32) {
    %c0_i32 = arith.constant 0 : i32
    %c0_i32_0 = arith.constant 0 : i32
    %c0_i32_1 = arith.constant 0 : i32
    %c0_i32_2 = arith.constant 0 : i32
    return %arg0, %c0_i32, %c0_i32_0, %c0_i32_1 : i32, i32, i32, i32
  }
  func.func @transform_12(%arg0: i32) -> (i32, i32, i32, i32) {
    %c0_i32 = arith.constant 0 : i32
    %c0_i32_0 = arith.constant 0 : i32
    %c0_i32_1 = arith.constant 0 : i32
    %c0_i32_2 = arith.constant 0 : i32
    return %arg0, %c0_i32, %c0_i32_0, %c0_i32_1 : i32, i32, i32, i32
  }
  func.func @transform_13(%arg0: i32) -> (i32, i32) {
    %c0_i32 = arith.constant 0 : i32
    %c0_i32_0 = arith.constant 0 : i32
    %c0_i32_1 = arith.constant 0 : i32
    return %c0_i32, %c0_i32_0 : i32, i32
  }
  func.func @transform_14(%arg0: i32) -> (i32, i32) {
    %c0_i32 = arith.constant 0 : i32
    %c0_i32_0 = arith.constant 0 : i32
    %c0_i32_1 = arith.constant 0 : i32
    return %c0_i32, %c0_i32_0 : i32, i32
  }
  func.func @transform_15(%arg0: i32) -> (i32, i32) {
    %c0_i32 = arith.constant 0 : i32
    %c0_i32_0 = arith.constant 0 : i32
    %c0_i32_1 = arith.constant 0 : i32
    return %c0_i32, %c0_i32_0 : i32, i32
  }
  func.func @transform_16(%arg0: i32) -> (i32, i32) {
    %c0_i32 = arith.constant 0 : i32
    %c0_i32_0 = arith.constant 0 : i32
    %c0_i32_1 = arith.constant 0 : i32
    return %c0_i32, %c0_i32_0 : i32, i32
  }
}

</mosaic_0001>

<llo_original>
// kernel: graph_encoder_forward.1
$region0: #{graph_encoder_forward.1}
  #allocation0 [shape = 'u32[]', space=smem, size = 0x4, offset = 0x4, fixed_abs, tag = 'smem constant byte address 0x4 - core index']
  #allocation1 [shape = 'u32[144,128]{1,0:T(1,128)}', space=vmem, size = 0x12000, scoped, tag = 'internal scratch']
  #allocation2 [shape = 'f32[16,128]{1,0:T(8,128)}', space=vmem, size = 0x2000, scoped, tag = 'scratch operand']
  #allocation3 [shape = 'f32[32,128]{1,0:T(8,128)}', space=vmem, size = 0x4000, scoped, tag = 'scratch operand']
  #allocation4 [shape = 'f32[16,128]{1,0:T(8,128)}', space=vmem, size = 0x2000, scoped, tag = 'scratch operand']
  #allocation5 [shape = 'f32[32,128]{1,0:T(8,128)}', space=vmem, size = 0x4000, scoped, tag = 'scratch operand']
  #allocation6 [shape = 'bf16[64,16]{1,0:T(16,128)(2,1)}', space=vmem, size = 0x4000, scoped, tag = 'scratch operand']
  #allocation7 [shape = 'bf16[16,64]{1,0:T(16,128)(2,1)}', space=vmem, size = 0x1000, scoped, tag = 'scratch operand']
  #allocation8 [shape = 's32[4]{0}', space=sflag, size = 0x10, scoped, tag = 'scratch operand']
  #allocation13 [shape = 's32[]', space=sflag, size = 0x4, offset = 0, fixed_abs, tag = 'sflag constant byte address 0x0 - dummy sync flag']
  #allocation14 [shape = 's32[]', space=sflag, size = 0x4, offset = 0, fixed_abs, tag = 'sflag constant byte address 0x0 - dummy sync flag']
  #allocation15 [shape = 's32[]', space=sflag, size = 0x4, offset = 0, fixed_abs, tag = 'sflag constant byte address 0x0 - dummy sync flag']
  #allocation16 [shape = 's32[]', space=sflag, size = 0x4, offset = 0, fixed_abs, tag = 'sflag constant byte address 0x0 - dummy sync flag']
  %s0 = inlined_call_operand.vmem [shape: f32[16,128], index: 0, kind: input, shape index: {}]
  %s1 = inlined_call_operand.vmem [shape: f32[32,128], index: 1, kind: input, shape index: {}]
  %s2 = inlined_call_operand.vmem [shape: bf16[64,16], index: 2, kind: input, shape index: {}]
  %s3 = inlined_call_operand.vmem [shape: bf16[16,64], index: 3, kind: input, shape index: {}]
  %s4 = inlined_call_operand.vmem [shape: f32[16,1], index: 4, kind: input, shape index: {}]
  %s5 = inlined_call_operand.vmem [shape: bf16[5,3,128,128], index: 5, kind: input, shape index: {}]
  %s6 = inlined_call_operand.vmem [shape: f32[5,3,1,128], index: 6, kind: input, shape index: {}]
  %s7 = inlined_call_operand.vmem [shape: bf16[5,3,128,128], index: 7, kind: input, shape index: {}]
  %s8 = inlined_call_operand.vmem [shape: f32[5,3,1,128], index: 8, kind: input, shape index: {}]
  %s9 = inlined_call_operand.vmem [shape: f32[5,1,128], index: 9, kind: input, shape index: {}]
  %s10 = inlined_call_operand.vmem [shape: f32[5,1,128], index: 10, kind: input, shape index: {}]
  %s11 = inlined_call_operand.vmem [shape: bf16[5,2,256,512], index: 11, kind: input, shape index: {}]
  %s12 = inlined_call_operand.vmem [shape: f32[5,2,1,512], index: 12, kind: input, shape index: {}]
  %s13 = inlined_call_operand.vmem [shape: f32[1,128], index: 13, kind: input, shape index: {}]
  %s14 = inlined_call_operand.vmem [shape: f32[1,128], index: 14, kind: input, shape index: {}]
  %s15 = inlined_call_operand.hbm [shape: f32[16,128], index: 15, kind: output, shape index: {0}]
  %s16 = inlined_call_operand.hbm [shape: f32[32,128], index: 16, kind: output, shape index: {1}]
  %17 = xla_tuple %s15, %s16
  %s18 = sld [smem:[#allocation0]]
  $region229: #{graph_encoder_forward.1} parent=0
    _
  %s20 = ssub.s32 1, %s18
  %s21 = scalar_select 0, %s20, %s18
  $region1: #{graph_encoder_forward.1} parent=0
    #allocation9 [shape = 'u8[8192]{0}', space=vmem, size = 0x2000, scoped, tag = 'output window, operand 0, single buffered']
    #allocation10 [shape = 's32[2]{0}', space=sflag, size = 0x8, scoped, tag = 'scoped memory for graph_encoder_forward.1']
    #allocation11 [shape = 'u8[16384]{0}', space=vmem, size = 0x4000, scoped, tag = 'output window, operand 1, single buffered']
    #allocation12 [shape = 's32[1]{0}', space=sflag, size = 0x4, scoped, tag = 'scoped memory for graph_encoder_forward.1']
    %22 = vsyncpa [#allocation10], 0
    %23 = vsyncpa [#allocation12], 0
    loop: start=0, step=1, limit=7
    $region2: #{graph_encoder_forward.1} parent=1 // loop_pre_header
      _
    $region3: #{graph_encoder_forward.1} parent=1 // loop_header
      %s25 = sphi 0, %s29
      %p26 = scmp.ge.s32.totalorder %s25, 7
      %s33 = sphi 0, %s33
      %s35 = sphi 0, %s33
      %s36 = sphi 0, %s35
      %s50 = sphi 0, %s36
      %s56 = sphi 0, %s58
      %s59 = sphi 0, %s56
      %s60 = sphi 0, %s59
      %s76 = sphi 0, %s60
      %s82 = sphi 0, %s84
      %s85 = sphi 0, %s82
      %s86 = sphi 0, %s85
      %s102 = sphi 0, %s86
      %s108 = sphi 0, %s110
      %s111 = sphi 0, %s108
      %s112 = sphi 0, %s111
      %s128 = sphi 0, %s112
      %s134 = sphi 0, %s136
      %s137 = sphi 0, %s134
      %s138 = sphi 0, %s137
      %s154 = sphi 0, %s138
      %s160 = sphi 0, %s162
      %s163 = sphi 0, %s160
      %s164 = sphi 0, %s163
      %s180 = sphi 0, %s164
      %s186 = sphi 0, %s188
      %s189 = sphi 0, %s186
      %s190 = sphi 0, %s189
      %s206 = sphi 0, %s190
      %s212 = sphi 0, %s214
      %s215 = sphi 0, %s212
      %s216 = sphi 0, %s215
      %s232 = sphi 0, %s216
      %s238 = sphi 0, %s240
      %s241 = sphi 0, %s238
      %s242 = sphi 0, %s241
      %s258 = sphi 0, %s242
      %s262 = sphi 0, %s262
      %s264 = sphi 0, %s262
      %s265 = sphi 0, %s264
      %s279 = sphi 0, %s265
      %s283 = sphi 0, %s283
      %s285 = sphi 0, %s283
      %s286 = sphi 0, %s285
      %s300 = sphi 0, %s286
      %s304 = sphi 0, %s304
      %s306 = sphi 0, %s304
      %s307 = sphi 0, %s306
      %s321 = sphi 0, %s307
      %s325 = sphi 0, %s325
      %s327 = sphi 0, %s325
      %s328 = sphi 0, %s327
      %s342 = sphi 0, %s328
    $region4: #{graph_encoder_forward.1} parent=1 // loop_header_branch
      %28 = sbr.rel (%p26) target = $region8
    $region5: #{graph_encoder_forward.1} parent=1 // loop_body
      %s30 = ssub.s32 %s25, 1
      %s31 = ssub.s32 %s25, 2
      %s32 = sadd.s32 %s25, 1
      %s34 = sadd.s32 %s33, 1
      %p37 = scmp.eq.s32.totalorder %s25, 4
      %p38 = scmp.ne.s32.totalorder %s33, %s35
      %p39 = scmp.eq.s32.totalorder %s25, 0
      %p40 = por %p38, %p39
      %p41 = scmp.ne.s32.totalorder %s33, %s35
      %p42 = scmp.eq.s32.totalorder %s30, 4
      %p43 = por %p41, %p42
      %p44 = scmp.ne.s32.totalorder %s35, %s36
      %p45 = scmp.eq.s32.totalorder %s30, 0
      %p46 = por %p44, %p45
      %p47 = scmp.ne.s32.totalorder %s35, %s36
      %p48 = scmp.eq.s32.totalorder %s31, 4
      %p49 = por %p47, %p48
      %p51 = scmp.ne.s32.totalorder %s36, %s50
      %p52 = scmp.eq.s32.totalorder %s31, 0
      %p53 = por %p51, %p52
      %s54 = ssub.s32 %s25, %s32
      %p55 = scmp.eq.s32.totalorder %s54, 0
      %s57 = sadd.s32 %s56, 1
      %s58 = scalar_select %p55, %s56, %s57
      %p61 = pneg %p55
      %p62 = scmp.eq.s32.totalorder %s25, 4
      %p63 = por %p61, %p62
      %p64 = scmp.ne.s32.totalorder %s56, %s59
      %p65 = scmp.eq.s32.totalorder %s25, 0
      %p66 = por %p64, %p65
      %p67 = scmp.ne.s32.totalorder %s56, %s59
      %p68 = scmp.eq.s32.totalorder %s30, 4
      %p69 = por %p67, %p68
      %p70 = scmp.ne.s32.totalorder %s59, %s60
      %p71 = scmp.eq.s32.totalorder %s30, 0
      %p72 = por %p70, %p71
      %p73 = scmp.ne.s32.totalorder %s59, %s60
      %p74 = scmp.eq.s32.totalorder %s31, 4
      %p75 = por %p73, %p74
      %p77 = scmp.ne.s32.totalorder %s60, %s76
      %p78 = scmp.eq.s32.totalorder %s31, 0
      %p79 = por %p77, %p78
      %s80 = ssub.s32 %s25, %s32
      %p81 = scmp.eq.s32.totalorder %s80, 0
      %s83 = sadd.s32 %s82, 1
      %s84 = scalar_select %p81, %s82, %s83
      %p87 = pneg %p81
      %p88 = scmp.eq.s32.totalorder %s25, 4
      %p89 = por %p87, %p88
      %p90 = scmp.ne.s32.totalorder %s82, %s85
      %p91 = scmp.eq.s32.totalorder %s25, 0
      %p92 = por %p90, %p91
      %p93 = scmp.ne.s32.totalorder %s82, %s85
      %p94 = scmp.eq.s32.totalorder %s30, 4
      %p95 = por %p93, %p94
      %p96 = scmp.ne.s32.totalorder %s85, %s86
      %p97 = scmp.eq.s32.totalorder %s30, 0
      %p98 = por %p96, %p97
      %p99 = scmp.ne.s32.totalorder %s85, %s86
      %p100 = scmp.eq.s32.totalorder %s31, 4
      %p101 = por %p99, %p100
      %p103 = scmp.ne.s32.totalorder %s86, %s102
      %p104 = scmp.eq.s32.totalorder %s31, 0
      %p105 = por %p103, %p104
      %s106 = ssub.s32 %s25, %s32
      %p107 = scmp.eq.s32.totalorder %s106, 0
      %s109 = sadd.s32 %s108, 1
      %s110 = scalar_select %p107, %s108, %s109
      %p113 = pneg %p107
      %p114 = scmp.eq.s32.totalorder %s25, 4
      %p115 = por %p113, %p114
      %p116 = scmp.ne.s32.totalorder %s108, %s111
      %p117 = scmp.eq.s32.totalorder %s25, 0
      %p118 = por %p116, %p117
      %p119 = scmp.ne.s32.totalorder %s108, %s111
      %p120 = scmp.eq.s32.totalorder %s30, 4
      %p121 = por %p119, %p120
      %p122 = scmp.ne.s32.totalorder %s111, %s112
      %p123 = scmp.eq.s32.totalorder %s30, 0
      %p124 = por %p122, %p123
      %p125 = scmp.ne.s32.totalorder %s111, %s112
      %p126 = scmp.eq.s32.totalorder %s31, 4
      %p127 = por %p125, %p126
      %p129 = scmp.ne.s32.totalorder %s112, %s128
      %p130 = scmp.eq.s32.totalorder %s31, 0
      %p131 = por %p129, %p130
      %s132 = ssub.s32 %s25, %s32
      %p133 = scmp.eq.s32.totalorder %s132, 0
      %s135 = sadd.s32 %s134, 1
      %s136 = scalar_select %p133, %s134, %s135
      %p139 = pneg %p133
      %p140 = scmp.eq.s32.totalorder %s25, 4
      %p141 = por %p139, %p140
      %p142 = scmp.ne.s32.totalorder %s134, %s137
      %p143 = scmp.eq.s32.totalorder %s25, 0
      %p144 = por %p142, %p143
      %p145 = scmp.ne.s32.totalorder %s134, %s137
      %p146 = scmp.eq.s32.totalorder %s30, 4
      %p147 = por %p145, %p146
      %p148 = scmp.ne.s32.totalorder %s137, %s138
      %p149 = scmp.eq.s32.totalorder %s30, 0
      %p150 = por %p148, %p149
      %p151 = scmp.ne.s32.totalorder %s137, %s138
      %p152 = scmp.eq.s32.totalorder %s31, 4
      %p153 = por %p151, %p152
      %p155 = scmp.ne.s32.totalorder %s138, %s154
      %p156 = scmp.eq.s32.totalorder %s31, 0
      %p157 = por %p155, %p156
      %s158 = ssub.s32 %s25, %s32
      %p159 = scmp.eq.s32.totalorder %s158, 0
      %s161 = sadd.s32 %s160, 1
      %s162 = scalar_select %p159, %s160, %s161
      %p165 = pneg %p159
      %p166 = scmp.eq.s32.totalorder %s25, 4
      %p167 = por %p165, %p166
      %p168 = scmp.ne.s32.totalorder %s160, %s163
      %p169 = scmp.eq.s32.totalorder %s25, 0
      %p170 = por %p168, %p169
      %p171 = scmp.ne.s32.totalorder %s160, %s163
      %p172 = scmp.eq.s32.totalorder %s30, 4
      %p173 = por %p171, %p172
      %p174 = scmp.ne.s32.totalorder %s163, %s164
      %p175 = scmp.eq.s32.totalorder %s30, 0
      %p176 = por %p174, %p175
      %p177 = scmp.ne.s32.totalorder %s163, %s164
      %p178 = scmp.eq.s32.totalorder %s31, 4
      %p179 = por %p177, %p178
      %p181 = scmp.ne.s32.totalorder %s164, %s180
      %p182 = scmp.eq.s32.totalorder %s31, 0
      %p183 = por %p181, %p182
      %s184 = ssub.s32 %s25, %s32
      %p185 = scmp.eq.s32.totalorder %s184, 0
      %s187 = sadd.s32 %s186, 1
      %s188 = scalar_select %p185, %s186, %s187
      %p191 = pneg %p185
      %p192 = scmp.eq.s32.totalorder %s25, 4
      %p193 = por %p191, %p192
      %p194 = scmp.ne.s32.totalorder %s186, %s189
      %p195 = scmp.eq.s32.totalorder %s25, 0
      %p196 = por %p194, %p195
      %p197 = scmp.ne.s32.totalorder %s186, %s189
      %p198 = scmp.eq.s32.totalorder %s30, 4
      %p199 = por %p197, %p198
      %p200 = scmp.ne.s32.totalorder %s189, %s190
      %p201 = scmp.eq.s32.totalorder %s30, 0
      %p202 = por %p200, %p201
      %p203 = scmp.ne.s32.totalorder %s189, %s190
      %p204 = scmp.eq.s32.totalorder %s31, 4
      %p205 = por %p203, %p204
      %p207 = scmp.ne.s32.totalorder %s190, %s206
      %p208 = scmp.eq.s32.totalorder %s31, 0
      %p209 = por %p207, %p208
      %s210 = ssub.s32 %s25, %s32
      %p211 = scmp.eq.s32.totalorder %s210, 0
      %s213 = sadd.s32 %s212, 1
      %s214 = scalar_select %p211, %s212, %s213
      %p217 = pneg %p211
      %p218 = scmp.eq.s32.totalorder %s25, 4
      %p219 = por %p217, %p218
      %p220 = scmp.ne.s32.totalorder %s212, %s215
      %p221 = scmp.eq.s32.totalorder %s25, 0
      %p222 = por %p220, %p221
      %p223 = scmp.ne.s32.totalorder %s212, %s215
      %p224 = scmp.eq.s32.totalorder %s30, 4
      %p225 = por %p223, %p224
      %p226 = scmp.ne.s32.totalorder %s215, %s216
      %p227 = scmp.eq.s32.totalorder %s30, 0
      %p228 = por %p226, %p227
      %p229 = scmp.ne.s32.totalorder %s215, %s216
      %p230 = scmp.eq.s32.totalorder %s31, 4
      %p231 = por %p229, %p230
      %p233 = scmp.ne.s32.totalorder %s216, %s232
      %p234 = scmp.eq.s32.totalorder %s31, 0
      %p235 = por %p233, %p234
      %s236 = ssub.s32 %s25, %s32
      %p237 = scmp.eq.s32.totalorder %s236, 0
      %s239 = sadd.s32 %s238, 1
      %s240 = scalar_select %p237, %s238, %s239
      %p243 = pneg %p237
      %p244 = scmp.eq.s32.totalorder %s25, 4
      %p245 = por %p243, %p244
      %p246 = scmp.ne.s32.totalorder %s238, %s241
      %p247 = scmp.eq.s32.totalorder %s25, 0
      %p248 = por %p246, %p247
      %p249 = scmp.ne.s32.totalorder %s238, %s241
      %p250 = scmp.eq.s32.totalorder %s30, 4
      %p251 = por %p249, %p250
      %p252 = scmp.ne.s32.totalorder %s241, %s242
      %p253 = scmp.eq.s32.totalorder %s30, 0
      %p254 = por %p252, %p253
      %p255 = scmp.ne.s32.totalorder %s241, %s242
      %p256 = scmp.eq.s32.totalorder %s31, 4
      %p257 = por %p255, %p256
      %p259 = scmp.ne.s32.totalorder %s242, %s258
      %p260 = scmp.eq.s32.totalorder %s31, 0
      %p261 = por %p259, %p260
      %s263 = sadd.s32 %s262, 1
      %p266 = scmp.eq.s32.totalorder %s25, 4
      %p267 = scmp.ne.s32.totalorder %s262, %s264
      %p268 = scmp.eq.s32.totalorder %s25, 0
      %p269 = por %p267, %p268
      %p270 = scmp.ne.s32.totalorder %s262, %s264
      %p271 = scmp.eq.s32.totalorder %s30, 4
      %p272 = por %p270, %p271
      %p273 = scmp.ne.s32.totalorder %s264, %s265
      %p274 = scmp.eq.s32.totalorder %s30, 0
      %p275 = por %p273, %p274
      %p276 = scmp.ne.s32.totalorder %s264, %s265
      %p277 = scmp.eq.s32.totalorder %s31, 4
      %p278 = por %p276, %p277
      %p280 = scmp.ne.s32.totalorder %s265, %s279
      %p281 = scmp.eq.s32.totalorder %s31, 0
      %p282 = por %p280, %p281
      %s284 = sadd.s32 %s283, 1
      %p287 = scmp.eq.s32.totalorder %s25, 4
      %p288 = scmp.ne.s32.totalorder %s283, %s285
      %p289 = scmp.eq.s32.totalorder %s25, 0
      %p290 = por %p288, %p289
      %p291 = scmp.ne.s32.totalorder %s283, %s285
      %p292 = scmp.eq.s32.totalorder %s30, 4
      %p293 = por %p291, %p292
      %p294 = scmp.ne.s32.totalorder %s285, %s286
      %p295 = scmp.eq.s32.totalorder %s30, 0
      %p296 = por %p294, %p295
      %p297 = scmp.ne.s32.totalorder %s285, %s286
      %p298 = scmp.eq.s32.totalorder %s31, 4
      %p299 = por %p297, %p298
      %p301 = scmp.ne.s32.totalorder %s286, %s300
      %p302 = scmp.eq.s32.totalorder %s31, 0
      %p303 = por %p301, %p302
      %s305 = sadd.s32 %s304, 1
      %p308 = scmp.eq.s32.totalorder %s25, 4
      %p309 = scmp.ne.s32.totalorder %s304, %s306
      %p310 = scmp.eq.s32.totalorder %s25, 0
      %p311 = por %p309, %p310
      %p312 = scmp.ne.s32.totalorder %s304, %s306
      %p313 = scmp.eq.s32.totalorder %s30, 4
      %p314 = por %p312, %p313
      %p315 = scmp.ne.s32.totalorder %s306, %s307
      %p316 = scmp.eq.s32.totalorder %s30, 0
      %p317 = por %p315, %p316
      %p318 = scmp.ne.s32.totalorder %s306, %s307
      %p319 = scmp.eq.s32.totalorder %s31, 4
      %p320 = por %p318, %p319
      %p322 = scmp.ne.s32.totalorder %s307, %s321
      %p323 = scmp.eq.s32.totalorder %s31, 0
      %p324 = por %p322, %p323
      %s326 = sadd.s32 %s325, 1
      %p329 = scmp.eq.s32.totalorder %s25, 4
      %p330 = scmp.ne.s32.totalorder %s325, %s327
      %p331 = scmp.eq.s32.totalorder %s25, 0
      %p332 = por %p330, %p331
      %p333 = scmp.ne.s32.totalorder %s325, %s327
      %p334 = scmp.eq.s32.totalorder %s30, 4
      %p335 = por %p333, %p334
      %p336 = scmp.ne.s32.totalorder %s327, %s328
      %p337 = scmp.eq.s32.totalorder %s30, 0
      %p338 = por %p336, %p337
      %p339 = scmp.ne.s32.totalorder %s327, %s328
      %p340 = scmp.eq.s32.totalorder %s31, 4
      %p341 = por %p339, %p340
      %p343 = scmp.ne.s32.totalorder %s328, %s342
      %p344 = scmp.eq.s32.totalorder %s31, 0
      %p345 = por %p343, %p344
      %p346 = scmp.le.s32.totalorder 1, %s25
      %p347 = scmp.lt.s32.totalorder %s25, 6
      %p348 = pnand %p346, %p347
      %p349 = pneg %p348
      // Predicated region
      $region9: #{graph_encoder_forward.1} parent=5 // pred_check
        _
      $region10: #{graph_encoder_forward.1} parent=5 // pred_check_branch
        %351 = sbr.rel (%p348) target = $region12
      $region11: #{graph_encoder_forward.1} parent=5 // pred_region
        %s352 = ssub.s32 %s25, 1
        // Predicated region
        $region13: #{graph_encoder_forward.1} parent=11 // pred_check
          %p353 = pneg %p46
        $region14: #{graph_encoder_forward.1} parent=11 // pred_check_branch
          %355 = sbr.rel (%p353) target = $region16
        $region15: #{graph_encoder_forward.1} parent=11 // pred_region
          _
        $region16: #{graph_encoder_forward.1} parent=11 // pred_fallthru
          _
        // Predicated region
        $region17: #{graph_encoder_forward.1} parent=11 // pred_check
          %p356 = pneg %p275
        $region18: #{graph_encoder_forward.1} parent=11 // pred_check_branch
          %358 = sbr.rel (%p356) target = $region20
        $region19: #{graph_encoder_forward.1} parent=11 // pred_region
          _
        $region20: #{graph_encoder_forward.1} parent=11 // pred_fallthru
          _
        // Predicated region
        $region21: #{graph_encoder_forward.1} parent=11 // pred_check
          %p359 = pneg %p296
        $region22: #{graph_encoder_forward.1} parent=11 // pred_check_branch
          %361 = sbr.rel (%p359) target = $region24
        $region23: #{graph_encoder_forward.1} parent=11 // pred_region
          _
        $region24: #{graph_encoder_forward.1} parent=11 // pred_fallthru
          _
      $region12: #{graph_encoder_forward.1} parent=5 // pred_fallthru
        _
      %p362 = scmp.lt.s32.totalorder %s25, 5
      // Predicated region
      $region25: #{graph_encoder_forward.1} parent=5 // pred_check
        %p363 = pneg %p362
      $region26: #{graph_encoder_forward.1} parent=5 // pred_check_branch
        %365 = sbr.rel (%p363) target = $region28
      $region27: #{graph_encoder_forward.1} parent=5 // pred_region
        // Predicated region
        $region29: #{graph_encoder_forward.1} parent=27 // pred_check
          %p366 = pneg %p66
        $region30: #{graph_encoder_forward.1} parent=27 // pred_check_branch
          %368 = sbr.rel (%p366) target = $region32
        $region31: #{graph_encoder_forward.1} parent=27 // pred_region
          %p369 = scmp.lt.s32.totalorder %s25, 4
          %s370 = scalar_select %p369, %s25, 4
          %s371 = smul.addr %s370, 48
          %s372 = smul.addr %s371, 4
          %s373 = scalar_lea.vmem %s5, %s372
        $region32: #{graph_encoder_forward.1} parent=27 // pred_fallthru
          _
        // Predicated region
        $region33: #{graph_encoder_forward.1} parent=27 // pred_check
          %p374 = pneg %p92
        $region34: #{graph_encoder_forward.1} parent=27 // pred_check_branch
          %376 = sbr.rel (%p374) target = $region36
        $region35: #{graph_encoder_forward.1} parent=27 // pred_region
          %p377 = scmp.lt.s32.totalorder %s25, 4
          %s378 = scalar_select %p377, %s25, 4
          %s379 = smul.addr %s378, 3
          %s380 = scalar_lea.vmem %s6, %s379
        $region36: #{graph_encoder_forward.1} parent=27 // pred_fallthru
          _
        // Predicated region
        $region37: #{graph_encoder_forward.1} parent=27 // pred_check
          %p381 = pneg %p118
        $region38: #{graph_encoder_forward.1} parent=27 // pred_check_branch
          %383 = sbr.rel (%p381) target = $region40
        $region39: #{graph_encoder_forward.1} parent=27 // pred_region
          %p384 = scmp.lt.s32.totalorder %s25, 4
          %s385 = scalar_select %p384, %s25, 4
          %s386 = smul.addr %s385, 48
          %s387 = smul.addr %s386, 4
          %s388 = scalar_lea.vmem %s7, %s387
        $region40: #{graph_encoder_forward.1} parent=27 // pred_fallthru
          _
        // Predicated region
        $region41: #{graph_encoder_forward.1} parent=27 // pred_check
          %p389 = pneg %p144
        $region42: #{graph_encoder_forward.1} parent=27 // pred_check_branch
          %391 = sbr.rel (%p389) target = $region44
        $region43: #{graph_encoder_forward.1} parent=27 // pred_region
          %p392 = scmp.lt.s32.totalorder %s25, 4
          %s393 = scalar_select %p392, %s25, 4
          %s394 = smul.addr %s393, 3
          %s395 = scalar_lea.vmem %s8, %s394
        $region44: #{graph_encoder_forward.1} parent=27 // pred_fallthru
          _
        // Predicated region
        $region45: #{graph_encoder_forward.1} parent=27 // pred_check
          %p396 = pneg %p170
        $region46: #{graph_encoder_forward.1} parent=27 // pred_check_branch
          %398 = sbr.rel (%p396) target = $region48
        $region47: #{graph_encoder_forward.1} parent=27 // pred_region
          %p399 = scmp.lt.s32.totalorder %s25, 4
          %s400 = scalar_select %p399, %s25, 4
          %s401 = scalar_lea.vmem %s9, %s400
        $region48: #{graph_encoder_forward.1} parent=27 // pred_fallthru
          _
        // Predicated region
        $region49: #{graph_encoder_forward.1} parent=27 // pred_check
          %p402 = pneg %p196
        $region50: #{graph_encoder_forward.1} parent=27 // pred_check_branch
          %404 = sbr.rel (%p402) target = $region52
        $region51: #{graph_encoder_forward.1} parent=27 // pred_region
          %p405 = scmp.lt.s32.totalorder %s25, 4
          %s406 = scalar_select %p405, %s25, 4
          %s407 = scalar_lea.vmem %s10, %s406
        $region52: #{graph_encoder_forward.1} parent=27 // pred_fallthru
          _
        // Predicated region
        $region53: #{graph_encoder_forward.1} parent=27 // pred_check
          %p408 = pneg %p222
        $region54: #{graph_encoder_forward.1} parent=27 // pred_check_branch
          %410 = sbr.rel (%p408) target = $region56
        $region55: #{graph_encoder_forward.1} parent=27 // pred_region
          %p411 = scmp.lt.s32.totalorder %s25, 4
          %s412 = scalar_select %p411, %s25, 4
          %s413 = smul.addr %s412, 256
          %s414 = smul.addr %s413, 4
          %s415 = scalar_lea.vmem %s11, %s414
        $region56: #{graph_encoder_forward.1} parent=27 // pred_fallthru
          _
        // Predicated region
        $region57: #{graph_encoder_forward.1} parent=27 // pred_check
          %p416 = pneg %p248
        $region58: #{graph_encoder_forward.1} parent=27 // pred_check_branch
          %418 = sbr.rel (%p416) target = $region60
        $region59: #{graph_encoder_forward.1} parent=27 // pred_region
          %p419 = scmp.lt.s32.totalorder %s25, 4
          %s420 = scalar_select %p419, %s25, 4
          %s421 = smul.addr %s420, 8
          %s422 = scalar_lea.vmem %s12, %s421
        $region60: #{graph_encoder_forward.1} parent=27 // pred_fallthru
          _
      $region28: #{graph_encoder_forward.1} parent=5 // pred_fallthru
        _
      %p423 = scmp.le.s32.totalorder 1, %s25
      %p424 = scmp.lt.s32.totalorder %s25, 6
      %p425 = pnand %p423, %p424
      %p426 = pneg %p425
      // Predicated region
      $region61: #{graph_encoder_forward.1} parent=5 // pred_check
        _
      $region62: #{graph_encoder_forward.1} parent=5 // pred_check_branch
        %428 = sbr.rel (%p425) target = $region64
      $region63: #{graph_encoder_forward.1} parent=5 // pred_region
        %s429 = ssub.s32 %s25, 1
        %p430 = pneg %p46
        %p431 = pneg %p43
        %p432 = scmp.lt.s32.totalorder %s30, 4
        %s433 = scalar_select %p432, %s30, 4
        %s434 = smul.addr %s433, 48
        %s435 = smul.addr %s434, 4
        %s436 = scalar_lea.vmem %s5, %s435
        %p437 = pneg %p72
        %p438 = pneg %p69
        %p439 = scmp.lt.s32.totalorder %s30, 4
        %s440 = scalar_select %p439, %s30, 4
        %s441 = smul.addr %s440, 3
        %s442 = scalar_lea.vmem %s6, %s441
        %p443 = pneg %p98
        %p444 = pneg %p95
        %p445 = scmp.lt.s32.totalorder %s30, 4
        %s446 = scalar_select %p445, %s30, 4
        %s447 = smul.addr %s446, 48
        %s448 = smul.addr %s447, 4
        %s449 = scalar_lea.vmem %s7, %s448
        %p450 = pneg %p124
        %p451 = pneg %p121
        %p452 = scmp.lt.s32.totalorder %s30, 4
        %s453 = scalar_select %p452, %s30, 4
        %s454 = smul.addr %s453, 3
        %s455 = scalar_lea.vmem %s8, %s454
        %p456 = pneg %p150
        %p457 = pneg %p147
        %p458 = scmp.lt.s32.totalorder %s30, 4
        %s459 = scalar_select %p458, %s30, 4
        %s460 = scalar_lea.vmem %s9, %s459
        %p461 = pneg %p176
        %p462 = pneg %p173
        %p463 = scmp.lt.s32.totalorder %s30, 4
        %s464 = scalar_select %p463, %s30, 4
        %s465 = scalar_lea.vmem %s10, %s464
        %p466 = pneg %p202
        %p467 = pneg %p199
        %p468 = scmp.lt.s32.totalorder %s30, 4
        %s469 = scalar_select %p468, %s30, 4
        %s470 = smul.addr %s469, 256
        %s471 = smul.addr %s470, 4
        %s472 = scalar_lea.vmem %s11, %s471
        %p473 = pneg %p228
        %p474 = pneg %p225
        %p475 = scmp.lt.s32.totalorder %s30, 4
        %s476 = scalar_select %p475, %s30, 4
        %s477 = smul.addr %s476, 8
        %s478 = scalar_lea.vmem %s12, %s477
        %p479 = pneg %p254
        %p480 = pneg %p251
        %p481 = pneg %p275
        %p482 = pneg %p272
        %p483 = pneg %p296
        %p484 = pneg %p293
        %p485 = pneg %p317
        %p486 = pneg %p314
        %p487 = pneg %p338
        %p488 = pneg %p335
        %p489 = scmp.lt.s32.totalorder %s30, 4
        %s490 = scalar_select %p489, %s30, 4
        %s491 = smul.addr %s490, 48
        %s492 = smul.addr %s491, 4
        %s493 = scalar_lea.vmem %s5, %s492
        %p494 = scmp.lt.s32.totalorder %s30, 4
        %s495 = scalar_select %p494, %s30, 4
        %s496 = smul.addr %s495, 3
        %s497 = scalar_lea.vmem %s6, %s496
        %p498 = scmp.lt.s32.totalorder %s30, 4
        %s499 = scalar_select %p498, %s30, 4
        %s500 = smul.addr %s499, 48
        %s501 = smul.addr %s500, 4
        %s502 = scalar_lea.vmem %s7, %s501
        %p503 = scmp.lt.s32.totalorder %s30, 4
        %s504 = scalar_select %p503, %s30, 4
        %s505 = smul.addr %s504, 3
        %s506 = scalar_lea.vmem %s8, %s505
        %p507 = scmp.lt.s32.totalorder %s30, 4
        %s508 = scalar_select %p507, %s30, 4
        %s509 = scalar_lea.vmem %s9, %s508
        %p510 = scmp.lt.s32.totalorder %s30, 4
        %s511 = scalar_select %p510, %s30, 4
        %s512 = scalar_lea.vmem %s10, %s511
        %p513 = scmp.lt.s32.totalorder %s30, 4
        %s514 = scalar_select %p513, %s30, 4
        %s515 = smul.addr %s514, 256
        %s516 = smul.addr %s515, 4
        %s517 = scalar_lea.vmem %s11, %s516
        %p518 = scmp.lt.s32.totalorder %s30, 4
        %s519 = scalar_select %p518, %s30, 4
        %s520 = smul.addr %s519, 8
        %s521 = scalar_lea.vmem %s12, %s520
        %p523 = scmp.eq.s32.totalorder %s30, 0
        // Predicated region
        $region65: #{graph_encoder_forward.1} parent=63 // pred_check
          %p524 = pneg %p523
        $region66: #{graph_encoder_forward.1} parent=63 // pred_check_branch
          %526 = sbr.rel (%p524) target = $region68
        $region67: #{graph_encoder_forward.1} parent=63 // pred_region
          %p528 = scmp.lt.u32.totalorder 16, 8
          %p529 = pneg %p528
          // Predicated region
          $region69: #{graph_encoder_forward.1} parent=67 // pred_check
            _
          $region70: #{graph_encoder_forward.1} parent=67 // pred_check_branch
            %531 = sbr.rel (%p528) target = $region72
          $region71: #{graph_encoder_forward.1} parent=67 // pred_region
            %s546 = sand.u32 16, 7
            %p547 = scmp.eq.s32.totalorder %s546, 0
            // Predicated region
            $region84: #{graph_encoder_forward.1} parent=71 // pred_check
              %p548 = pneg %p547
            $region85: #{graph_encoder_forward.1} parent=71 // pred_check_branch
              %550 = sbr.rel (%p548) target = $region87
            $region86: #{graph_encoder_forward.1} parent=71 // pred_region
              loop: start=0, step=1, limit=1
              $region88: #{graph_encoder_forward.1} parent=86 // loop_pre_header
                _
              $region89: #{graph_encoder_forward.1} parent=86 // loop_header
                %s552 = sphi 0, %s556
                %p553 = scmp.ge.s32.totalorder %s552, 1
                %s557 = sphi %s0, %s0
                %s558 = sphi [#allocation2], [#allocation2]
              $region90: #{graph_encoder_forward.1} parent=86 // loop_header_branch
                %555 = sbr.rel (%p553) target = $region94
              $region91: #{graph_encoder_forward.1} parent=86 // loop_body
                %v559 = vld [vmem:[%s557] sm:$0xff]
                %560 = vst [vmem:[%s558] sm:$0xff] %v559
                %v561 = vld [vmem:[%s557 + $0x8] sm:$0xff]
                %562 = vst [vmem:[%s558 + $0x8] sm:$0xff] %v561
              $region92: #{graph_encoder_forward.1} parent=86 // loop_footer
                %s556 = sadd.s32 1, %s552
              $region93: #{graph_encoder_forward.1} parent=86 // loop_footer_branch
                %551 = sbr.rel target = $region89
              $region94: #{graph_encoder_forward.1} parent=86 // loop_exit
                _
            $region87: #{graph_encoder_forward.1} parent=71 // pred_fallthru
              _
            %p563 = pneg %p547
            // Predicated region
            $region95: #{graph_encoder_forward.1} parent=71 // pred_check
              _
            $region96: #{graph_encoder_forward.1} parent=71 // pred_check_branch
              %565 = sbr.rel (%p547) target = $region98
            $region97: #{graph_encoder_forward.1} parent=71 // pred_region
              %s566 = sand.u32 16, 7
            $region98: #{graph_encoder_forward.1} parent=71 // pred_fallthru
              _
          $region72: #{graph_encoder_forward.1} parent=67 // pred_fallthru
            _
          // Predicated region
          $region73: #{graph_encoder_forward.1} parent=67 // pred_check
            %p532 = pneg %p528
          $region74: #{graph_encoder_forward.1} parent=67 // pred_check_branch
            %534 = sbr.rel (%p532) target = $region76
          $region75: #{graph_encoder_forward.1} parent=67 // pred_region
            %s535 = sshllo.u32 0, 16
            loop: start=0, step=1, limit=1
            $region77: #{graph_encoder_forward.1} parent=75 // loop_pre_header
              _
            $region78: #{graph_encoder_forward.1} parent=75 // loop_header
              %s537 = sphi 0, %s541
              %p538 = scmp.ge.s32.totalorder %s537, 1
              %s542 = sphi %s0, %s0
              %s543 = sphi [#allocation2], [#allocation2]
            $region79: #{graph_encoder_forward.1} parent=75 // loop_header_branch
              %540 = sbr.rel (%p538) target = $region83
            $region80: #{graph_encoder_forward.1} parent=75 // loop_body
              %v544 = vld [vmem:[%s542] sm:%s535]
              %545 = vst [vmem:[%s543] sm:%s535] %v544
            $region81: #{graph_encoder_forward.1} parent=75 // loop_footer
              %s541 = sadd.s32 1, %s537
            $region82: #{graph_encoder_forward.1} parent=75 // loop_footer_branch
              %536 = sbr.rel target = $region78
            $region83: #{graph_encoder_forward.1} parent=75 // loop_exit
              _
          $region76: #{graph_encoder_forward.1} parent=67 // pred_fallthru
            _
          // Predicated region
          $region99: #{graph_encoder_forward.1} parent=67 // pred_check
            _
          $region100: #{graph_encoder_forward.1} parent=67 // pred_check_branch
            %569 = sbr.rel (0) target = $region102
          $region101: #{graph_encoder_forward.1} parent=67 // pred_region
            %570 = vsyncadd [#allocation8], 256
          $region102: #{graph_encoder_forward.1} parent=67 // pred_fallthru
            _
          %s571 = scalar_lea.sflag [#allocation8], 1
          %p573 = scmp.lt.u32.totalorder 32, 8
          %p574 = pneg %p573
          // Predicated region
          $region103: #{graph_encoder_forward.1} parent=67 // pred_check
            _
          $region104: #{graph_encoder_forward.1} parent=67 // pred_check_branch
            %576 = sbr.rel (%p573) target = $region106
          $region105: #{graph_encoder_forward.1} parent=67 // pred_region
            %s591 = sand.u32 32, 7
            %p592 = scmp.eq.s32.totalorder %s591, 0
            // Predicated region
            $region118: #{graph_encoder_forward.1} parent=105 // pred_check
              %p593 = pneg %p592
            $region119: #{graph_encoder_forward.1} parent=105 // pred_check_branch
              %595 = sbr.rel (%p593) target = $region121
            $region120: #{graph_encoder_forward.1} parent=105 // pred_region
              loop: start=0, step=1, limit=1
              $region122: #{graph_encoder_forward.1} parent=120 // loop_pre_header
                _
              $region123: #{graph_encoder_forward.1} parent=120 // loop_header
                %s597 = sphi 0, %s601
                %p598 = scmp.ge.s32.totalorder %s597, 1
                %s602 = sphi %s1, %s1
                %s603 = sphi [#allocation3], [#allocation3]
              $region124: #{graph_encoder_forward.1} parent=120 // loop_header_branch
                %600 = sbr.rel (%p598) target = $region128
              $region125: #{graph_encoder_forward.1} parent=120 // loop_body
                %v604 = vld [vmem:[%s602] sm:$0xff]
                %605 = vst [vmem:[%s603] sm:$0xff] %v604
                %v606 = vld [vmem:[%s602 + $0x8] sm:$0xff]
                %607 = vst [vmem:[%s603 + $0x8] sm:$0xff] %v606
                %v608 = vld [vmem:[%s602 + $0x10] sm:$0xff]
                %609 = vst [vmem:[%s603 + $0x10] sm:$0xff] %v608
                %v610 = vld [vmem:[%s602 + $0x18] sm:$0xff]
                %611 = vst [vmem:[%s603 + $0x18] sm:$0xff] %v610
              $region126: #{graph_encoder_forward.1} parent=120 // loop_footer
                %s601 = sadd.s32 1, %s597
              $region127: #{graph_encoder_forward.1} parent=120 // loop_footer_branch
                %596 = sbr.rel target = $region123
              $region128: #{graph_encoder_forward.1} parent=120 // loop_exit
                _
            $region121: #{graph_encoder_forward.1} parent=105 // pred_fallthru
              _
            %p612 = pneg %p592
            // Predicated region
            $region129: #{graph_encoder_forward.1} parent=105 // pred_check
              _
            $region130: #{graph_encoder_forward.1} parent=105 // pred_check_branch
              %614 = sbr.rel (%p592) target = $region132
            $region131: #{graph_encoder_forward.1} parent=105 // pred_region
              %s615 = sand.u32 32, 7
            $region132: #{graph_encoder_forward.1} parent=105 // pred_fallthru
              _
          $region106: #{graph_encoder_forward.1} parent=67 // pred_fallthru
            _
          // Predicated region
          $region107: #{graph_encoder_forward.1} parent=67 // pred_check
            %p577 = pneg %p573
          $region108: #{graph_encoder_forward.1} parent=67 // pred_check_branch
            %579 = sbr.rel (%p577) target = $region110
          $region109: #{graph_encoder_forward.1} parent=67 // pred_region
            %s580 = sshllo.u32 0, 32
            loop: start=0, step=1, limit=1
            $region111: #{graph_encoder_forward.1} parent=109 // loop_pre_header
              _
            $region112: #{graph_encoder_forward.1} parent=109 // loop_header
              %s582 = sphi 0, %s586
              %p583 = scmp.ge.s32.totalorder %s582, 1
              %s587 = sphi %s1, %s1
              %s588 = sphi [#allocation3], [#allocation3]
            $region113: #{graph_encoder_forward.1} parent=109 // loop_header_branch
              %585 = sbr.rel (%p583) target = $region117
            $region114: #{graph_encoder_forward.1} parent=109 // loop_body
              %v589 = vld [vmem:[%s587] sm:%s580]
              %590 = vst [vmem:[%s588] sm:%s580] %v589
            $region115: #{graph_encoder_forward.1} parent=109 // loop_footer
              %s586 = sadd.s32 1, %s582
            $region116: #{graph_encoder_forward.1} parent=109 // loop_footer_branch
              %581 = sbr.rel target = $region112
            $region117: #{graph_encoder_forward.1} parent=109 // loop_exit
              _
          $region110: #{graph_encoder_forward.1} parent=67 // pred_fallthru
            _
          // Predicated region
          $region133: #{graph_encoder_forward.1} parent=67 // pred_check
            _
          $region134: #{graph_encoder_forward.1} parent=67 // pred_check_branch
            %618 = sbr.rel (0) target = $region136
          $region135: #{graph_encoder_forward.1} parent=67 // pred_region
            %619 = vsyncadd %s571, 512
          $region136: #{graph_encoder_forward.1} parent=67 // pred_fallthru
            _
          %s620 = scalar_lea.sflag [#allocation8], 2
          %p622 = scmp.lt.u32.totalorder 32, 8
          %p623 = pneg %p622
          // Predicated region
          $region137: #{graph_encoder_forward.1} parent=67 // pred_check
            _
          $region138: #{graph_encoder_forward.1} parent=67 // pred_check_branch
            %625 = sbr.rel (%p622) target = $region140
          $region139: #{graph_encoder_forward.1} parent=67 // pred_region
            %s640 = sand.u32 32, 7
            %p641 = scmp.eq.s32.totalorder %s640, 0
            // Predicated region
            $region152: #{graph_encoder_forward.1} parent=139 // pred_check
              %p642 = pneg %p641
            $region153: #{graph_encoder_forward.1} parent=139 // pred_check_branch
              %644 = sbr.rel (%p642) target = $region155
            $region154: #{graph_encoder_forward.1} parent=139 // pred_region
              loop: start=0, step=1, limit=1
              $region156: #{graph_encoder_forward.1} parent=154 // loop_pre_header
                _
              $region157: #{graph_encoder_forward.1} parent=154 // loop_header
                %s646 = sphi 0, %s650
                %p647 = scmp.ge.s32.totalorder %s646, 1
                %s651 = sphi %s2, %s2
                %s652 = sphi [#allocation6], [#allocation6]
              $region158: #{graph_encoder_forward.1} parent=154 // loop_header_branch
                %649 = sbr.rel (%p647) target = $region162
              $region159: #{graph_encoder_forward.1} parent=154 // loop_body
                %v653 = vld [vmem:[%s651] sm:$0xff]
                %654 = vst [vmem:[%s652] sm:$0xff] %v653
                %v655 = vld [vmem:[%s651 + $0x8] sm:$0xff]
                %656 = vst [vmem:[%s652 + $0x8] sm:$0xff] %v655
                %v657 = vld [vmem:[%s651 + $0x10] sm:$0xff]
                %658 = vst [vmem:[%s652 + $0x10] sm:$0xff] %v657
                %v659 = vld [vmem:[%s651 + $0x18] sm:$0xff]
                %660 = vst [vmem:[%s652 + $0x18] sm:$0xff] %v659
              $region160: #{graph_encoder_forward.1} parent=154 // loop_footer
                %s650 = sadd.s32 1, %s646
              $region161: #{graph_encoder_forward.1} parent=154 // loop_footer_branch
                %645 = sbr.rel target = $region157
              $region162: #{graph_encoder_forward.1} parent=154 // loop_exit
                _
            $region155: #{graph_encoder_forward.1} parent=139 // pred_fallthru
              _
            %p661 = pneg %p641
            // Predicated region
            $region163: #{graph_encoder_forward.1} parent=139 // pred_check
              _
            $region164: #{graph_encoder_forward.1} parent=139 // pred_check_branch
              %663 = sbr.rel (%p641) target = $region166
            $region165: #{graph_encoder_forward.1} parent=139 // pred_region
              %s664 = sand.u32 32, 7
            $region166: #{graph_encoder_forward.1} parent=139 // pred_fallthru
              _
          $region140: #{graph_encoder_forward.1} parent=67 // pred_fallthru
            _
          // Predicated region
          $region141: #{graph_encoder_forward.1} parent=67 // pred_check
            %p626 = pneg %p622
          $region142: #{graph_encoder_forward.1} parent=67 // pred_check_branch
            %628 = sbr.rel (%p626) target = $region144
          $region143: #{graph_encoder_forward.1} parent=67 // pred_region
            %s629 = sshllo.u32 0, 32
            loop: start=0, step=1, limit=1
            $region145: #{graph_encoder_forward.1} parent=143 // loop_pre_header
              _
            $region146: #{graph_encoder_forward.1} parent=143 // loop_header
              %s631 = sphi 0, %s635
              %p632 = scmp.ge.s32.totalorder %s631, 1
              %s636 = sphi %s2, %s2
              %s637 = sphi [#allocation6], [#allocation6]
            $region147: #{graph_encoder_forward.1} parent=143 // loop_header_branch
              %634 = sbr.rel (%p632) target = $region151
            $region148: #{graph_encoder_forward.1} parent=143 // loop_body
              %v638 = vld [vmem:[%s636] sm:%s629]
              %639 = vst [vmem:[%s637] sm:%s629] %v638
            $region149: #{graph_encoder_forward.1} parent=143 // loop_footer
              %s635 = sadd.s32 1, %s631
            $region150: #{graph_encoder_forward.1} parent=143 // loop_footer_branch
              %630 = sbr.rel target = $region146
            $region151: #{graph_encoder_forward.1} parent=143 // loop_exit
              _
          $region144: #{graph_encoder_forward.1} parent=67 // pred_fallthru
            _
          // Predicated region
          $region167: #{graph_encoder_forward.1} parent=67 // pred_check
            _
          $region168: #{graph_encoder_forward.1} parent=67 // pred_check_branch
            %667 = sbr.rel (0) target = $region170
          $region169: #{graph_encoder_forward.1} parent=67 // pred_region
            %668 = vsyncadd %s620, 512
          $region170: #{graph_encoder_forward.1} parent=67 // pred_fallthru
            _
          %s669 = scalar_lea.sflag [#allocation8], 3
          %p671 = scmp.lt.u32.totalorder 8, 8
          %p672 = pneg %p671
          // Predicated region
          $region171: #{graph_encoder_forward.1} parent=67 // pred_check
            _
          $region172: #{graph_encoder_forward.1} parent=67 // pred_check_branch
            %674 = sbr.rel (%p671) target = $region174
          $region173: #{graph_encoder_forward.1} parent=67 // pred_region
            %s689 = sand.u32 8, 7
            %p690 = scmp.eq.s32.totalorder %s689, 0
            // Predicated region
            $region186: #{graph_encoder_forward.1} parent=173 // pred_check
              %p691 = pneg %p690
            $region187: #{graph_encoder_forward.1} parent=173 // pred_check_branch
              %693 = sbr.rel (%p691) target = $region189
            $region188: #{graph_encoder_forward.1} parent=173 // pred_region
              loop: start=0, step=1, limit=1
              $region190: #{graph_encoder_forward.1} parent=188 // loop_pre_header
                _
              $region191: #{graph_encoder_forward.1} parent=188 // loop_header
                %s695 = sphi 0, %s699
                %p696 = scmp.ge.s32.totalorder %s695, 1
                %s700 = sphi %s3, %s3
                %s701 = sphi [#allocation7], [#allocation7]
              $region192: #{graph_encoder_forward.1} parent=188 // loop_header_branch
                %698 = sbr.rel (%p696) target = $region196
              $region193: #{graph_encoder_forward.1} parent=188 // loop_body
                %v702 = vld [vmem:[%s700] sm:$0xff]
                %703 = vst [vmem:[%s701] sm:$0xff] %v702
              $region194: #{graph_encoder_forward.1} parent=188 // loop_footer
                %s699 = sadd.s32 1, %s695
              $region195: #{graph_encoder_forward.1} parent=188 // loop_footer_branch
                %694 = sbr.rel target = $region191
              $region196: #{graph_encoder_forward.1} parent=188 // loop_exit
                _
            $region189: #{graph_encoder_forward.1} parent=173 // pred_fallthru
              _
            %p704 = pneg %p690
            // Predicated region
            $region197: #{graph_encoder_forward.1} parent=173 // pred_check
              _
            $region198: #{graph_encoder_forward.1} parent=173 // pred_check_branch
              %706 = sbr.rel (%p690) target = $region200
            $region199: #{graph_encoder_forward.1} parent=173 // pred_region
              %s707 = sand.u32 8, 7
            $region200: #{graph_encoder_forward.1} parent=173 // pred_fallthru
              _
          $region174: #{graph_encoder_forward.1} parent=67 // pred_fallthru
            _
          // Predicated region
          $region175: #{graph_encoder_forward.1} parent=67 // pred_check
            %p675 = pneg %p671
          $region176: #{graph_encoder_forward.1} parent=67 // pred_check_branch
            %677 = sbr.rel (%p675) target = $region178
          $region177: #{graph_encoder_forward.1} parent=67 // pred_region
            %s678 = sshllo.u32 0, 8
            loop: start=0, step=1, limit=1
            $region179: #{graph_encoder_forward.1} parent=177 // loop_pre_header
              _
            $region180: #{graph_encoder_forward.1} parent=177 // loop_header
              %s680 = sphi 0, %s684
              %p681 = scmp.ge.s32.totalorder %s680, 1
              %s685 = sphi %s3, %s3
              %s686 = sphi [#allocation7], [#allocation7]
            $region181: #{graph_encoder_forward.1} parent=177 // loop_header_branch
              %683 = sbr.rel (%p681) target = $region185
            $region182: #{graph_encoder_forward.1} parent=177 // loop_body
              %v687 = vld [vmem:[%s685] sm:%s678]
              %688 = vst [vmem:[%s686] sm:%s678] %v687
            $region183: #{graph_encoder_forward.1} parent=177 // loop_footer
              %s684 = sadd.s32 1, %s680
            $region184: #{graph_encoder_forward.1} parent=177 // loop_footer_branch
              %679 = sbr.rel target = $region180
            $region185: #{graph_encoder_forward.1} parent=177 // loop_exit
              _
          $region178: #{graph_encoder_forward.1} parent=67 // pred_fallthru
            _
          // Predicated region
          $region201: #{graph_encoder_forward.1} parent=67 // pred_check
            _
          $region202: #{graph_encoder_forward.1} parent=67 // pred_check_branch
            %710 = sbr.rel (0) target = $region204
          $region203: #{graph_encoder_forward.1} parent=67 // pred_region
            %711 = vsyncadd %s669, 128
          $region204: #{graph_encoder_forward.1} parent=67 // pred_fallthru
            _
          %s712 = smul.u32 16, 1
          %s713 = sshll.u32 %s712, 4
          %714 = dma.done [#allocation8], %s713
          %s715 = smul.u32 32, 1
          %s716 = sshll.u32 %s715, 4
          %717 = dma.done %s571, %s716
          %s718 = smul.u32 4, 8
          %s719 = smul.u32 %s718, 1
          %s720 = sshll.u32 %s719, 4
          %721 = dma.done %s620, %s720
          %s722 = smul.u32 4, 2
          %s723 = smul.u32 %s722, 1
          %s724 = sshll.u32 %s723, 4
          %725 = dma.done %s669, %s724
          %726 = vst [vmem:[#allocation4] sm:$0xff] 0.0
          %727 = vst [vmem:[#allocation4 + $0x8] sm:$0xff] 0.0
          %728 = vst [vmem:[#allocation5] sm:$0xff] 0.0
          %729 = vst [vmem:[#allocation5 + $0x8] sm:$0xff] 0.0
          %730 = vst [vmem:[#allocation5 + $0x10] sm:$0xff] 0.0
          %731 = vst [vmem:[#allocation5 + $0x18] sm:$0xff] 0.0
        $region68: #{graph_encoder_forward.1} parent=63 // pred_fallthru
          _
        %v732 = vld [vmem:[#allocation2] sm:$0xff]
        %v733 = vld [vmem:[#allocation2 + $0x8] sm:$0xff]
        %v734 = vld [vmem:[#allocation3] sm:$0xff]
        %v735 = vld [vmem:[#allocation3 + $0x8] sm:$0xff]
        %v736 = vld [vmem:[#allocation3 + $0x10] sm:$0xff]
        %v737 = vld [vmem:[#allocation3 + $0x18] sm:$0xff]
        %v738 = vpack.c.bf16 %v733, %v732
        %v739 = vpack.c.bf16 %v735, %v734
        %v740 = vpack.c.bf16 %v737, %v736
        %v741 = vld [vmem:[#allocation6] sm:$0xff]
        %v742 = vld [vmem:[#allocation6 + $0x8] sm:$0xff]
        %v743 = vld [vmem:[#allocation6 + $0x10] sm:$0xff]
        %v744 = vld [vmem:[#allocation6 + $0x18] sm:$0xff]
        %vm745 = vcmask 130048
        %v747 = vsel %vm745, %v741, 0
        %v750 = vsel %vm745, %v742, 0
        %v753 = vsel %vm745, %v743, 0
        %v756 = vsel %vm745, %v744, 0
        %758 = vmatprep.subr.bf16.mxu0 0
        %759 = vmatpush1.bf16.msra.mxu0 %v738
        %760 = vmatprep.subr.bf16.mxu0 0
        %761 = vmatpush1.bf16.msra.mxu0 0
        %762 = vmatprep.subr.bf16.mxu0 0
        %763 = vmatpush1.bf16.msra.mxu0 0
        %764 = vmatprep.subr.bf16.mxu0 0
        %765 = vmatpush1.bf16.msra.mxu0 0
        %766 = vmatprep.subr.bf16.mxu0 0
        %767 = vmatpush1.bf16.msra.mxu0 0
        %768 = vmatprep.subr.bf16.mxu0 0
        %769 = vmatpush1.bf16.msra.mxu0 0
        %770 = vmatprep.subr.bf16.mxu0 0
        %771 = vmatpush1.bf16.msra.mxu0 0
        %772 = vmatprep.subr.bf16.mxu0 0
        %773 = vmatpush1.bf16.msra.mxu0 0
        %774 = vmatprep.subr.bf16.mxu0 0
        %775 = vmatpush1.bf16.msra.mxu0 0
        %776 = vmatprep.subr.bf16.mxu0 0
        %777 = vmatpush1.bf16.msra.mxu0 0
        %778 = vmatprep.subr.bf16.mxu0 0
        %779 = vmatpush1.bf16.msra.mxu0 0
        %780 = vmatprep.subr.bf16.mxu0 0
        %781 = vmatpush1.bf16.msra.mxu0 0
        %782 = vmatprep.subr.bf16.mxu0 0
        %783 = vmatpush1.bf16.msra.mxu0 0
        %784 = vmatprep.subr.bf16.mxu0 0
        %785 = vmatpush1.bf16.msra.mxu0 0
        %786 = vmatprep.subr.bf16.mxu0 0
        %787 = vmatpush1.bf16.msra.mxu0 0
        %788 = vmatprep.subr.bf16.mxu0 0
        %789 = vmatpush1.bf16.msra.mxu0 0
        %790 = vmatprep.mubr.bf16.mxu0 0
        %791 = vmatmul.mubr.bf16.gmra.mrb[0].mxu0 %v747
        %v792 = vpop.f32.mrb[0].mxu0
        %v793 = vadd.f32 0.0, %v792
        %v794 = vpop.f32.mrb[0].mxu0
        %v795 = vpop.f32.mrb[0].mxu0
        %v796 = vadd.f32 0.0, %v795
        %v797 = vpop.f32.mrb[0].mxu0
        %798 = vmatprep.mubr.bf16.mxu0 0
        %799 = vmatmul.mubr.bf16.gmra.mrb[0].mxu0 %v750
        %v800 = vpop.f32.mrb[0].mxu0
        %v801 = vadd.f32 0.0, %v800
        %v802 = vpop.f32.mrb[0].mxu0
        %v803 = vpop.f32.mrb[0].mxu0
        %v804 = vadd.f32 0.0, %v803
        %v805 = vpop.f32.mrb[0].mxu0
        %806 = vmatprep.mubr.bf16.mxu0 0
        %807 = vmatmul.mubr.bf16.gmra.mrb[0].mxu0 %v753
        %v808 = vpop.f32.mrb[0].mxu0
        %v809 = vadd.f32 0.0, %v808
        %v810 = vpop.f32.mrb[0].mxu0
        %v811 = vpop.f32.mrb[0].mxu0
        %v812 = vadd.f32 0.0, %v811
        %v813 = vpop.f32.mrb[0].mxu0
        %814 = vmatprep.mubr.bf16.mxu0 0
        %815 = vmatmul.mubr.bf16.gmra.mrb[0].mxu0 %v756
        %v816 = vpop.f32.mrb[0].mxu0
        %v817 = vadd.f32 0.0, %v816
        %v818 = vpop.f32.mrb[0].mxu0
        %v819 = vpop.f32.mrb[0].mxu0
        %v820 = vadd.f32 0.0, %v819
        %v821 = vpop.f32.mrb[0].mxu0
        %822 = vdwg.mxu0
        %v823 = vpack.c.bf16 %v796, %v793
        %v824 = vpack.c.bf16 %v804, %v801
        %v825 = vld [vmem:[%s493] sm:$0xf]
        %v826 = vld [vmem:[%s493 + $0x4] sm:$0xf]
        %v827 = vld [vmem:[%s493 + $0x8] sm:$0xf]
        %v828 = vld [vmem:[%s493 + $0xc] sm:$0xf]
        %v829 = vld [vmem:[%s493 + $0x10] sm:$0xf]
        %v830 = vld [vmem:[%s493 + $0x14] sm:$0xf]
        %v831 = vld [vmem:[%s493 + $0x18] sm:$0xf]
        %v832 = vld [vmem:[%s493 + $0x1c] sm:$0xf]
        %v833 = vld [vmem:[%s493 + $0x20] sm:$0xf]
        %v834 = vld [vmem:[%s493 + $0x24] sm:$0xf]
        %v835 = vld [vmem:[%s493 + $0x28] sm:$0xf]
        %v836 = vld [vmem:[%s493 + $0x2c] sm:$0xf]
        %v837 = vld [vmem:[%s493 + $0x30] sm:$0xf]
        %v838 = vld [vmem:[%s493 + $0x34] sm:$0xf]
        %v839 = vld [vmem:[%s493 + $0x38] sm:$0xf]
        %v840 = vld [vmem:[%s493 + $0x3c] sm:$0xf]
        %v841 = vld [vmem:[%s497] sm:$0x1]
        %v843 = vlaneseq
        %v844 = vshrl.u32 %v843, 7
        %v845 = vsub.s32 0, %v844
        %v846 = vrot.slane %v841, %v845
        %v864 = vunpack.c.l.b16 %v825
        %v865 = vunpack.c.l.b16 %v826
        %v866 = vunpack.c.l.b16 %v827
        %v867 = vunpack.c.l.b16 %v828
        %v868 = vunpack.c.l.b16 %v829
        %v869 = vunpack.c.l.b16 %v830
        %v870 = vunpack.c.l.b16 %v831
        %v871 = vunpack.c.l.b16 %v832
        %v872 = vunpack.c.l.b16 %v833
        %v873 = vunpack.c.l.b16 %v834
        %v874 = vunpack.c.l.b16 %v835
        %v875 = vunpack.c.l.b16 %v836
        %v876 = vunpack.c.l.b16 %v837
        %v877 = vunpack.c.l.b16 %v838
        %v878 = vunpack.c.l.b16 %v839
        %v879 = vunpack.c.l.b16 %v840
        %v880 = vpack.c.b16 %v865, %v864
        %v881 = vpack.c.b16 %v867, %v866
        %v882 = vpack.c.b16 %v869, %v868
        %v883 = vpack.c.b16 %v871, %v870
        %v884 = vpack.c.b16 %v873, %v872
        %v885 = vpack.c.b16 %v875, %v874
        %v886 = vpack.c.b16 %v877, %v876
        %v887 = vpack.c.b16 %v879, %v878
        %896 = vmatprep.subr.bf16.mxu0 0
        %897 = vmatpush1.bf16.msra.mxu0 %v880
        %898 = vmatprep.subr.bf16.mxu0 0
        %899 = vmatpush1.bf16.msra.mxu0 %v881
        %900 = vmatprep.subr.bf16.mxu0 0
        %901 = vmatpush1.bf16.msra.mxu0 %v882
        %902 = vmatprep.subr.bf16.mxu0 0
        %903 = vmatpush1.bf16.msra.mxu0 %v883
        %904 = vmatprep.subr.bf16.mxu0 0
        %905 = vmatpush1.bf16.msra.mxu0 %v884
        %906 = vmatprep.subr.bf16.mxu0 0
        %907 = vmatpush1.bf16.msra.mxu0 %v885
        %908 = vmatprep.subr.bf16.mxu0 0
        %909 = vmatpush1.bf16.msra.mxu0 %v886
        %910 = vmatprep.subr.bf16.mxu0 0
        %911 = vmatpush1.bf16.msra.mxu0 %v887
        %912 = vmatprep.subr.bf16.mxu0 0
        %913 = vmatpush1.bf16.msra.mxu0 0
        %914 = vmatprep.subr.bf16.mxu0 0
        %915 = vmatpush1.bf16.msra.mxu0 0
        %916 = vmatprep.subr.bf16.mxu0 0
        %917 = vmatpush1.bf16.msra.mxu0 0
        %918 = vmatprep.subr.bf16.mxu0 0
        %919 = vmatpush1.bf16.msra.mxu0 0
        %920 = vmatprep.subr.bf16.mxu0 0
        %921 = vmatpush1.bf16.msra.mxu0 0
        %922 = vmatprep.subr.bf16.mxu0 0
        %923 = vmatpush1.bf16.msra.mxu0 0
        %924 = vmatprep.subr.bf16.mxu0 0
        %925 = vmatpush1.bf16.msra.mxu0 0
        %926 = vmatprep.subr.bf16.mxu0 0
        %927 = vmatpush1.bf16.msra.mxu0 0
        %928 = vmatprep.mubr.bf16.mxu0 0
        %929 = vmatmul.mubr.bf16.gmra.mrb[0].mxu0 %v823
        %v930 = vpop.f32.mrb[0].mxu0
        %v931 = vadd.f32 %v846, %v930
        %v932 = vpop.f32.mrb[0].mxu0
        %v933 = vpop.f32.mrb[0].mxu0
        %v934 = vadd.f32 %v846, %v933
        %v935 = vpop.f32.mrb[0].mxu0
        %936 = vmatprep.mubr.bf16.mxu0 0
        %937 = vmatmul.mubr.bf16.gmra.mrb[0].mxu0 %v824
        %v938 = vpop.f32.mrb[0].mxu0
        %v939 = vadd.f32 %v846, %v938
        %v940 = vpop.f32.mrb[0].mxu0
        %v941 = vpop.f32.mrb[0].mxu0
        %v942 = vadd.f32 %v846, %v941
        %v943 = vpop.f32.mrb[0].mxu0
        %944 = vdwg.mxu0
        %v945 = vmax.f32 %v931, 0.0
        %v946 = vmax.f32 %v934, 0.0
        %v947 = vmax.f32 %v939, 0.0
        %v948 = vmax.f32 %v942, 0.0
        %v949 = vpack.c.bf16 %v946, %v945
        %v950 = vpack.c.bf16 %v948, %v947
        %v951 = vld [vmem:[%s502] sm:$0xf]
        %v952 = vld [vmem:[%s502 + $0x4] sm:$0xf]
        %v953 = vld [vmem:[%s502 + $0x8] sm:$0xf]
        %v954 = vld [vmem:[%s502 + $0xc] sm:$0xf]
        %v955 = vld [vmem:[%s502 + $0x10] sm:$0xf]
        %v956 = vld [vmem:[%s502 + $0x14] sm:$0xf]
        %v957 = vld [vmem:[%s502 + $0x18] sm:$0xf]
        %v958 = vld [vmem:[%s502 + $0x1c] sm:$0xf]
        %v959 = vld [vmem:[%s502 + $0x20] sm:$0xf]
        %v960 = vld [vmem:[%s502 + $0x24] sm:$0xf]
        %v961 = vld [vmem:[%s502 + $0x28] sm:$0xf]
        %v962 = vld [vmem:[%s502 + $0x2c] sm:$0xf]
        %v963 = vld [vmem:[%s502 + $0x30] sm:$0xf]
        %v964 = vld [vmem:[%s502 + $0x34] sm:$0xf]
        %v965 = vld [vmem:[%s502 + $0x38] sm:$0xf]
        %v966 = vld [vmem:[%s502 + $0x3c] sm:$0xf]
        %v967 = vld [vmem:[%s506] sm:$0x1]
        %v969 = vlaneseq
        %v970 = vshrl.u32 %v969, 7
        %v971 = vsub.s32 0, %v970
        %v972 = vrot.slane %v967, %v971
        %v990 = vunpack.c.l.b16 %v951
        %v991 = vunpack.c.l.b16 %v952
        %v992 = vunpack.c.l.b16 %v953
        %v993 = vunpack.c.l.b16 %v954
        %v994 = vunpack.c.l.b16 %v955
        %v995 = vunpack.c.l.b16 %v956
        %v996 = vunpack.c.l.b16 %v957
        %v997 = vunpack.c.l.b16 %v958
        %v998 = vunpack.c.l.b16 %v959
        %v999 = vunpack.c.l.b16 %v960
        %v1000 = vunpack.c.l.b16 %v961
        %v1001 = vunpack.c.l.b16 %v962
        %v1002 = vunpack.c.l.b16 %v963
        %v1003 = vunpack.c.l.b16 %v964
        %v1004 = vunpack.c.l.b16 %v965
        %v1005 = vunpack.c.l.b16 %v966
        %v1006 = vpack.c.b16 %v991, %v990
        %v1007 = vpack.c.b16 %v993, %v992
        %v1008 = vpack.c.b16 %v995, %v994
        %v1009 = vpack.c.b16 %v997, %v996
        %v1010 = vpack.c.b16 %v999, %v998
        %v1011 = vpack.c.b16 %v1001, %v1000
        %v1012 = vpack.c.b16 %v1003, %v1002
        %v1013 = vpack.c.b16 %v1005, %v1004
        %1022 = vmatprep.subr.bf16.mxu0 0
        %1023 = vmatpush1.bf16.msra.mxu0 %v1006
        %1024 = vmatprep.subr.bf16.mxu0 0
        %1025 = vmatpush1.bf16.msra.mxu0 %v1007
        %1026 = vmatprep.subr.bf16.mxu0 0
        %1027 = vmatpush1.bf16.msra.mxu0 %v1008
        %1028 = vmatprep.subr.bf16.mxu0 0
        %1029 = vmatpush1.bf16.msra.mxu0 %v1009
        %1030 = vmatprep.subr.bf16.mxu0 0
        %1031 = vmatpush1.bf16.msra.mxu0 %v1010
        %1032 = vmatprep.subr.bf16.mxu0 0
        %1033 = vmatpush1.bf16.msra.mxu0 %v1011
        %1034 = vmatprep.subr.bf16.mxu0 0
        %1035 = vmatpush1.bf16.msra.mxu0 %v1012
        %1036 = vmatprep.subr.bf16.mxu0 0
        %1037 = vmatpush1.bf16.msra.mxu0 %v1013
        %1038 = vmatprep.subr.bf16.mxu0 0
        %1039 = vmatpush1.bf16.msra.mxu0 0
        %1040 = vmatprep.subr.bf16.mxu0 0
        %1041 = vmatpush1.bf16.msra.mxu0 0
        %1042 = vmatprep.subr.bf16.mxu0 0
        %1043 = vmatpush1.bf16.msra.mxu0 0
        %1044 = vmatprep.subr.bf16.mxu0 0
        %1045 = vmatpush1.bf16.msra.mxu0 0
        %1046 = vmatprep.subr.bf16.mxu0 0
        %1047 = vmatpush1.bf16.msra.mxu0 0
        %1048 = vmatprep.subr.bf16.mxu0 0
        %1049 = vmatpush1.bf16.msra.mxu0 0
        %1050 = vmatprep.subr.bf16.mxu0 0
        %1051 = vmatpush1.bf16.msra.mxu0 0
        %1052 = vmatprep.subr.bf16.mxu0 0
        %1053 = vmatpush1.bf16.msra.mxu0 0
        %1054 = vmatprep.mubr.bf16.mxu0 0
        %1055 = vmatmul.mubr.bf16.gmra.mrb[0].mxu0 %v949
        %v1056 = vpop.f32.mrb[0].mxu0
        %v1057 = vadd.f32 %v972, %v1056
        %v1058 = vpop.f32.mrb[0].mxu0
        %v1059 = vpop.f32.mrb[0].mxu0
        %v1060 = vadd.f32 %v972, %v1059
        %v1061 = vpop.f32.mrb[0].mxu0
        %1062 = vmatprep.mubr.bf16.mxu0 0
        %1063 = vmatmul.mubr.bf16.gmra.mrb[0].mxu0 %v950
        %v1064 = vpop.f32.mrb[0].mxu0
        %v1065 = vadd.f32 %v972, %v1064
        %v1066 = vpop.f32.mrb[0].mxu0
        %v1067 = vpop.f32.mrb[0].mxu0
        %v1068 = vadd.f32 %v972, %v1067
        %v1069 = vpop.f32.mrb[0].mxu0
        %1070 = vdwg.mxu0
        %v1071 = vpack.c.bf16 %v812, %v809
        %v1072 = vpack.c.bf16 %v820, %v817
        %s1073 = scalar_lea.vmem %s493, 64
        %v1074 = vld [vmem:[%s1073] sm:$0xf]
        %v1075 = vld [vmem:[%s1073 + $0x4] sm:$0xf]
        %v1076 = vld [vmem:[%s1073 + $0x8] sm:$0xf]
        %v1077 = vld [vmem:[%s1073 + $0xc] sm:$0xf]
        %v1078 = vld [vmem:[%s1073 + $0x10] sm:$0xf]
        %v1079 = vld [vmem:[%s1073 + $0x14] sm:$0xf]
        %v1080 = vld [vmem:[%s1073 + $0x18] sm:$0xf]
        %v1081 = vld [vmem:[%s1073 + $0x1c] sm:$0xf]
        %v1082 = vld [vmem:[%s1073 + $0x20] sm:$0xf]
        %v1083 = vld [vmem:[%s1073 + $0x24] sm:$0xf]
        %v1084 = vld [vmem:[%s1073 + $0x28] sm:$0xf]
        %v1085 = vld [vmem:[%s1073 + $0x2c] sm:$0xf]
        %v1086 = vld [vmem:[%s1073 + $0x30] sm:$0xf]
        %v1087 = vld [vmem:[%s1073 + $0x34] sm:$0xf]
        %v1088 = vld [vmem:[%s1073 + $0x38] sm:$0xf]
        %v1089 = vld [vmem:[%s1073 + $0x3c] sm:$0xf]
        %s1090 = scalar_lea.vmem %s497, 1
        %v1091 = vld [vmem:[%s1090] sm:$0x1]
        %v1093 = vlaneseq
        %v1094 = vshrl.u32 %v1093, 7
        %v1095 = vsub.s32 0, %v1094
        %v1096 = vrot.slane %v1091, %v1095
        %v1114 = vunpack.c.l.b16 %v1074
        %v1115 = vunpack.c.l.b16 %v1075
        %v1116 = vunpack.c.l.b16 %v1076
        %v1117 = vunpack.c.l.b16 %v1077
        %v1118 = vunpack.c.l.b16 %v1078
        %v1119 = vunpack.c.l.b16 %v1079
        %v1120 = vunpack.c.l.b16 %v1080
        %v1121 = vunpack.c.l.b16 %v1081
        %v1122 = vunpack.c.l.b16 %v1082
        %v1123 = vunpack.c.l.b16 %v1083
        %v1124 = vunpack.c.l.b16 %v1084
        %v1125 = vunpack.c.l.b16 %v1085
        %v1126 = vunpack.c.l.b16 %v1086
        %v1127 = vunpack.c.l.b16 %v1087
        %v1128 = vunpack.c.l.b16 %v1088
        %v1129 = vunpack.c.l.b16 %v1089
        %v1130 = vpack.c.b16 %v1115, %v1114
        %v1131 = vpack.c.b16 %v1117, %v1116
        %v1132 = vpack.c.b16 %v1119, %v1118
        %v1133 = vpack.c.b16 %v1121, %v1120
        %v1134 = vpack.c.b16 %v1123, %v1122
        %v1135 = vpack.c.b16 %v1125, %v1124
        %v1136 = vpack.c.b16 %v1127, %v1126
        %v1137 = vpack.c.b16 %v1129, %v1128
        %1146 = vmatprep.subr.bf16.mxu0 0
        %1147 = vmatpush1.bf16.msra.mxu0 %v1130
        %1148 = vmatprep.subr.bf16.mxu0 0
        %1149 = vmatpush1.bf16.msra.mxu0 %v1131
        %1150 = vmatprep.subr.bf16.mxu0 0
        %1151 = vmatpush1.bf16.msra.mxu0 %v1132
        %1152 = vmatprep.subr.bf16.mxu0 0
        %1153 = vmatpush1.bf16.msra.mxu0 %v1133
        %1154 = vmatprep.subr.bf16.mxu0 0
        %1155 = vmatpush1.bf16.msra.mxu0 %v1134
        %1156 = vmatprep.subr.bf16.mxu0 0
        %1157 = vmatpush1.bf16.msra.mxu0 %v1135
        %1158 = vmatprep.subr.bf16.mxu0 0
        %1159 = vmatpush1.bf16.msra.mxu0 %v1136
        %1160 = vmatprep.subr.bf16.mxu0 0
        %1161 = vmatpush1.bf16.msra.mxu0 %v1137
        %1162 = vmatprep.subr.bf16.mxu0 0
        %1163 = vmatpush1.bf16.msra.mxu0 0
        %1164 = vmatprep.subr.bf16.mxu0 0
        %1165 = vmatpush1.bf16.msra.mxu0 0
        %1166 = vmatprep.subr.bf16.mxu0 0
        %1167 = vmatpush1.bf16.msra.mxu0 0
        %1168 = vmatprep.subr.bf16.mxu0 0
        %1169 = vmatpush1.bf16.msra.mxu0 0
        %1170 = vmatprep.subr.bf16.mxu0 0
        %1171 = vmatpush1.bf16.msra.mxu0 0
        %1172 = vmatprep.subr.bf16.mxu0 0
        %1173 = vmatpush1.bf16.msra.mxu0 0
        %1174 = vmatprep.subr.bf16.mxu0 0
        %1175 = vmatpush1.bf16.msra.mxu0 0
        %1176 = vmatprep.subr.bf16.mxu0 0
        %1177 = vmatpush1.bf16.msra.mxu0 0
        %1178 = vmatprep.mubr.bf16.mxu0 0
        %1179 = vmatmul.mubr.bf16.gmra.mrb[0].mxu0 %v1071
        %v1180 = vpop.f32.mrb[0].mxu0
        %v1181 = vadd.f32 %v1096, %v1180
        %v1182 = vpop.f32.mrb[0].mxu0
        %v1183 = vpop.f32.mrb[0].mxu0
        %v1184 = vadd.f32 %v1096, %v1183
        %v1185 = vpop.f32.mrb[0].mxu0
        %1186 = vmatprep.mubr.bf16.mxu0 0
        %1187 = vmatmul.mubr.bf16.gmra.mrb[0].mxu0 %v1072
        %v1188 = vpop.f32.mrb[0].mxu0
        %v1189 = vadd.f32 %v1096, %v1188
        %v1190 = vpop.f32.mrb[0].mxu0
        %v1191 = vpop.f32.mrb[0].mxu0
        %v1192 = vadd.f32 %v1096, %v1191
        %v1193 = vpop.f32.mrb[0].mxu0
        %1194 = vdwg.mxu0
        %v1195 = vmax.f32 %v1181, 0.0
        %v1196 = vmax.f32 %v1184, 0.0
        %v1197 = vmax.f32 %v1189, 0.0
        %v1198 = vmax.f32 %v1192, 0.0
        %v1199 = vpack.c.bf16 %v1196, %v1195
        %v1200 = vpack.c.bf16 %v1198, %v1197
        %s1201 = scalar_lea.vmem %s502, 64
        %v1202 = vld [vmem:[%s1201] sm:$0xf]
        %v1203 = vld [vmem:[%s1201 + $0x4] sm:$0xf]
        %v1204 = vld [vmem:[%s1201 + $0x8] sm:$0xf]
        %v1205 = vld [vmem:[%s1201 + $0xc] sm:$0xf]
        %v1206 = vld [vmem:[%s1201 + $0x10] sm:$0xf]
        %v1207 = vld [vmem:[%s1201 + $0x14] sm:$0xf]
        %v1208 = vld [vmem:[%s1201 + $0x18] sm:$0xf]
        %v1209 = vld [vmem:[%s1201 + $0x1c] sm:$0xf]
        %v1210 = vld [vmem:[%s1201 + $0x20] sm:$0xf]
        %v1211 = vld [vmem:[%s1201 + $0x24] sm:$0xf]
        %v1212 = vld [vmem:[%s1201 + $0x28] sm:$0xf]
        %v1213 = vld [vmem:[%s1201 + $0x2c] sm:$0xf]
        %v1214 = vld [vmem:[%s1201 + $0x30] sm:$0xf]
        %v1215 = vld [vmem:[%s1201 + $0x34] sm:$0xf]
        %v1216 = vld [vmem:[%s1201 + $0x38] sm:$0xf]
        %v1217 = vld [vmem:[%s1201 + $0x3c] sm:$0xf]
        %s1218 = scalar_lea.vmem %s506, 1
        %v1219 = vld [vmem:[%s1218] sm:$0x1]
        %v1221 = vlaneseq
        %v1222 = vshrl.u32 %v1221, 7
        %v1223 = vsub.s32 0, %v1222
        %v1224 = vrot.slane %v1219, %v1223
        %v1242 = vunpack.c.l.b16 %v1202
        %v1243 = vunpack.c.l.b16 %v1203
        %v1244 = vunpack.c.l.b16 %v1204
        %v1245 = vunpack.c.l.b16 %v1205
        %v1246 = vunpack.c.l.b16 %v1206
        %v1247 = vunpack.c.l.b16 %v1207
        %v1248 = vunpack.c.l.b16 %v1208
        %v1249 = vunpack.c.l.b16 %v1209
        %v1250 = vunpack.c.l.b16 %v1210
        %v1251 = vunpack.c.l.b16 %v1211
        %v1252 = vunpack.c.l.b16 %v1212
        %v1253 = vunpack.c.l.b16 %v1213
        %v1254 = vunpack.c.l.b16 %v1214
        %v1255 = vunpack.c.l.b16 %v1215
        %v1256 = vunpack.c.l.b16 %v1216
        %v1257 = vunpack.c.l.b16 %v1217
        %v1258 = vpack.c.b16 %v1243, %v1242
        %v1259 = vpack.c.b16 %v1245, %v1244
        %v1260 = vpack.c.b16 %v1247, %v1246
        %v1261 = vpack.c.b16 %v1249, %v1248
        %v1262 = vpack.c.b16 %v1251, %v1250
        %v1263 = vpack.c.b16 %v1253, %v1252
        %v1264 = vpack.c.b16 %v1255, %v1254
        %v1265 = vpack.c.b16 %v1257, %v1256
        %1274 = vmatprep.subr.bf16.mxu0 0
        %1275 = vmatpush1.bf16.msra.mxu0 %v1258
        %1276 = vmatprep.subr.bf16.mxu0 0
        %1277 = vmatpush1.bf16.msra.mxu0 %v1259
        %1278 = vmatprep.subr.bf16.mxu0 0
        %1279 = vmatpush1.bf16.msra.mxu0 %v1260
        %1280 = vmatprep.subr.bf16.mxu0 0
        %1281 = vmatpush1.bf16.msra.mxu0 %v1261
        %1282 = vmatprep.subr.bf16.mxu0 0
        %1283 = vmatpush1.bf16.msra.mxu0 %v1262
        %1284 = vmatprep.subr.bf16.mxu0 0
        %1285 = vmatpush1.bf16.msra.mxu0 %v1263
        %1286 = vmatprep.subr.bf16.mxu0 0
        %1287 = vmatpush1.bf16.msra.mxu0 %v1264
        %1288 = vmatprep.subr.bf16.mxu0 0
        %1289 = vmatpush1.bf16.msra.mxu0 %v1265
        %1290 = vmatprep.subr.bf16.mxu0 0
        %1291 = vmatpush1.bf16.msra.mxu0 0
        %1292 = vmatprep.subr.bf16.mxu0 0
        %1293 = vmatpush1.bf16.msra.mxu0 0
        %1294 = vmatprep.subr.bf16.mxu0 0
        %1295 = vmatpush1.bf16.msra.mxu0 0
        %1296 = vmatprep.subr.bf16.mxu0 0
        %1297 = vmatpush1.bf16.msra.mxu0 0
        %1298 = vmatprep.subr.bf16.mxu0 0
        %1299 = vmatpush1.bf16.msra.mxu0 0
        %1300 = vmatprep.subr.bf16.mxu0 0
        %1301 = vmatpush1.bf16.msra.mxu0 0
        %1302 = vmatprep.subr.bf16.mxu0 0
        %1303 = vmatpush1.bf16.msra.mxu0 0
        %1304 = vmatprep.subr.bf16.mxu0 0
        %1305 = vmatpush1.bf16.msra.mxu0 0
        %1306 = vmatprep.mubr.bf16.mxu0 0
        %1307 = vmatmul.mubr.bf16.gmra.mrb[0].mxu0 %v1199
        %v1308 = vpop.f32.mrb[0].mxu0
        %v1309 = vadd.f32 %v1224, %v1308
        %v1310 = vpop.f32.mrb[0].mxu0
        %v1311 = vpop.f32.mrb[0].mxu0
        %v1312 = vadd.f32 %v1224, %v1311
        %v1313 = vpop.f32.mrb[0].mxu0
        %1314 = vmatprep.mubr.bf16.mxu0 0
        %1315 = vmatmul.mubr.bf16.gmra.mrb[0].mxu0 %v1200
        %v1316 = vpop.f32.mrb[0].mxu0
        %v1317 = vadd.f32 %v1224, %v1316
        %v1318 = vpop.f32.mrb[0].mxu0
        %v1319 = vpop.f32.mrb[0].mxu0
        %v1320 = vadd.f32 %v1224, %v1319
        %v1321 = vpop.f32.mrb[0].mxu0
        %1322 = vdwg.mxu0
        %s1323 = scalar_lea.vmem %s493, 128
        %v1324 = vld [vmem:[%s1323] sm:$0xf]
        %v1325 = vld [vmem:[%s1323 + $0x4] sm:$0xf]
        %v1326 = vld [vmem:[%s1323 + $0x8] sm:$0xf]
        %v1327 = vld [vmem:[%s1323 + $0xc] sm:$0xf]
        %v1328 = vld [vmem:[%s1323 + $0x10] sm:$0xf]
        %v1329 = vld [vmem:[%s1323 + $0x14] sm:$0xf]
        %v1330 = vld [vmem:[%s1323 + $0x18] sm:$0xf]
        %v1331 = vld [vmem:[%s1323 + $0x1c] sm:$0xf]
        %v1332 = vld [vmem:[%s1323 + $0x20] sm:$0xf]
        %v1333 = vld [vmem:[%s1323 + $0x24] sm:$0xf]
        %v1334 = vld [vmem:[%s1323 + $0x28] sm:$0xf]
        %v1335 = vld [vmem:[%s1323 + $0x2c] sm:$0xf]
        %v1336 = vld [vmem:[%s1323 + $0x30] sm:$0xf]
        %v1337 = vld [vmem:[%s1323 + $0x34] sm:$0xf]
        %v1338 = vld [vmem:[%s1323 + $0x38] sm:$0xf]
        %v1339 = vld [vmem:[%s1323 + $0x3c] sm:$0xf]
        %s1340 = scalar_lea.vmem %s497, 2
        %v1341 = vld [vmem:[%s1340] sm:$0x1]
        %v1343 = vlaneseq
        %v1344 = vshrl.u32 %v1343, 7
        %v1345 = vsub.s32 0, %v1344
        %v1346 = vrot.slane %v1341, %v1345
        %v1364 = vunpack.c.l.b16 %v1324
        %v1365 = vunpack.c.l.b16 %v1325
        %v1366 = vunpack.c.l.b16 %v1326
        %v1367 = vunpack.c.l.b16 %v1327
        %v1368 = vunpack.c.l.b16 %v1328
        %v1369 = vunpack.c.l.b16 %v1329
        %v1370 = vunpack.c.l.b16 %v1330
        %v1371 = vunpack.c.l.b16 %v1331
        %v1372 = vunpack.c.l.b16 %v1332
        %v1373 = vunpack.c.l.b16 %v1333
        %v1374 = vunpack.c.l.b16 %v1334
        %v1375 = vunpack.c.l.b16 %v1335
        %v1376 = vunpack.c.l.b16 %v1336
        %v1377 = vunpack.c.l.b16 %v1337
        %v1378 = vunpack.c.l.b16 %v1338
        %v1379 = vunpack.c.l.b16 %v1339
        %v1380 = vpack.c.b16 %v1365, %v1364
        %v1381 = vpack.c.b16 %v1367, %v1366
        %v1382 = vpack.c.b16 %v1369, %v1368
        %v1383 = vpack.c.b16 %v1371, %v1370
        %v1384 = vpack.c.b16 %v1373, %v1372
        %v1385 = vpack.c.b16 %v1375, %v1374
        %v1386 = vpack.c.b16 %v1377, %v1376
        %v1387 = vpack.c.b16 %v1379, %v1378
        %1396 = vmatprep.subr.bf16.mxu0 0
        %1397 = vmatpush1.bf16.msra.mxu0 %v1380
        %1398 = vmatprep.subr.bf16.mxu0 0
        %1399 = vmatpush1.bf16.msra.mxu0 %v1381
        %1400 = vmatprep.subr.bf16.mxu0 0
        %1401 = vmatpush1.bf16.msra.mxu0 %v1382
        %1402 = vmatprep.subr.bf16.mxu0 0
        %1403 = vmatpush1.bf16.msra.mxu0 %v1383
        %1404 = vmatprep.subr.bf16.mxu0 0
        %1405 = vmatpush1.bf16.msra.mxu0 %v1384
        %1406 = vmatprep.subr.bf16.mxu0 0
        %1407 = vmatpush1.bf16.msra.mxu0 %v1385
        %1408 = vmatprep.subr.bf16.mxu0 0
        %1409 = vmatpush1.bf16.msra.mxu0 %v1386
        %1410 = vmatprep.subr.bf16.mxu0 0
        %1411 = vmatpush1.bf16.msra.mxu0 %v1387
        %1412 = vmatprep.subr.bf16.mxu0 0
        %1413 = vmatpush1.bf16.msra.mxu0 0
        %1414 = vmatprep.subr.bf16.mxu0 0
        %1415 = vmatpush1.bf16.msra.mxu0 0
        %1416 = vmatprep.subr.bf16.mxu0 0
        %1417 = vmatpush1.bf16.msra.mxu0 0
        %1418 = vmatprep.subr.bf16.mxu0 0
        %1419 = vmatpush1.bf16.msra.mxu0 0
        %1420 = vmatprep.subr.bf16.mxu0 0
        %1421 = vmatpush1.bf16.msra.mxu0 0
        %1422 = vmatprep.subr.bf16.mxu0 0
        %1423 = vmatpush1.bf16.msra.mxu0 0
        %1424 = vmatprep.subr.bf16.mxu0 0
        %1425 = vmatpush1.bf16.msra.mxu0 0
        %1426 = vmatprep.subr.bf16.mxu0 0
        %1427 = vmatpush1.bf16.msra.mxu0 0
        %1428 = vmatprep.mubr.bf16.mxu0 0
        %1429 = vmatmul.mubr.bf16.gmra.mrb[0].mxu0 %v739
        %v1430 = vpop.f32.mrb[0].mxu0
        %v1431 = vadd.f32 %v1346, %v1430
        %v1432 = vpop.f32.mrb[0].mxu0
        %v1433 = vpop.f32.mrb[0].mxu0
        %v1434 = vadd.f32 %v1346, %v1433
        %v1435 = vpop.f32.mrb[0].mxu0
        %1436 = vmatprep.mubr.bf16.mxu0 0
        %1437 = vmatmul.mubr.bf16.gmra.mrb[0].mxu0 %v740
        %v1438 = vpop.f32.mrb[0].mxu0
        %v1439 = vadd.f32 %v1346, %v1438
        %v1440 = vpop.f32.mrb[0].mxu0
        %v1441 = vpop.f32.mrb[0].mxu0
        %v1442 = vadd.f32 %v1346, %v1441
        %v1443 = vpop.f32.mrb[0].mxu0
        %1444 = vdwg.mxu0
        %v1445 = vmax.f32 %v1431, 0.0
        %v1446 = vmax.f32 %v1434, 0.0
        %v1447 = vmax.f32 %v1439, 0.0
        %v1448 = vmax.f32 %v1442, 0.0
        %v1449 = vpack.c.bf16 %v1446, %v1445
        %v1450 = vpack.c.bf16 %v1448, %v1447
        %s1451 = scalar_lea.vmem %s502, 128
        %v1452 = vld [vmem:[%s1451] sm:$0xf]
        %v1453 = vld [vmem:[%s1451 + $0x4] sm:$0xf]
        %v1454 = vld [vmem:[%s1451 + $0x8] sm:$0xf]
        %v1455 = vld [vmem:[%s1451 + $0xc] sm:$0xf]
        %v1456 = vld [vmem:[%s1451 + $0x10] sm:$0xf]
        %v1457 = vld [vmem:[%s1451 + $0x14] sm:$0xf]
        %v1458 = vld [vmem:[%s1451 + $0x18] sm:$0xf]
        %v1459 = vld [vmem:[%s1451 + $0x1c] sm:$0xf]
        %v1460 = vld [vmem:[%s1451 + $0x20] sm:$0xf]
        %v1461 = vld [vmem:[%s1451 + $0x24] sm:$0xf]
        %v1462 = vld [vmem:[%s1451 + $0x28] sm:$0xf]
        %v1463 = vld [vmem:[%s1451 + $0x2c] sm:$0xf]
        %v1464 = vld [vmem:[%s1451 + $0x30] sm:$0xf]
        %v1465 = vld [vmem:[%s1451 + $0x34] sm:$0xf]
        %v1466 = vld [vmem:[%s1451 + $0x38] sm:$0xf]
        %v1467 = vld [vmem:[%s1451 + $0x3c] sm:$0xf]
        %s1468 = scalar_lea.vmem %s506, 2
        %v1469 = vld [vmem:[%s1468] sm:$0x1]
        %v1471 = vlaneseq
        %v1472 = vshrl.u32 %v1471, 7
        %v1473 = vsub.s32 0, %v1472
        %v1474 = vrot.slane %v1469, %v1473
        %v1492 = vunpack.c.l.b16 %v1452
        %v1493 = vunpack.c.l.b16 %v1453
        %v1494 = vunpack.c.l.b16 %v1454
        %v1495 = vunpack.c.l.b16 %v1455
        %v1496 = vunpack.c.l.b16 %v1456
        %v1497 = vunpack.c.l.b16 %v1457
        %v1498 = vunpack.c.l.b16 %v1458
        %v1499 = vunpack.c.l.b16 %v1459
        %v1500 = vunpack.c.l.b16 %v1460
        %v1501 = vunpack.c.l.b16 %v1461
        %v1502 = vunpack.c.l.b16 %v1462
        %v1503 = vunpack.c.l.b16 %v1463
        %v1504 = vunpack.c.l.b16 %v1464
        %v1505 = vunpack.c.l.b16 %v1465
        %v1506 = vunpack.c.l.b16 %v1466
        %v1507 = vunpack.c.l.b16 %v1467
        %v1508 = vpack.c.b16 %v1493, %v1492
        %v1509 = vpack.c.b16 %v1495, %v1494
        %v1510 = vpack.c.b16 %v1497, %v1496
        %v1511 = vpack.c.b16 %v1499, %v1498
        %v1512 = vpack.c.b16 %v1501, %v1500
        %v1513 = vpack.c.b16 %v1503, %v1502
        %v1514 = vpack.c.b16 %v1505, %v1504
        %v1515 = vpack.c.b16 %v1507, %v1506
        %1524 = vmatprep.subr.bf16.mxu0 0
        %1525 = vmatpush1.bf16.msra.mxu0 %v1508
        %1526 = vmatprep.subr.bf16.mxu0 0
        %1527 = vmatpush1.bf16.msra.mxu0 %v1509
        %1528 = vmatprep.subr.bf16.mxu0 0
        %1529 = vmatpush1.bf16.msra.mxu0 %v1510
        %1530 = vmatprep.subr.bf16.mxu0 0
        %1531 = vmatpush1.bf16.msra.mxu0 %v1511
        %1532 = vmatprep.subr.bf16.mxu0 0
        %1533 = vmatpush1.bf16.msra.mxu0 %v1512
        %1534 = vmatprep.subr.bf16.mxu0 0
        %1535 = vmatpush1.bf16.msra.mxu0 %v1513
        %1536 = vmatprep.subr.bf16.mxu0 0
        %1537 = vmatpush1.bf16.msra.mxu0 %v1514
        %1538 = vmatprep.subr.bf16.mxu0 0
        %1539 = vmatpush1.bf16.msra.mxu0 %v1515
        %1540 = vmatprep.subr.bf16.mxu0 0
        %1541 = vmatpush1.bf16.msra.mxu0 0
        %1542 = vmatprep.subr.bf16.mxu0 0
        %1543 = vmatpush1.bf16.msra.mxu0 0
        %1544 = vmatprep.subr.bf16.mxu0 0
        %1545 = vmatpush1.bf16.msra.mxu0 0
        %1546 = vmatprep.subr.bf16.mxu0 0
        %1547 = vmatpush1.bf16.msra.mxu0 0
        %1548 = vmatprep.subr.bf16.mxu0 0
        %1549 = vmatpush1.bf16.msra.mxu0 0
        %1550 = vmatprep.subr.bf16.mxu0 0
        %1551 = vmatpush1.bf16.msra.mxu0 0
        %1552 = vmatprep.subr.bf16.mxu0 0
        %1553 = vmatpush1.bf16.msra.mxu0 0
        %1554 = vmatprep.subr.bf16.mxu0 0
        %1555 = vmatpush1.bf16.msra.mxu0 0
        %1556 = vmatprep.mubr.bf16.mxu0 0
        %1557 = vmatmul.mubr.bf16.gmra.mrb[0].mxu0 %v1449
        %v1558 = vpop.f32.mrb[0].mxu0
        %v1559 = vadd.f32 %v1474, %v1558
        %v1560 = vpop.f32.mrb[0].mxu0
        %v1561 = vpop.f32.mrb[0].mxu0
        %v1562 = vadd.f32 %v1474, %v1561
        %v1563 = vpop.f32.mrb[0].mxu0
        %1564 = vmatprep.mubr.bf16.mxu0 0
        %1565 = vmatmul.mubr.bf16.gmra.mrb[0].mxu0 %v1450
        %v1566 = vpop.f32.mrb[0].mxu0
        %v1567 = vadd.f32 %v1474, %v1566
        %v1568 = vpop.f32.mrb[0].mxu0
        %v1569 = vpop.f32.mrb[0].mxu0
        %v1570 = vadd.f32 %v1474, %v1569
        %v1571 = vpop.f32.mrb[0].mxu0
        %1572 = vdwg.mxu0
        %v1573 = vld [vmem:[%s509] sm:$0x1]
        %v1574 = vld [vmem:[%s512] sm:$0x1]
        %v1575 = vadd.f32 %v1309, %v1559
        %v1576 = vadd.f32 %v1312, %v1562
        %v1577 = vadd.f32 %v1317, %v1567
        %v1578 = vadd.f32 %v1320, %v1570
        %1579 = vadd.xlane.f32.xlu0 %v1575
        %v1580 = vpop.xlane.xlu0 %1579
        %1581 = vadd.xlane.f32.xlu0 %v1576
        %v1582 = vpop.xlane.xlu0 %1581
        %1583 = vadd.xlane.f32.xlu0 %v1577
        %v1584 = vpop.xlane.xlu0 %1583
        %1585 = vadd.xlane.f32.xlu0 %v1578
        %v1586 = vpop.xlane.xlu0 %1585
        %v1587 = vrcp.pop 128.0
        %v1588 = vmul.f32 %v1580, %v1587
        %v1589 = vmul.f32 %v1582, %v1587
        %v1590 = vmul.f32 %v1584, %v1587
        %v1591 = vmul.f32 %v1586, %v1587
        %v1592 = vsub.f32 %v1575, %v1588
        %v1593 = vsub.f32 %v1576, %v1589
        %v1594 = vsub.f32 %v1577, %v1590
        %v1595 = vsub.f32 %v1578, %v1591
        %v1596 = vmul.f32 %v1592, %v1592
        %v1597 = vmul.f32 %v1593, %v1593
        %v1598 = vmul.f32 %v1594, %v1594
        %v1599 = vmul.f32 %v1595, %v1595
        %1600 = vadd.xlane.f32.xlu0 %v1596
        %v1601 = vpop.xlane.xlu0 %1600
        %1602 = vadd.xlane.f32.xlu0 %v1597
        %v1603 = vpop.xlane.xlu0 %1602
        %1604 = vadd.xlane.f32.xlu0 %v1598
        %v1605 = vpop.xlane.xlu0 %1604
        %1606 = vadd.xlane.f32.xlu0 %v1599
        %v1607 = vpop.xlane.xlu0 %1606
        %v1608 = vmul.f32 %v1601, %v1587
        %v1609 = vmul.f32 %v1603, %v1587
        %v1610 = vmul.f32 %v1605, %v1587
        %v1611 = vmul.f32 %v1607, %v1587
        %v1612 = vadd.f32 %v1608, 1e-05
        %v1613 = vadd.f32 %v1609, 1e-05
        %v1614 = vadd.f32 %v1610, 1e-05
        %v1615 = vadd.f32 %v1611, 1e-05
        %v1616 = vrsqrt.pop %v1612
        %v1617 = vrsqrt.pop %v1613
        %v1618 = vrsqrt.pop %v1614
        %v1619 = vrsqrt.pop %v1615
        %v1620 = vmul.f32 %v1592, %v1616
        %v1621 = vmul.f32 %v1593, %v1617
        %v1622 = vmul.f32 %v1594, %v1618
        %v1623 = vmul.f32 %v1595, %v1619
        %v1625 = vlaneseq
        %v1626 = vshrl.u32 %v1625, 7
        %v1627 = vsub.s32 0, %v1626
        %v1628 = vrot.slane %v1573, %v1627
        %v1630 = vmul.f32 %v1620, %v1628
        %v1631 = vmul.f32 %v1621, %v1628
        %v1632 = vmul.f32 %v1622, %v1628
        %v1633 = vmul.f32 %v1623, %v1628
        %v1635 = vlaneseq
        %v1636 = vshrl.u32 %v1635, 7
        %v1637 = vsub.s32 0, %v1636
        %v1638 = vrot.slane %v1574, %v1637
        %v1640 = vadd.f32 %v1630, %v1638
        %v1641 = vadd.f32 %v1631, %v1638
        %v1642 = vadd.f32 %v1632, %v1638
        %v1643 = vadd.f32 %v1633, %v1638
        %v1644 = vadd.f32 %v1057, %v1559
        %v1645 = vadd.f32 %v1060, %v1562
        %v1646 = vadd.f32 %v1065, %v1567
        %v1647 = vadd.f32 %v1068, %v1570
        %1648 = vadd.xlane.f32.xlu0 %v1644
        %v1649 = vpop.xlane.xlu0 %1648
        %1650 = vadd.xlane.f32.xlu0 %v1645
        %v1651 = vpop.xlane.xlu0 %1650
        %1652 = vadd.xlane.f32.xlu0 %v1646
        %v1653 = vpop.xlane.xlu0 %1652
        %1654 = vadd.xlane.f32.xlu0 %v1647
        %v1655 = vpop.xlane.xlu0 %1654
        %v1656 = vmul.f32 %v1649, %v1587
        %v1657 = vmul.f32 %v1651, %v1587
        %v1658 = vmul.f32 %v1653, %v1587
        %v1659 = vmul.f32 %v1655, %v1587
        %v1660 = vsub.f32 %v1644, %v1656
        %v1661 = vsub.f32 %v1645, %v1657
        %v1662 = vsub.f32 %v1646, %v1658
        %v1663 = vsub.f32 %v1647, %v1659
        %v1664 = vmul.f32 %v1660, %v1660
        %v1665 = vmul.f32 %v1661, %v1661
        %v1666 = vmul.f32 %v1662, %v1662
        %v1667 = vmul.f32 %v1663, %v1663
        %1668 = vadd.xlane.f32.xlu0 %v1664
        %v1669 = vpop.xlane.xlu0 %1668
        %1670 = vadd.xlane.f32.xlu0 %v1665
        %v1671 = vpop.xlane.xlu0 %1670
        %1672 = vadd.xlane.f32.xlu0 %v1666
        %v1673 = vpop.xlane.xlu0 %1672
        %1674 = vadd.xlane.f32.xlu0 %v1667
        %v1675 = vpop.xlane.xlu0 %1674
        %v1676 = vmul.f32 %v1669, %v1587
        %v1677 = vmul.f32 %v1671, %v1587
        %v1678 = vmul.f32 %v1673, %v1587
        %v1679 = vmul.f32 %v1675, %v1587
        %v1680 = vadd.f32 %v1676, 1e-05
        %v1681 = vadd.f32 %v1677, 1e-05
        %v1682 = vadd.f32 %v1678, 1e-05
        %v1683 = vadd.f32 %v1679, 1e-05
        %v1684 = vrsqrt.pop %v1680
        %v1685 = vrsqrt.pop %v1681
        %v1686 = vrsqrt.pop %v1682
        %v1687 = vrsqrt.pop %v1683
        %v1688 = vmul.f32 %v1660, %v1684
        %v1689 = vmul.f32 %v1661, %v1685
        %v1690 = vmul.f32 %v1662, %v1686
        %v1691 = vmul.f32 %v1663, %v1687
        %v1692 = vmul.f32 %v1688, %v1628
        %v1693 = vmul.f32 %v1689, %v1628
        %v1694 = vmul.f32 %v1690, %v1628
        %v1695 = vmul.f32 %v1691, %v1628
        %v1696 = vadd.f32 %v1692, %v1638
        %v1697 = vadd.f32 %v1693, %v1638
        %v1698 = vadd.f32 %v1694, %v1638
        %v1699 = vadd.f32 %v1695, %v1638
        %v1700 = vadd.f32 %v1057, %v1309
        %v1701 = vadd.f32 %v1060, %v1312
        %v1702 = vadd.f32 %v1065, %v1317
        %v1703 = vadd.f32 %v1068, %v1320
        %1704 = vadd.xlane.f32.xlu0 %v1700
        %v1705 = vpop.xlane.xlu0 %1704
        %1706 = vadd.xlane.f32.xlu0 %v1701
        %v1707 = vpop.xlane.xlu0 %1706
        %1708 = vadd.xlane.f32.xlu0 %v1702
        %v1709 = vpop.xlane.xlu0 %1708
        %1710 = vadd.xlane.f32.xlu0 %v1703
        %v1711 = vpop.xlane.xlu0 %1710
        %v1712 = vmul.f32 %v1705, %v1587
        %v1713 = vmul.f32 %v1707, %v1587
        %v1714 = vmul.f32 %v1709, %v1587
        %v1715 = vmul.f32 %v1711, %v1587
        %v1716 = vsub.f32 %v1700, %v1712
        %v1717 = vsub.f32 %v1701, %v1713
        %v1718 = vsub.f32 %v1702, %v1714
        %v1719 = vsub.f32 %v1703, %v1715
        %v1720 = vmul.f32 %v1716, %v1716
        %v1721 = vmul.f32 %v1717, %v1717
        %v1722 = vmul.f32 %v1718, %v1718
        %v1723 = vmul.f32 %v1719, %v1719
        %1724 = vadd.xlane.f32.xlu0 %v1720
        %v1725 = vpop.xlane.xlu0 %1724
        %1726 = vadd.xlane.f32.xlu0 %v1721
        %v1727 = vpop.xlane.xlu0 %1726
        %1728 = vadd.xlane.f32.xlu0 %v1722
        %v1729 = vpop.xlane.xlu0 %1728
        %1730 = vadd.xlane.f32.xlu0 %v1723
        %v1731 = vpop.xlane.xlu0 %1730
        %v1732 = vmul.f32 %v1725, %v1587
        %v1733 = vmul.f32 %v1727, %v1587
        %v1734 = vmul.f32 %v1729, %v1587
        %v1735 = vmul.f32 %v1731, %v1587
        %v1736 = vadd.f32 %v1732, 1e-05
        %v1737 = vadd.f32 %v1733, 1e-05
        %v1738 = vadd.f32 %v1734, 1e-05
        %v1739 = vadd.f32 %v1735, 1e-05
        %v1740 = vrsqrt.pop %v1736
        %v1741 = vrsqrt.pop %v1737
        %v1742 = vrsqrt.pop %v1738
        %v1743 = vrsqrt.pop %v1739
        %v1744 = vmul.f32 %v1716, %v1740
        %v1745 = vmul.f32 %v1717, %v1741
        %v1746 = vmul.f32 %v1718, %v1742
        %v1747 = vmul.f32 %v1719, %v1743
        %v1748 = vmul.f32 %v1744, %v1628
        %v1749 = vmul.f32 %v1745, %v1628
        %v1750 = vmul.f32 %v1746, %v1628
        %v1751 = vmul.f32 %v1747, %v1628
        %v1752 = vadd.f32 %v1748, %v1638
        %v1753 = vadd.f32 %v1749, %v1638
        %v1754 = vadd.f32 %v1750, %v1638
        %v1755 = vadd.f32 %v1751, %v1638
        %v1756 = vpack.c.bf16 %v1641, %v1640
        %v1757 = vpack.c.bf16 %v1643, %v1642
        %v1758 = vpack.c.bf16 %v1697, %v1696
        %v1759 = vpack.c.bf16 %v1699, %v1698
        %v1760 = vld [vmem:[#allocation7] sm:$0xff]
        %vm1761 = vcmask 523264
        %v1763 = vsel %vm1761, %v1760, 0
        %1765 = vmatprep.subr.bf16.mxu0 0
        %1766 = vmatpush1.bf16.msra.mxu0 %v1756
        %1767 = vmatprep.subr.bf16.mxu0 0
        %1768 = vmatpush1.bf16.msra.mxu0 %v1757
        %1769 = vmatprep.subr.bf16.mxu0 0
        %1770 = vmatpush1.bf16.msra.mxu0 %v1758
        %1771 = vmatprep.subr.bf16.mxu0 0
        %1772 = vmatpush1.bf16.msra.mxu0 %v1759
        %1773 = vmatprep.subr.bf16.mxu0 0
        %1774 = vmatpush1.bf16.msra.mxu0 0
        %1775 = vmatprep.subr.bf16.mxu0 0
        %1776 = vmatpush1.bf16.msra.mxu0 0
        %1777 = vmatprep.subr.bf16.mxu0 0
        %1778 = vmatpush1.bf16.msra.mxu0 0
        %1779 = vmatprep.subr.bf16.mxu0 0
        %1780 = vmatpush1.bf16.msra.mxu0 0
        %1781 = vmatprep.subr.bf16.mxu0 0
        %1782 = vmatpush1.bf16.msra.mxu0 0
        %1783 = vmatprep.subr.bf16.mxu0 0
        %1784 = vmatpush1.bf16.msra.mxu0 0
        %1785 = vmatprep.subr.bf16.mxu0 0
        %1786 = vmatpush1.bf16.msra.mxu0 0
        %1787 = vmatprep.subr.bf16.mxu0 0
        %1788 = vmatpush1.bf16.msra.mxu0 0
        %1789 = vmatprep.subr.bf16.mxu0 0
        %1790 = vmatpush1.bf16.msra.mxu0 0
        %1791 = vmatprep.subr.bf16.mxu0 0
        %1792 = vmatpush1.bf16.msra.mxu0 0
        %1793 = vmatprep.subr.bf16.mxu0 0
        %1794 = vmatpush1.bf16.msra.mxu0 0
        %1795 = vmatprep.subr.bf16.mxu0 0
        %1796 = vmatpush1.bf16.msra.mxu0 0
        %1797 = vmatprep.mubr.bf16.mxu0 0
        %1798 = vmatmul.mubr.bf16.gmra.mrb[0].mxu0 %v1763
        %v1799 = vpop.f32.mrb[0].mxu0
        %v1800 = vadd.f32 0.0, %v1799
        %v1801 = vpop.f32.mrb[0].mxu0
        %v1802 = vpop.f32.mrb[0].mxu0
        %v1803 = vadd.f32 0.0, %v1802
        %v1804 = vpop.f32.mrb[0].mxu0
        %1805 = vdwg.mxu0
        %v1806 = vld [vmem:[%s4] sm:$0xff]
        %v1807 = vld [vmem:[%s4 + $0x8] sm:$0xff]
        %1809 = vset.pattern.permute.xlu0 0
        %1810 = vperm.xlu0 %1809, %v1806
        %v1811 = vpop.permute.xlu0 %1810
        %1814 = vset.pattern.permute.xlu0 0
        %1815 = vperm.xlu0 %1814, %v1807
        %v1816 = vpop.permute.xlu0 %1815
        %v1818 = vmul.f32 %v1800, %v1811
        %v1819 = vmul.f32 %v1803, %v1816
        %v1820 = vpack.c.bf16 %v1819, %v1818
        %v1821 = vld [vmem:[%s517] sm:$0xff]
        %v1822 = vld [vmem:[%s517 + $0x8] sm:$0xff]
        %v1823 = vld [vmem:[%s517 + $0x10] sm:$0xff]
        %v1824 = vld [vmem:[%s517 + $0x18] sm:$0xff]
        %v1825 = vld [vmem:[%s517 + $0x20] sm:$0xff]
        %v1826 = vld [vmem:[%s517 + $0x28] sm:$0xff]
        %v1827 = vld [vmem:[%s517 + $0x30] sm:$0xff]
        %v1828 = vld [vmem:[%s517 + $0x38] sm:$0xff]
        %v1829 = vld [vmem:[%s517 + $0x40] sm:$0xff]
        %v1830 = vld [vmem:[%s517 + $0x48] sm:$0xff]
        %v1831 = vld [vmem:[%s517 + $0x50] sm:$0xff]
        %v1832 = vld [vmem:[%s517 + $0x58] sm:$0xff]
        %v1833 = vld [vmem:[%s517 + $0x60] sm:$0xff]
        %v1834 = vld [vmem:[%s517 + $0x68] sm:$0xff]
        %v1835 = vld [vmem:[%s517 + $0x70] sm:$0xff]
        %v1836 = vld [vmem:[%s517 + $0x78] sm:$0xff]
        %v1837 = vld [vmem:[%s517 + $0x80] sm:$0xff]
        %v1838 = vld [vmem:[%s517 + $0x88] sm:$0xff]
        %v1839 = vld [vmem:[%s517 + $0x90] sm:$0xff]
        %v1840 = vld [vmem:[%s517 + $0x98] sm:$0xff]
        %v1841 = vld [vmem:[%s517 + $0xa0] sm:$0xff]
        %v1842 = vld [vmem:[%s517 + $0xa8] sm:$0xff]
        %v1843 = vld [vmem:[%s517 + $0xb0] sm:$0xff]
        %v1844 = vld [vmem:[%s517 + $0xb8] sm:$0xff]
        %v1845 = vld [vmem:[%s517 + $0xc0] sm:$0xff]
        %v1846 = vld [vmem:[%s517 + $0xc8] sm:$0xff]
        %v1847 = vld [vmem:[%s517 + $0xd0] sm:$0xff]
        %v1848 = vld [vmem:[%s517 + $0xd8] sm:$0xff]
        %v1849 = vld [vmem:[%s517 + $0xe0] sm:$0xff]
        %v1850 = vld [vmem:[%s517 + $0xe8] sm:$0xff]
        %v1851 = vld [vmem:[%s517 + $0xf0] sm:$0xff]
        %v1852 = vld [vmem:[%s517 + $0xf8] sm:$0xff]
        %v1853 = vld [vmem:[%s517 + $0x100] sm:$0xff]
        %v1854 = vld [vmem:[%s517 + $0x108] sm:$0xff]
        %v1855 = vld [vmem:[%s517 + $0x110] sm:$0xff]
        %v1856 = vld [vmem:[%s517 + $0x118] sm:$0xff]
        %v1857 = vld [vmem:[%s517 + $0x120] sm:$0xff]
        %v1858 = vld [vmem:[%s517 + $0x128] sm:$0xff]
        %v1859 = vld [vmem:[%s517 + $0x130] sm:$0xff]
        %v1860 = vld [vmem:[%s517 + $0x138] sm:$0xff]
        %v1861 = vld [vmem:[%s517 + $0x140] sm:$0xff]
        %v1862 = vld [vmem:[%s517 + $0x148] sm:$0xff]
        %v1863 = vld [vmem:[%s517 + $0x150] sm:$0xff]
        %v1864 = vld [vmem:[%s517 + $0x158] sm:$0xff]
        %v1865 = vld [vmem:[%s517 + $0x160] sm:$0xff]
        %v1866 = vld [vmem:[%s517 + $0x168] sm:$0xff]
        %v1867 = vld [vmem:[%s517 + $0x170] sm:$0xff]
        %v1868 = vld [vmem:[%s517 + $0x178] sm:$0xff]
        %v1869 = vld [vmem:[%s517 + $0x180] sm:$0xff]
        %v1870 = vld [vmem:[%s517 + $0x188] sm:$0xff]
        %v1871 = vld [vmem:[%s517 + $0x190] sm:$0xff]
        %v1872 = vld [vmem:[%s517 + $0x198] sm:$0xff]
        %v1873 = vld [vmem:[%s517 + $0x1a0] sm:$0xff]
        %v1874 = vld [vmem:[%s517 + $0x1a8] sm:$0xff]
        %v1875 = vld [vmem:[%s517 + $0x1b0] sm:$0xff]
        %v1876 = vld [vmem:[%s517 + $0x1b8] sm:$0xff]
        %v1877 = vld [vmem:[%s517 + $0x1c0] sm:$0xff]
        %v1878 = vld [vmem:[%s517 + $0x1c8] sm:$0xff]
        %v1879 = vld [vmem:[%s517 + $0x1d0] sm:$0xff]
        %v1880 = vld [vmem:[%s517 + $0x1d8] sm:$0xff]
        %v1881 = vld [vmem:[%s517 + $0x1e0] sm:$0xff]
        %v1882 = vld [vmem:[%s517 + $0x1e8] sm:$0xff]
        %v1883 = vld [vmem:[%s517 + $0x1f0] sm:$0xff]
        %v1884 = vld [vmem:[%s517 + $0x1f8] sm:$0xff]
        %v1885 = vld [vmem:[%s521] sm:$0xf]
        %v1887 = vlaneseq
        %v1888 = vshrl.u32 %v1887, 7
        %v1889 = vsub.s32 0, %v1888
        %v1890 = vrot.slane %v1885, %v1889
        %v1891 = vlaneseq
        %v1892 = vshrl.u32 %v1891, 7
        %v1893 = vsub.s32 1, %v1892
        %v1894 = vrot.slane %v1885, %v1893
        %v1895 = vlaneseq
        %v1896 = vshrl.u32 %v1895, 7
        %v1897 = vsub.s32 2, %v1896
        %v1898 = vrot.slane %v1885, %v1897
        %v1899 = vlaneseq
        %v1900 = vshrl.u32 %v1899, 7
        %v1901 = vsub.s32 3, %v1900
        %v1902 = vrot.slane %v1885, %v1901
        %v1971 = vunpack.c.l.b16 %v1821
        %v1972 = vunpack.c.h.b16 %v1821
        %v1973 = vunpack.c.l.b16 %v1822
        %v1974 = vunpack.c.h.b16 %v1822
        %v1975 = vunpack.c.l.b16 %v1823
        %v1976 = vunpack.c.h.b16 %v1823
        %v1977 = vunpack.c.l.b16 %v1824
        %v1978 = vunpack.c.h.b16 %v1824
        %v1979 = vunpack.c.l.b16 %v1825
        %v1980 = vunpack.c.h.b16 %v1825
        %v1981 = vunpack.c.l.b16 %v1826
        %v1982 = vunpack.c.h.b16 %v1826
        %v1983 = vunpack.c.l.b16 %v1827
        %v1984 = vunpack.c.h.b16 %v1827
        %v1985 = vunpack.c.l.b16 %v1828
        %v1986 = vunpack.c.h.b16 %v1828
        %v1987 = vunpack.c.l.b16 %v1829
        %v1988 = vunpack.c.h.b16 %v1829
        %v1989 = vunpack.c.l.b16 %v1830
        %v1990 = vunpack.c.h.b16 %v1830
        %v1991 = vunpack.c.l.b16 %v1831
        %v1992 = vunpack.c.h.b16 %v1831
        %v1993 = vunpack.c.l.b16 %v1832
        %v1994 = vunpack.c.h.b16 %v1832
        %v1995 = vunpack.c.l.b16 %v1833
        %v1996 = vunpack.c.h.b16 %v1833
        %v1997 = vunpack.c.l.b16 %v1834
        %v1998 = vunpack.c.h.b16 %v1834
        %v1999 = vunpack.c.l.b16 %v1835
        %v2000 = vunpack.c.h.b16 %v1835
        %v2001 = vunpack.c.l.b16 %v1836
        %v2002 = vunpack.c.h.b16 %v1836
        %v2003 = vunpack.c.l.b16 %v1837
        %v2004 = vunpack.c.h.b16 %v1837
        %v2005 = vunpack.c.l.b16 %v1838
        %v2006 = vunpack.c.h.b16 %v1838
        %v2007 = vunpack.c.l.b16 %v1839
        %v2008 = vunpack.c.h.b16 %v1839
        %v2009 = vunpack.c.l.b16 %v1840
        %v2010 = vunpack.c.h.b16 %v1840
        %v2011 = vunpack.c.l.b16 %v1841
        %v2012 = vunpack.c.h.b16 %v1841
        %v2013 = vunpack.c.l.b16 %v1842
        %v2014 = vunpack.c.h.b16 %v1842
        %v2015 = vunpack.c.l.b16 %v1843
        %v2016 = vunpack.c.h.b16 %v1843
        %v2017 = vunpack.c.l.b16 %v1844
        %v2018 = vunpack.c.h.b16 %v1844
        %v2019 = vunpack.c.l.b16 %v1845
        %v2020 = vunpack.c.h.b16 %v1845
        %v2021 = vunpack.c.l.b16 %v1846
        %v2022 = vunpack.c.h.b16 %v1846
        %v2023 = vunpack.c.l.b16 %v1847
        %v2024 = vunpack.c.h.b16 %v1847
        %v2025 = vunpack.c.l.b16 %v1848
        %v2026 = vunpack.c.h.b16 %v1848
        %v2027 = vunpack.c.l.b16 %v1849
        %v2028 = vunpack.c.h.b16 %v1849
        %v2029 = vunpack.c.l.b16 %v1850
        %v2030 = vunpack.c.h.b16 %v1850
        %v2031 = vunpack.c.l.b16 %v1851
        %v2032 = vunpack.c.h.b16 %v1851
        %v2033 = vunpack.c.l.b16 %v1852
        %v2034 = vunpack.c.h.b16 %v1852
        %v2035 = vunpack.c.l.b16 %v1853
        %v2036 = vunpack.c.h.b16 %v1853
        %v2037 = vunpack.c.l.b16 %v1854
        %v2038 = vunpack.c.h.b16 %v1854
        %v2039 = vunpack.c.l.b16 %v1855
        %v2040 = vunpack.c.h.b16 %v1855
        %v2041 = vunpack.c.l.b16 %v1856
        %v2042 = vunpack.c.h.b16 %v1856
        %v2043 = vunpack.c.l.b16 %v1857
        %v2044 = vunpack.c.h.b16 %v1857
        %v2045 = vunpack.c.l.b16 %v1858
        %v2046 = vunpack.c.h.b16 %v1858
        %v2047 = vunpack.c.l.b16 %v1859
        %v2048 = vunpack.c.h.b16 %v1859
        %v2049 = vunpack.c.l.b16 %v1860
        %v2050 = vunpack.c.h.b16 %v1860
        %v2051 = vunpack.c.l.b16 %v1861
        %v2052 = vunpack.c.h.b16 %v1861
        %v2053 = vunpack.c.l.b16 %v1862
        %v2054 = vunpack.c.h.b16 %v1862
        %v2055 = vunpack.c.l.b16 %v1863
        %v2056 = vunpack.c.h.b16 %v1863
        %v2057 = vunpack.c.l.b16 %v1864
        %v2058 = vunpack.c.h.b16 %v1864
        %v2059 = vunpack.c.l.b16 %v1865
        %v2060 = vunpack.c.h.b16 %v1865
        %v2061 = vunpack.c.l.b16 %v1866
        %v2062 = vunpack.c.h.b16 %v1866
        %v2063 = vunpack.c.l.b16 %v1867
        %v2064 = vunpack.c.h.b16 %v1867
        %v2065 = vunpack.c.l.b16 %v1868
        %v2066 = vunpack.c.h.b16 %v1868
        %v2067 = vunpack.c.l.b16 %v1869
        %v2068 = vunpack.c.h.b16 %v1869
        %v2069 = vunpack.c.l.b16 %v1870
        %v2070 = vunpack.c.h.b16 %v1870
        %v2071 = vunpack.c.l.b16 %v1871
        %v2072 = vunpack.c.h.b16 %v1871
        %v2073 = vunpack.c.l.b16 %v1872
        %v2074 = vunpack.c.h.b16 %v1872
        %v2075 = vunpack.c.l.b16 %v1873
        %v2076 = vunpack.c.h.b16 %v1873
        %v2077 = vunpack.c.l.b16 %v1874
        %v2078 = vunpack.c.h.b16 %v1874
        %v2079 = vunpack.c.l.b16 %v1875
        %v2080 = vunpack.c.h.b16 %v1875
        %v2081 = vunpack.c.l.b16 %v1876
        %v2082 = vunpack.c.h.b16 %v1876
        %v2083 = vunpack.c.l.b16 %v1877
        %v2084 = vunpack.c.h.b16 %v1877
        %v2085 = vunpack.c.l.b16 %v1878
        %v2086 = vunpack.c.h.b16 %v1878
        %v2087 = vunpack.c.l.b16 %v1879
        %v2088 = vunpack.c.h.b16 %v1879
        %v2089 = vunpack.c.l.b16 %v1880
        %v2090 = vunpack.c.h.b16 %v1880
        %v2091 = vunpack.c.l.b16 %v1881
        %v2092 = vunpack.c.h.b16 %v1881
        %v2093 = vunpack.c.l.b16 %v1882
        %v2094 = vunpack.c.h.b16 %v1882
        %v2095 = vunpack.c.l.b16 %v1883
        %v2096 = vunpack.c.h.b16 %v1883
        %v2097 = vunpack.c.l.b16 %v1884
        %v2098 = vunpack.c.h.b16 %v1884
        %v2099 = vpack.c.b16 %v1975, %v1971
        %v2100 = vpack.c.b16 %v1976, %v1972
        %v2101 = vpack.c.b16 %v1977, %v1973
        %v2102 = vpack.c.b16 %v1978, %v1974
        %v2103 = vpack.c.b16 %v1983, %v1979
        %v2104 = vpack.c.b16 %v1984, %v1980
        %v2105 = vpack.c.b16 %v1985, %v1981
        %v2106 = vpack.c.b16 %v1986, %v1982
        %v2107 = vpack.c.b16 %v1991, %v1987
        %v2108 = vpack.c.b16 %v1992, %v1988
        %v2109 = vpack.c.b16 %v1993, %v1989
        %v2110 = vpack.c.b16 %v1994, %v1990
        %v2111 = vpack.c.b16 %v1999, %v1995
        %v2112 = vpack.c.b16 %v2000, %v1996
        %v2113 = vpack.c.b16 %v2001, %v1997
        %v2114 = vpack.c.b16 %v2002, %v1998
        %v2115 = vpack.c.b16 %v2007, %v2003
        %v2116 = vpack.c.b16 %v2008, %v2004
        %v2117 = vpack.c.b16 %v2009, %v2005
        %v2118 = vpack.c.b16 %v2010, %v2006
        %v2119 = vpack.c.b16 %v2015, %v2011
        %v2120 = vpack.c.b16 %v2016, %v2012
        %v2121 = vpack.c.b16 %v2017, %v2013
        %v2122 = vpack.c.b16 %v2018, %v2014
        %v2123 = vpack.c.b16 %v2023, %v2019
        %v2124 = vpack.c.b16 %v2024, %v2020
        %v2125 = vpack.c.b16 %v2025, %v2021
        %v2126 = vpack.c.b16 %v2026, %v2022
        %v2127 = vpack.c.b16 %v2031, %v2027
        %v2128 = vpack.c.b16 %v2032, %v2028
        %v2129 = vpack.c.b16 %v2033, %v2029
        %v2130 = vpack.c.b16 %v2034, %v2030
        %v2131 = vpack.c.b16 %v2039, %v2035
        %v2132 = vpack.c.b16 %v2040, %v2036
        %v2133 = vpack.c.b16 %v2041, %v2037
        %v2134 = vpack.c.b16 %v2042, %v2038
        %v2135 = vpack.c.b16 %v2047, %v2043
        %v2136 = vpack.c.b16 %v2048, %v2044
        %v2137 = vpack.c.b16 %v2049, %v2045
        %v2138 = vpack.c.b16 %v2050, %v2046
        %v2139 = vpack.c.b16 %v2055, %v2051
        %v2140 = vpack.c.b16 %v2056, %v2052
        %v2141 = vpack.c.b16 %v2057, %v2053
        %v2142 = vpack.c.b16 %v2058, %v2054
        %v2143 = vpack.c.b16 %v2063, %v2059
        %v2144 = vpack.c.b16 %v2064, %v2060
        %v2145 = vpack.c.b16 %v2065, %v2061
        %v2146 = vpack.c.b16 %v2066, %v2062
        %v2147 = vpack.c.b16 %v2071, %v2067
        %v2148 = vpack.c.b16 %v2072, %v2068
        %v2149 = vpack.c.b16 %v2073, %v2069
        %v2150 = vpack.c.b16 %v2074, %v2070
        %v2151 = vpack.c.b16 %v2079, %v2075
        %v2152 = vpack.c.b16 %v2080, %v2076
        %v2153 = vpack.c.b16 %v2081, %v2077
        %v2154 = vpack.c.b16 %v2082, %v2078
        %v2155 = vpack.c.b16 %v2087, %v2083
        %v2156 = vpack.c.b16 %v2088, %v2084
        %v2157 = vpack.c.b16 %v2089, %v2085
        %v2158 = vpack.c.b16 %v2090, %v2086
        %v2159 = vpack.c.b16 %v2095, %v2091
        %v2160 = vpack.c.b16 %v2096, %v2092
        %v2161 = vpack.c.b16 %v2097, %v2093
        %v2162 = vpack.c.b16 %v2098, %v2094
        %2227 = vmatprep.subr.bf16.mxu0 %v2100
        %2228 = vmatpush1.bf16.msra.mxu0 %v2099
        %2229 = vmatprep.subr.bf16.mxu0 %v2104
        %2230 = vmatpush1.bf16.msra.mxu0 %v2103
        %2231 = vmatprep.subr.bf16.mxu0 %v2108
        %2232 = vmatpush1.bf16.msra.mxu0 %v2107
        %2233 = vmatprep.subr.bf16.mxu0 %v2112
        %2234 = vmatpush1.bf16.msra.mxu0 %v2111
        %2235 = vmatprep.subr.bf16.mxu0 %v2116
        %2236 = vmatpush1.bf16.msra.mxu0 %v2115
        %2237 = vmatprep.subr.bf16.mxu0 %v2120
        %2238 = vmatpush1.bf16.msra.mxu0 %v2119
        %2239 = vmatprep.subr.bf16.mxu0 %v2124
        %2240 = vmatpush1.bf16.msra.mxu0 %v2123
        %2241 = vmatprep.subr.bf16.mxu0 %v2128
        %2242 = vmatpush1.bf16.msra.mxu0 %v2127
        %2243 = vmatprep.subr.bf16.mxu0 %v2132
        %2244 = vmatpush1.bf16.msra.mxu0 %v2131
        %2245 = vmatprep.subr.bf16.mxu0 %v2136
        %2246 = vmatpush1.bf16.msra.mxu0 %v2135
        %2247 = vmatprep.subr.bf16.mxu0 %v2140
        %2248 = vmatpush1.bf16.msra.mxu0 %v2139
        %2249 = vmatprep.subr.bf16.mxu0 %v2144
        %2250 = vmatpush1.bf16.msra.mxu0 %v2143
        %2251 = vmatprep.subr.bf16.mxu0 %v2148
        %2252 = vmatpush1.bf16.msra.mxu0 %v2147
        %2253 = vmatprep.subr.bf16.mxu0 %v2152
        %2254 = vmatpush1.bf16.msra.mxu0 %v2151
        %2255 = vmatprep.subr.bf16.mxu0 %v2156
        %2256 = vmatpush1.bf16.msra.mxu0 %v2155
        %2257 = vmatprep.subr.bf16.mxu0 %v2160
        %2258 = vmatpush1.bf16.msra.mxu0 %v2159
        %2259 = vmatprep.mubr.bf16.mxu0 %v738
        %2260 = vmatmul.mubr.bf16.gmra.mrb[0].mxu0 %v1820
        %v2261 = vpop.f32.mrb[0].mxu0
        %v2262 = vadd.f32 %v1890, %v2261
        %v2263 = vpop.f32.mrb[0].mxu0
        %v2264 = vadd.f32 %v1894, %v2263
        %v2265 = vpop.f32.mrb[0].mxu0
        %v2266 = vadd.f32 %v1890, %v2265
        %v2267 = vpop.f32.mrb[0].mxu0
        %v2268 = vadd.f32 %v1894, %v2267
        %2269 = vdwg.mxu0
        %2270 = vmatprep.subr.bf16.mxu0 %v2102
        %2271 = vmatpush1.bf16.msra.mxu0 %v2101
        %2272 = vmatprep.subr.bf16.mxu0 %v2106
        %2273 = vmatpush1.bf16.msra.mxu0 %v2105
        %2274 = vmatprep.subr.bf16.mxu0 %v2110
        %2275 = vmatpush1.bf16.msra.mxu0 %v2109
        %2276 = vmatprep.subr.bf16.mxu0 %v2114
        %2277 = vmatpush1.bf16.msra.mxu0 %v2113
        %2278 = vmatprep.subr.bf16.mxu0 %v2118
        %2279 = vmatpush1.bf16.msra.mxu0 %v2117
        %2280 = vmatprep.subr.bf16.mxu0 %v2122
        %2281 = vmatpush1.bf16.msra.mxu0 %v2121
        %2282 = vmatprep.subr.bf16.mxu0 %v2126
        %2283 = vmatpush1.bf16.msra.mxu0 %v2125
        %2284 = vmatprep.subr.bf16.mxu0 %v2130
        %2285 = vmatpush1.bf16.msra.mxu0 %v2129
        %2286 = vmatprep.subr.bf16.mxu0 %v2134
        %2287 = vmatpush1.bf16.msra.mxu0 %v2133
        %2288 = vmatprep.subr.bf16.mxu0 %v2138
        %2289 = vmatpush1.bf16.msra.mxu0 %v2137
        %2290 = vmatprep.subr.bf16.mxu0 %v2142
        %2291 = vmatpush1.bf16.msra.mxu0 %v2141
        %2292 = vmatprep.subr.bf16.mxu0 %v2146
        %2293 = vmatpush1.bf16.msra.mxu0 %v2145
        %2294 = vmatprep.subr.bf16.mxu0 %v2150
        %2295 = vmatpush1.bf16.msra.mxu0 %v2149
        %2296 = vmatprep.subr.bf16.mxu0 %v2154
        %2297 = vmatpush1.bf16.msra.mxu0 %v2153
        %2298 = vmatprep.subr.bf16.mxu0 %v2158
        %2299 = vmatpush1.bf16.msra.mxu0 %v2157
        %2300 = vmatprep.subr.bf16.mxu0 %v2162
        %2301 = vmatpush1.bf16.msra.mxu0 %v2161
        %2302 = vmatprep.mubr.bf16.mxu0 %v738
        %2303 = vmatmul.mubr.bf16.gmra.mrb[0].mxu0 %v1820
        %v2304 = vpop.f32.mrb[0].mxu0
        %v2305 = vadd.f32 %v1898, %v2304
        %v2306 = vpop.f32.mrb[0].mxu0
        %v2307 = vadd.f32 %v1902, %v2306
        %v2308 = vpop.f32.mrb[0].mxu0
        %v2309 = vadd.f32 %v1898, %v2308
        %v2310 = vpop.f32.mrb[0].mxu0
        %v2311 = vadd.f32 %v1902, %v2310
        %2312 = vdwg.mxu0
        %v2313 = vxor.u32 %v2262, 2147483648
        %v2314 = vxor.u32 %v2266, 2147483648
        %v2315 = vmul.f32 %v2313, 1.442695
        %v2316 = vpow.pop %v2315
        %v2317 = vmul.f32 %v2314, 1.442695
        %v2318 = vpow.pop %v2317
        %v2319 = vadd.f32 %v2316, 1.0
        %v2320 = vadd.f32 %v2318, 1.0
        %v2321 = vrcp.pop %v2319
        %v2322 = vmul.f32 1.0, %v2321
        %v2323 = vrcp.pop %v2320
        %v2324 = vmul.f32 1.0, %v2323
        %v2325 = vxor.u32 %v2264, 2147483648
        %v2326 = vxor.u32 %v2268, 2147483648
        %v2327 = vmul.f32 %v2325, 1.442695
        %v2328 = vpow.pop %v2327
        %v2329 = vmul.f32 %v2326, 1.442695
        %v2330 = vpow.pop %v2329
        %v2331 = vadd.f32 %v2328, 1.0
        %v2332 = vadd.f32 %v2330, 1.0
        %v2333 = vrcp.pop %v2331
        %v2334 = vmul.f32 1.0, %v2333
        %v2335 = vrcp.pop %v2332
        %v2336 = vmul.f32 1.0, %v2335
        %v2337 = vmul.f32 %v2322, %v2307
        %v2338 = vmul.f32 %v2324, %v2311
        %v2339 = vadd.f32 %v2305, %v2337
        %v2340 = vadd.f32 %v2309, %v2338
        %v2341 = vtanh.pop %v2339
        %v2342 = vtanh.pop %v2340
        %v2343 = vsub.f32 1.0, %v2334
        %v2344 = vsub.f32 1.0, %v2336
        %v2345 = vmul.f32 %v2343, %v2341
        %v2346 = vmul.f32 %v2344, %v2342
        %v2347 = vmul.f32 %v2334, %v732
        %v2348 = vmul.f32 %v2336, %v733
        %v2349 = vadd.f32 %v2345, %v2347
        %v2350 = vadd.f32 %v2346, %v2348
        %v2351 = vpack.c.bf16 %v1753, %v1752
        %v2352 = vpack.c.bf16 %v1755, %v1754
        %s2353 = scalar_lea.vmem %s517, 512
        %v2354 = vld [vmem:[%s2353] sm:$0xff]
        %v2355 = vld [vmem:[%s2353 + $0x8] sm:$0xff]
        %v2356 = vld [vmem:[%s2353 + $0x10] sm:$0xff]
        %v2357 = vld [vmem:[%s2353 + $0x18] sm:$0xff]
        %v2358 = vld [vmem:[%s2353 + $0x20] sm:$0xff]
        %v2359 = vld [vmem:[%s2353 + $0x28] sm:$0xff]
        %v2360 = vld [vmem:[%s2353 + $0x30] sm:$0xff]
        %v2361 = vld [vmem:[%s2353 + $0x38] sm:$0xff]
        %v2362 = vld [vmem:[%s2353 + $0x40] sm:$0xff]
        %v2363 = vld [vmem:[%s2353 + $0x48] sm:$0xff]
        %v2364 = vld [vmem:[%s2353 + $0x50] sm:$0xff]
        %v2365 = vld [vmem:[%s2353 + $0x58] sm:$0xff]
        %v2366 = vld [vmem:[%s2353 + $0x60] sm:$0xff]
        %v2367 = vld [vmem:[%s2353 + $0x68] sm:$0xff]
        %v2368 = vld [vmem:[%s2353 + $0x70] sm:$0xff]
        %v2369 = vld [vmem:[%s2353 + $0x78] sm:$0xff]
        %v2370 = vld [vmem:[%s2353 + $0x80] sm:$0xff]
        %v2371 = vld [vmem:[%s2353 + $0x88] sm:$0xff]
        %v2372 = vld [vmem:[%s2353 + $0x90] sm:$0xff]
        %v2373 = vld [vmem:[%s2353 + $0x98] sm:$0xff]
        %v2374 = vld [vmem:[%s2353 + $0xa0] sm:$0xff]
        %v2375 = vld [vmem:[%s2353 + $0xa8] sm:$0xff]
        %v2376 = vld [vmem:[%s2353 + $0xb0] sm:$0xff]
        %v2377 = vld [vmem:[%s2353 + $0xb8] sm:$0xff]
        %v2378 = vld [vmem:[%s2353 + $0xc0] sm:$0xff]
        %v2379 = vld [vmem:[%s2353 + $0xc8] sm:$0xff]
        %v2380 = vld [vmem:[%s2353 + $0xd0] sm:$0xff]
        %v2381 = vld [vmem:[%s2353 + $0xd8] sm:$0xff]
        %v2382 = vld [vmem:[%s2353 + $0xe0] sm:$0xff]
        %v2383 = vld [vmem:[%s2353 + $0xe8] sm:$0xff]
        %v2384 = vld [vmem:[%s2353 + $0xf0] sm:$0xff]
        %v2385 = vld [vmem:[%s2353 + $0xf8] sm:$0xff]
        %v2386 = vld [vmem:[%s2353 + $0x100] sm:$0xff]
        %v2387 = vld [vmem:[%s2353 + $0x108] sm:$0xff]
        %v2388 = vld [vmem:[%s2353 + $0x110] sm:$0xff]
        %v2389 = vld [vmem:[%s2353 + $0x118] sm:$0xff]
        %v2390 = vld [vmem:[%s2353 + $0x120] sm:$0xff]
        %v2391 = vld [vmem:[%s2353 + $0x128] sm:$0xff]
        %v2392 = vld [vmem:[%s2353 + $0x130] sm:$0xff]
        %v2393 = vld [vmem:[%s2353 + $0x138] sm:$0xff]
        %v2394 = vld [vmem:[%s2353 + $0x140] sm:$0xff]
        %v2395 = vld [vmem:[%s2353 + $0x148] sm:$0xff]
        %v2396 = vld [vmem:[%s2353 + $0x150] sm:$0xff]
        %v2397 = vld [vmem:[%s2353 + $0x158] sm:$0xff]
        %v2398 = vld [vmem:[%s2353 + $0x160] sm:$0xff]
        %v2399 = vld [vmem:[%s2353 + $0x168] sm:$0xff]
        %v2400 = vld [vmem:[%s2353 + $0x170] sm:$0xff]
        %v2401 = vld [vmem:[%s2353 + $0x178] sm:$0xff]
        %v2402 = vld [vmem:[%s2353 + $0x180] sm:$0xff]
        %v2403 = vld [vmem:[%s2353 + $0x188] sm:$0xff]
        %v2404 = vld [vmem:[%s2353 + $0x190] sm:$0xff]
        %v2405 = vld [vmem:[%s2353 + $0x198] sm:$0xff]
        %v2406 = vld [vmem:[%s2353 + $0x1a0] sm:$0xff]
        %v2407 = vld [vmem:[%s2353 + $0x1a8] sm:$0xff]
        %v2408 = vld [vmem:[%s2353 + $0x1b0] sm:$0xff]
        %v2409 = vld [vmem:[%s2353 + $0x1b8] sm:$0xff]
        %v2410 = vld [vmem:[%s2353 + $0x1c0] sm:$0xff]
        %v2411 = vld [vmem:[%s2353 + $0x1c8] sm:$0xff]
        %v2412 = vld [vmem:[%s2353 + $0x1d0] sm:$0xff]
        %v2413 = vld [vmem:[%s2353 + $0x1d8] sm:$0xff]
        %v2414 = vld [vmem:[%s2353 + $0x1e0] sm:$0xff]
        %v2415 = vld [vmem:[%s2353 + $0x1e8] sm:$0xff]
        %v2416 = vld [vmem:[%s2353 + $0x1f0] sm:$0xff]
        %v2417 = vld [vmem:[%s2353 + $0x1f8] sm:$0xff]
        %s2418 = scalar_lea.vmem %s521, 4
        %v2419 = vld [vmem:[%s2418] sm:$0xf]
        %v2421 = vlaneseq
        %v2422 = vshrl.u32 %v2421, 7
        %v2423 = vsub.s32 0, %v2422
        %v2424 = vrot.slane %v2419, %v2423
        %v2425 = vlaneseq
        %v2426 = vshrl.u32 %v2425, 7
        %v2427 = vsub.s32 1, %v2426
        %v2428 = vrot.slane %v2419, %v2427
        %v2429 = vlaneseq
        %v2430 = vshrl.u32 %v2429, 7
        %v2431 = vsub.s32 2, %v2430
        %v2432 = vrot.slane %v2419, %v2431
        %v2433 = vlaneseq
        %v2434 = vshrl.u32 %v2433, 7
        %v2435 = vsub.s32 3, %v2434
        %v2436 = vrot.slane %v2419, %v2435
        %v2505 = vunpack.c.l.b16 %v2354
        %v2506 = vunpack.c.h.b16 %v2354
        %v2507 = vunpack.c.l.b16 %v2355
        %v2508 = vunpack.c.h.b16 %v2355
        %v2509 = vunpack.c.l.b16 %v2356
        %v2510 = vunpack.c.h.b16 %v2356
        %v2511 = vunpack.c.l.b16 %v2357
        %v2512 = vunpack.c.h.b16 %v2357
        %v2513 = vunpack.c.l.b16 %v2358
        %v2514 = vunpack.c.h.b16 %v2358
        %v2515 = vunpack.c.l.b16 %v2359
        %v2516 = vunpack.c.h.b16 %v2359
        %v2517 = vunpack.c.l.b16 %v2360
        %v2518 = vunpack.c.h.b16 %v2360
        %v2519 = vunpack.c.l.b16 %v2361
        %v2520 = vunpack.c.h.b16 %v2361
        %v2521 = vunpack.c.l.b16 %v2362
        %v2522 = vunpack.c.h.b16 %v2362
        %v2523 = vunpack.c.l.b16 %v2363
        %v2524 = vunpack.c.h.b16 %v2363
        %v2525 = vunpack.c.l.b16 %v2364
        %v2526 = vunpack.c.h.b16 %v2364
        %v2527 = vunpack.c.l.b16 %v2365
        %v2528 = vunpack.c.h.b16 %v2365
        %v2529 = vunpack.c.l.b16 %v2366
        %v2530 = vunpack.c.h.b16 %v2366
        %v2531 = vunpack.c.l.b16 %v2367
        %v2532 = vunpack.c.h.b16 %v2367
        %v2533 = vunpack.c.l.b16 %v2368
        %v2534 = vunpack.c.h.b16 %v2368
        %v2535 = vunpack.c.l.b16 %v2369
        %v2536 = vunpack.c.h.b16 %v2369
        %v2537 = vunpack.c.l.b16 %v2370
        %v2538 = vunpack.c.h.b16 %v2370
        %v2539 = vunpack.c.l.b16 %v2371
        %v2540 = vunpack.c.h.b16 %v2371
        %v2541 = vunpack.c.l.b16 %v2372
        %v2542 = vunpack.c.h.b16 %v2372
        %v2543 = vunpack.c.l.b16 %v2373
        %v2544 = vunpack.c.h.b16 %v2373
        %v2545 = vunpack.c.l.b16 %v2374
        %v2546 = vunpack.c.h.b16 %v2374
        %v2547 = vunpack.c.l.b16 %v2375
        %v2548 = vunpack.c.h.b16 %v2375
        %v2549 = vunpack.c.l.b16 %v2376
        %v2550 = vunpack.c.h.b16 %v2376
        %v2551 = vunpack.c.l.b16 %v2377
        %v2552 = vunpack.c.h.b16 %v2377
        %v2553 = vunpack.c.l.b16 %v2378
        %v2554 = vunpack.c.h.b16 %v2378
        %v2555 = vunpack.c.l.b16 %v2379
        %v2556 = vunpack.c.h.b16 %v2379
        %v2557 = vunpack.c.l.b16 %v2380
        %v2558 = vunpack.c.h.b16 %v2380
        %v2559 = vunpack.c.l.b16 %v2381
        %v2560 = vunpack.c.h.b16 %v2381
        %v2561 = vunpack.c.l.b16 %v2382
        %v2562 = vunpack.c.h.b16 %v2382
        %v2563 = vunpack.c.l.b16 %v2383
        %v2564 = vunpack.c.h.b16 %v2383
        %v2565 = vunpack.c.l.b16 %v2384
        %v2566 = vunpack.c.h.b16 %v2384
        %v2567 = vunpack.c.l.b16 %v2385
        %v2568 = vunpack.c.h.b16 %v2385
        %v2569 = vunpack.c.l.b16 %v2386
        %v2570 = vunpack.c.h.b16 %v2386
        %v2571 = vunpack.c.l.b16 %v2387
        %v2572 = vunpack.c.h.b16 %v2387
        %v2573 = vunpack.c.l.b16 %v2388
        %v2574 = vunpack.c.h.b16 %v2388
        %v2575 = vunpack.c.l.b16 %v2389
        %v2576 = vunpack.c.h.b16 %v2389
        %v2577 = vunpack.c.l.b16 %v2390
        %v2578 = vunpack.c.h.b16 %v2390
        %v2579 = vunpack.c.l.b16 %v2391
        %v2580 = vunpack.c.h.b16 %v2391
        %v2581 = vunpack.c.l.b16 %v2392
        %v2582 = vunpack.c.h.b16 %v2392
        %v2583 = vunpack.c.l.b16 %v2393
        %v2584 = vunpack.c.h.b16 %v2393
        %v2585 = vunpack.c.l.b16 %v2394
        %v2586 = vunpack.c.h.b16 %v2394
        %v2587 = vunpack.c.l.b16 %v2395
        %v2588 = vunpack.c.h.b16 %v2395
        %v2589 = vunpack.c.l.b16 %v2396
        %v2590 = vunpack.c.h.b16 %v2396
        %v2591 = vunpack.c.l.b16 %v2397
        %v2592 = vunpack.c.h.b16 %v2397
        %v2593 = vunpack.c.l.b16 %v2398
        %v2594 = vunpack.c.h.b16 %v2398
        %v2595 = vunpack.c.l.b16 %v2399
        %v2596 = vunpack.c.h.b16 %v2399
        %v2597 = vunpack.c.l.b16 %v2400
        %v2598 = vunpack.c.h.b16 %v2400
        %v2599 = vunpack.c.l.b16 %v2401
        %v2600 = vunpack.c.h.b16 %v2401
        %v2601 = vunpack.c.l.b16 %v2402
        %v2602 = vunpack.c.h.b16 %v2402
        %v2603 = vunpack.c.l.b16 %v2403
        %v2604 = vunpack.c.h.b16 %v2403
        %v2605 = vunpack.c.l.b16 %v2404
        %v2606 = vunpack.c.h.b16 %v2404
        %v2607 = vunpack.c.l.b16 %v2405
        %v2608 = vunpack.c.h.b16 %v2405
        %v2609 = vunpack.c.l.b16 %v2406
        %v2610 = vunpack.c.h.b16 %v2406
        %v2611 = vunpack.c.l.b16 %v2407
        %v2612 = vunpack.c.h.b16 %v2407
        %v2613 = vunpack.c.l.b16 %v2408
        %v2614 = vunpack.c.h.b16 %v2408
        %v2615 = vunpack.c.l.b16 %v2409
        %v2616 = vunpack.c.h.b16 %v2409
        %v2617 = vunpack.c.l.b16 %v2410
        %v2618 = vunpack.c.h.b16 %v2410
        %v2619 = vunpack.c.l.b16 %v2411
        %v2620 = vunpack.c.h.b16 %v2411
        %v2621 = vunpack.c.l.b16 %v2412
        %v2622 = vunpack.c.h.b16 %v2412
        %v2623 = vunpack.c.l.b16 %v2413
        %v2624 = vunpack.c.h.b16 %v2413
        %v2625 = vunpack.c.l.b16 %v2414
        %v2626 = vunpack.c.h.b16 %v2414
        %v2627 = vunpack.c.l.b16 %v2415
        %v2628 = vunpack.c.h.b16 %v2415
        %v2629 = vunpack.c.l.b16 %v2416
        %v2630 = vunpack.c.h.b16 %v2416
        %v2631 = vunpack.c.l.b16 %v2417
        %v2632 = vunpack.c.h.b16 %v2417
        %v2633 = vpack.c.b16 %v2509, %v2505
        %v2634 = vpack.c.b16 %v2510, %v2506
        %v2635 = vpack.c.b16 %v2511, %v2507
        %v2636 = vpack.c.b16 %v2512, %v2508
        %v2637 = vpack.c.b16 %v2517, %v2513
        %v2638 = vpack.c.b16 %v2518, %v2514
        %v2639 = vpack.c.b16 %v2519, %v2515
        %v2640 = vpack.c.b16 %v2520, %v2516
        %v2641 = vpack.c.b16 %v2525, %v2521
        %v2642 = vpack.c.b16 %v2526, %v2522
        %v2643 = vpack.c.b16 %v2527, %v2523
        %v2644 = vpack.c.b16 %v2528, %v2524
        %v2645 = vpack.c.b16 %v2533, %v2529
        %v2646 = vpack.c.b16 %v2534, %v2530
        %v2647 = vpack.c.b16 %v2535, %v2531
        %v2648 = vpack.c.b16 %v2536, %v2532
        %v2649 = vpack.c.b16 %v2541, %v2537
        %v2650 = vpack.c.b16 %v2542, %v2538
        %v2651 = vpack.c.b16 %v2543, %v2539
        %v2652 = vpack.c.b16 %v2544, %v2540
        %v2653 = vpack.c.b16 %v2549, %v2545
        %v2654 = vpack.c.b16 %v2550, %v2546
        %v2655 = vpack.c.b16 %v2551, %v2547
        %v2656 = vpack.c.b16 %v2552, %v2548
        %v2657 = vpack.c.b16 %v2557, %v2553
        %v2658 = vpack.c.b16 %v2558, %v2554
        %v2659 = vpack.c.b16 %v2559, %v2555
        %v2660 = vpack.c.b16 %v2560, %v2556
        %v2661 = vpack.c.b16 %v2565, %v2561
        %v2662 = vpack.c.b16 %v2566, %v2562
        %v2663 = vpack.c.b16 %v2567, %v2563
        %v2664 = vpack.c.b16 %v2568, %v2564
        %v2665 = vpack.c.b16 %v2573, %v2569
        %v2666 = vpack.c.b16 %v2574, %v2570
        %v2667 = vpack.c.b16 %v2575, %v2571
        %v2668 = vpack.c.b16 %v2576, %v2572
        %v2669 = vpack.c.b16 %v2581, %v2577
        %v2670 = vpack.c.b16 %v2582, %v2578
        %v2671 = vpack.c.b16 %v2583, %v2579
        %v2672 = vpack.c.b16 %v2584, %v2580
        %v2673 = vpack.c.b16 %v2589, %v2585
        %v2674 = vpack.c.b16 %v2590, %v2586
        %v2675 = vpack.c.b16 %v2591, %v2587
        %v2676 = vpack.c.b16 %v2592, %v2588
        %v2677 = vpack.c.b16 %v2597, %v2593
        %v2678 = vpack.c.b16 %v2598, %v2594
        %v2679 = vpack.c.b16 %v2599, %v2595
        %v2680 = vpack.c.b16 %v2600, %v2596
        %v2681 = vpack.c.b16 %v2605, %v2601
        %v2682 = vpack.c.b16 %v2606, %v2602
        %v2683 = vpack.c.b16 %v2607, %v2603
        %v2684 = vpack.c.b16 %v2608, %v2604
        %v2685 = vpack.c.b16 %v2613, %v2609
        %v2686 = vpack.c.b16 %v2614, %v2610
        %v2687 = vpack.c.b16 %v2615, %v2611
        %v2688 = vpack.c.b16 %v2616, %v2612
        %v2689 = vpack.c.b16 %v2621, %v2617
        %v2690 = vpack.c.b16 %v2622, %v2618
        %v2691 = vpack.c.b16 %v2623, %v2619
        %v2692 = vpack.c.b16 %v2624, %v2620
        %v2693 = vpack.c.b16 %v2629, %v2625
        %v2694 = vpack.c.b16 %v2630, %v2626
        %v2695 = vpack.c.b16 %v2631, %v2627
        %v2696 = vpack.c.b16 %v2632, %v2628
        %2761 = vmatprep.subr.bf16.mxu0 %v2634
        %2762 = vmatpush1.bf16.msra.mxu0 %v2633
        %2763 = vmatprep.subr.bf16.mxu0 %v2638
        %2764 = vmatpush1.bf16.msra.mxu0 %v2637
        %2765 = vmatprep.subr.bf16.mxu0 %v2642
        %2766 = vmatpush1.bf16.msra.mxu0 %v2641
        %2767 = vmatprep.subr.bf16.mxu0 %v2646
        %2768 = vmatpush1.bf16.msra.mxu0 %v2645
        %2769 = vmatprep.subr.bf16.mxu0 %v2650
        %2770 = vmatpush1.bf16.msra.mxu0 %v2649
        %2771 = vmatprep.subr.bf16.mxu0 %v2654
        %2772 = vmatpush1.bf16.msra.mxu0 %v2653
        %2773 = vmatprep.subr.bf16.mxu0 %v2658
        %2774 = vmatpush1.bf16.msra.mxu0 %v2657
        %2775 = vmatprep.subr.bf16.mxu0 %v2662
        %2776 = vmatpush1.bf16.msra.mxu0 %v2661
        %2777 = vmatprep.subr.bf16.mxu0 %v2666
        %2778 = vmatpush1.bf16.msra.mxu0 %v2665
        %2779 = vmatprep.subr.bf16.mxu0 %v2670
        %2780 = vmatpush1.bf16.msra.mxu0 %v2669
        %2781 = vmatprep.subr.bf16.mxu0 %v2674
        %2782 = vmatpush1.bf16.msra.mxu0 %v2673
        %2783 = vmatprep.subr.bf16.mxu0 %v2678
        %2784 = vmatpush1.bf16.msra.mxu0 %v2677
        %2785 = vmatprep.subr.bf16.mxu0 %v2682
        %2786 = vmatpush1.bf16.msra.mxu0 %v2681
        %2787 = vmatprep.subr.bf16.mxu0 %v2686
        %2788 = vmatpush1.bf16.msra.mxu0 %v2685
        %2789 = vmatprep.subr.bf16.mxu0 %v2690
        %2790 = vmatpush1.bf16.msra.mxu0 %v2689
        %2791 = vmatprep.subr.bf16.mxu0 %v2694
        %2792 = vmatpush1.bf16.msra.mxu0 %v2693
        %2793 = vmatprep.mubr.bf16.mxu0 %v739
        %2794 = vmatmul.mubr.bf16.gmra.mrb[0].mxu0 %v2351
        %v2795 = vpop.f32.mrb[0].mxu0
        %v2796 = vadd.f32 %v2424, %v2795
        %v2797 = vpop.f32.mrb[0].mxu0
        %v2798 = vadd.f32 %v2428, %v2797
        %v2799 = vpop.f32.mrb[0].mxu0
        %v2800 = vadd.f32 %v2424, %v2799
        %v2801 = vpop.f32.mrb[0].mxu0
        %v2802 = vadd.f32 %v2428, %v2801
        %2803 = vmatprep.mubr.bf16.mxu0 %v740
        %2804 = vmatmul.mubr.bf16.gmra.mrb[0].mxu0 %v2352
        %v2805 = vpop.f32.mrb[0].mxu0
        %v2806 = vadd.f32 %v2424, %v2805
        %v2807 = vpop.f32.mrb[0].mxu0
        %v2808 = vadd.f32 %v2428, %v2807
        %v2809 = vpop.f32.mrb[0].mxu0
        %v2810 = vadd.f32 %v2424, %v2809
        %v2811 = vpop.f32.mrb[0].mxu0
        %v2812 = vadd.f32 %v2428, %v2811
        %2813 = vdwg.mxu0
        %2814 = vmatprep.subr.bf16.mxu0 %v2636
        %2815 = vmatpush1.bf16.msra.mxu0 %v2635
        %2816 = vmatprep.subr.bf16.mxu0 %v2640
        %2817 = vmatpush1.bf16.msra.mxu0 %v2639
        %2818 = vmatprep.subr.bf16.mxu0 %v2644
        %2819 = vmatpush1.bf16.msra.mxu0 %v2643
        %2820 = vmatprep.subr.bf16.mxu0 %v2648
        %2821 = vmatpush1.bf16.msra.mxu0 %v2647
        %2822 = vmatprep.subr.bf16.mxu0 %v2652
        %2823 = vmatpush1.bf16.msra.mxu0 %v2651
        %2824 = vmatprep.subr.bf16.mxu0 %v2656
        %2825 = vmatpush1.bf16.msra.mxu0 %v2655
        %2826 = vmatprep.subr.bf16.mxu0 %v2660
        %2827 = vmatpush1.bf16.msra.mxu0 %v2659
        %2828 = vmatprep.subr.bf16.mxu0 %v2664
        %2829 = vmatpush1.bf16.msra.mxu0 %v2663
        %2830 = vmatprep.subr.bf16.mxu0 %v2668
        %2831 = vmatpush1.bf16.msra.mxu0 %v2667
        %2832 = vmatprep.subr.bf16.mxu0 %v2672
        %2833 = vmatpush1.bf16.msra.mxu0 %v2671
        %2834 = vmatprep.subr.bf16.mxu0 %v2676
        %2835 = vmatpush1.bf16.msra.mxu0 %v2675
        %2836 = vmatprep.subr.bf16.mxu0 %v2680
        %2837 = vmatpush1.bf16.msra.mxu0 %v2679
        %2838 = vmatprep.subr.bf16.mxu0 %v2684
        %2839 = vmatpush1.bf16.msra.mxu0 %v2683
        %2840 = vmatprep.subr.bf16.mxu0 %v2688
        %2841 = vmatpush1.bf16.msra.mxu0 %v2687
        %2842 = vmatprep.subr.bf16.mxu0 %v2692
        %2843 = vmatpush1.bf16.msra.mxu0 %v2691
        %2844 = vmatprep.subr.bf16.mxu0 %v2696
        %2845 = vmatpush1.bf16.msra.mxu0 %v2695
        %2846 = vmatprep.mubr.bf16.mxu0 %v739
        %2847 = vmatmul.mubr.bf16.gmra.mrb[0].mxu0 %v2351
        %v2848 = vpop.f32.mrb[0].mxu0
        %v2849 = vadd.f32 %v2432, %v2848
        %v2850 = vpop.f32.mrb[0].mxu0
        %v2851 = vadd.f32 %v2436, %v2850
        %v2852 = vpop.f32.mrb[0].mxu0
        %v2853 = vadd.f32 %v2432, %v2852
        %v2854 = vpop.f32.mrb[0].mxu0
        %v2855 = vadd.f32 %v2436, %v2854
        %2856 = vmatprep.mubr.bf16.mxu0 %v740
        %2857 = vmatmul.mubr.bf16.gmra.mrb[0].mxu0 %v2352
        %v2858 = vpop.f32.mrb[0].mxu0
        %v2859 = vadd.f32 %v2432, %v2858
        %v2860 = vpop.f32.mrb[0].mxu0
        %v2861 = vadd.f32 %v2436, %v2860
        %v2862 = vpop.f32.mrb[0].mxu0
        %v2863 = vadd.f32 %v2432, %v2862
        %v2864 = vpop.f32.mrb[0].mxu0
        %v2865 = vadd.f32 %v2436, %v2864
        %2866 = vdwg.mxu0
        %v2867 = vxor.u32 %v2796, 2147483648
        %v2868 = vxor.u32 %v2800, 2147483648
        %v2869 = vxor.u32 %v2806, 2147483648
        %v2870 = vxor.u32 %v2810, 2147483648
        %v2871 = vmul.f32 %v2867, 1.442695
        %v2872 = vpow.pop %v2871
        %v2873 = vmul.f32 %v2868, 1.442695
        %v2874 = vpow.pop %v2873
        %v2875 = vmul.f32 %v2869, 1.442695
        %v2876 = vpow.pop %v2875
        %v2877 = vmul.f32 %v2870, 1.442695
        %v2878 = vpow.pop %v2877
        %v2879 = vadd.f32 %v2872, 1.0
        %v2880 = vadd.f32 %v2874, 1.0
        %v2881 = vadd.f32 %v2876, 1.0
        %v2882 = vadd.f32 %v2878, 1.0
        %v2883 = vrcp.pop %v2879
        %v2884 = vmul.f32 1.0, %v2883
        %v2885 = vrcp.pop %v2880
        %v2886 = vmul.f32 1.0, %v2885
        %v2887 = vrcp.pop %v2881
        %v2888 = vmul.f32 1.0, %v2887
        %v2889 = vrcp.pop %v2882
        %v2890 = vmul.f32 1.0, %v2889
        %v2891 = vxor.u32 %v2798, 2147483648
        %v2892 = vxor.u32 %v2802, 2147483648
        %v2893 = vxor.u32 %v2808, 2147483648
        %v2894 = vxor.u32 %v2812, 2147483648
        %v2895 = vmul.f32 %v2891, 1.442695
        %v2896 = vpow.pop %v2895
        %v2897 = vmul.f32 %v2892, 1.442695
        %v2898 = vpow.pop %v2897
        %v2899 = vmul.f32 %v2893, 1.442695
        %v2900 = vpow.pop %v2899
        %v2901 = vmul.f32 %v2894, 1.442695
        %v2902 = vpow.pop %v2901
        %v2903 = vadd.f32 %v2896, 1.0
        %v2904 = vadd.f32 %v2898, 1.0
        %v2905 = vadd.f32 %v2900, 1.0
        %v2906 = vadd.f32 %v2902, 1.0
        %v2907 = vrcp.pop %v2903
        %v2908 = vmul.f32 1.0, %v2907
        %v2909 = vrcp.pop %v2904
        %v2910 = vmul.f32 1.0, %v2909
        %v2911 = vrcp.pop %v2905
        %v2912 = vmul.f32 1.0, %v2911
        %v2913 = vrcp.pop %v2906
        %v2914 = vmul.f32 1.0, %v2913
        %v2915 = vmul.f32 %v2884, %v2851
        %v2916 = vmul.f32 %v2886, %v2855
        %v2917 = vmul.f32 %v2888, %v2861
        %v2918 = vmul.f32 %v2890, %v2865
        %v2919 = vadd.f32 %v2849, %v2915
        %v2920 = vadd.f32 %v2853, %v2916
        %v2921 = vadd.f32 %v2859, %v2917
        %v2922 = vadd.f32 %v2863, %v2918
        %v2923 = vtanh.pop %v2919
        %v2924 = vtanh.pop %v2920
        %v2925 = vtanh.pop %v2921
        %v2926 = vtanh.pop %v2922
        %v2927 = vsub.f32 1.0, %v2908
        %v2928 = vsub.f32 1.0, %v2910
        %v2929 = vsub.f32 1.0, %v2912
        %v2930 = vsub.f32 1.0, %v2914
        %v2931 = vmul.f32 %v2927, %v2923
        %v2932 = vmul.f32 %v2928, %v2924
        %v2933 = vmul.f32 %v2929, %v2925
        %v2934 = vmul.f32 %v2930, %v2926
        %v2935 = vmul.f32 %v2908, %v734
        %v2936 = vmul.f32 %v2910, %v735
        %v2937 = vmul.f32 %v2912, %v736
        %v2938 = vmul.f32 %v2914, %v737
        %v2939 = vadd.f32 %v2931, %v2935
        %v2940 = vadd.f32 %v2932, %v2936
        %v2941 = vadd.f32 %v2933, %v2937
        %v2942 = vadd.f32 %v2934, %v2938
        %2943 = vst [vmem:[#allocation2] sm:$0xff] %v2349
        %2944 = vst [vmem:[#allocation2 + $0x8] sm:$0xff] %v2350
        %2945 = vst [vmem:[#allocation3] sm:$0xff] %v2939
        %2946 = vst [vmem:[#allocation3 + $0x8] sm:$0xff] %v2940
        %2947 = vst [vmem:[#allocation3 + $0x10] sm:$0xff] %v2941
        %2948 = vst [vmem:[#allocation3 + $0x18] sm:$0xff] %v2942
        %v2949 = vld [vmem:[#allocation4] sm:$0xff]
        %v2950 = vld [vmem:[#allocation4 + $0x8] sm:$0xff]
        %v2951 = vadd.f32 %v2949, %v2349
        %v2952 = vadd.f32 %v2950, %v2350
        %2953 = vst [vmem:[#allocation4] sm:$0xff] %v2951
        %2954 = vst [vmem:[#allocation4 + $0x8] sm:$0xff] %v2952
        %v2955 = vld [vmem:[#allocation5] sm:$0xff]
        %v2956 = vld [vmem:[#allocation5 + $0x8] sm:$0xff]
        %v2957 = vld [vmem:[#allocation5 + $0x10] sm:$0xff]
        %v2958 = vld [vmem:[#allocation5 + $0x18] sm:$0xff]
        %v2959 = vadd.f32 %v2955, %v2939
        %v2960 = vadd.f32 %v2956, %v2940
        %v2961 = vadd.f32 %v2957, %v2941
        %v2962 = vadd.f32 %v2958, %v2942
        %2963 = vst [vmem:[#allocation5] sm:$0xff] %v2959
        %2964 = vst [vmem:[#allocation5 + $0x8] sm:$0xff] %v2960
        %2965 = vst [vmem:[#allocation5 + $0x10] sm:$0xff] %v2961
        %2966 = vst [vmem:[#allocation5 + $0x18] sm:$0xff] %v2962
        %p2967 = scmp.eq.s32.totalorder %s30, 4
        // Predicated region
        $region205: #{graph_encoder_forward.1} parent=63 // pred_check
          %p2968 = pneg %p2967
        $region206: #{graph_encoder_forward.1} parent=63 // pred_check_branch
          %2970 = sbr.rel (%p2968) target = $region208
        $region207: #{graph_encoder_forward.1} parent=63 // pred_region
          %v2971 = vld [vmem:[%s13] sm:$0x1]
          %v2972 = vld [vmem:[%s14] sm:$0x1]
          %v2973 = vld [vmem:[#allocation4] sm:$0xff]
          %v2974 = vld [vmem:[#allocation4 + $0x8] sm:$0xff]
          %2975 = vadd.xlane.f32.xlu0 %v2973
          %v2976 = vpop.xlane.xlu0 %2975
          %2977 = vadd.xlane.f32.xlu0 %v2974
          %v2978 = vpop.xlane.xlu0 %2977
          %v2979 = vmul.f32 %v2976, %v1587
          %v2980 = vmul.f32 %v2978, %v1587
          %v2981 = vsub.f32 %v2973, %v2979
          %v2982 = vsub.f32 %v2974, %v2980
          %v2983 = vmul.f32 %v2981, %v2981
          %v2984 = vmul.f32 %v2982, %v2982
          %2985 = vadd.xlane.f32.xlu0 %v2983
          %v2986 = vpop.xlane.xlu0 %2985
          %2987 = vadd.xlane.f32.xlu0 %v2984
          %v2988 = vpop.xlane.xlu0 %2987
          %v2989 = vmul.f32 %v2986, %v1587
          %v2990 = vmul.f32 %v2988, %v1587
          %v2991 = vadd.f32 %v2989, 1e-05
          %v2992 = vadd.f32 %v2990, 1e-05
          %v2993 = vrsqrt.pop %v2991
          %v2994 = vrsqrt.pop %v2992
          %v2995 = vmul.f32 %v2981, %v2993
          %v2996 = vmul.f32 %v2982, %v2994
          %v2998 = vlaneseq
          %v2999 = vshrl.u32 %v2998, 7
          %v3000 = vsub.s32 0, %v2999
          %v3001 = vrot.slane %v2971, %v3000
          %v3003 = vmul.f32 %v2995, %v3001
          %v3004 = vmul.f32 %v2996, %v3001
          %v3006 = vlaneseq
          %v3007 = vshrl.u32 %v3006, 7
          %v3008 = vsub.s32 0, %v3007
          %v3009 = vrot.slane %v2972, %v3008
          %v3011 = vadd.f32 %v3003, %v3009
          %v3012 = vadd.f32 %v3004, %v3009
          %3013 = vst [vmem:[#allocation9] sm:$0xff] %v3011
          %3014 = vst [vmem:[#allocation9 + $0x8] sm:$0xff] %v3012
          %v3015 = vld [vmem:[#allocation5] sm:$0xff]
          %v3016 = vld [vmem:[#allocation5 + $0x8] sm:$0xff]
          %v3017 = vld [vmem:[#allocation5 + $0x10] sm:$0xff]
          %v3018 = vld [vmem:[#allocation5 + $0x18] sm:$0xff]
          %3019 = vadd.xlane.f32.xlu0 %v3015
          %v3020 = vpop.xlane.xlu0 %3019
          %3021 = vadd.xlane.f32.xlu0 %v3016
          %v3022 = vpop.xlane.xlu0 %3021
          %3023 = vadd.xlane.f32.xlu0 %v3017
          %v3024 = vpop.xlane.xlu0 %3023
          %3025 = vadd.xlane.f32.xlu0 %v3018
          %v3026 = vpop.xlane.xlu0 %3025
          %v3027 = vmul.f32 %v3020, %v1587
          %v3028 = vmul.f32 %v3022, %v1587
          %v3029 = vmul.f32 %v3024, %v1587
          %v3030 = vmul.f32 %v3026, %v1587
          %v3031 = vsub.f32 %v3015, %v3027
          %v3032 = vsub.f32 %v3016, %v3028
          %v3033 = vsub.f32 %v3017, %v3029
          %v3034 = vsub.f32 %v3018, %v3030
          %v3035 = vmul.f32 %v3031, %v3031
          %v3036 = vmul.f32 %v3032, %v3032
          %v3037 = vmul.f32 %v3033, %v3033
          %v3038 = vmul.f32 %v3034, %v3034
          %3039 = vadd.xlane.f32.xlu0 %v3035
          %v3040 = vpop.xlane.xlu0 %3039
          %3041 = vadd.xlane.f32.xlu0 %v3036
          %v3042 = vpop.xlane.xlu0 %3041
          %3043 = vadd.xlane.f32.xlu0 %v3037
          %v3044 = vpop.xlane.xlu0 %3043
          %3045 = vadd.xlane.f32.xlu0 %v3038
          %v3046 = vpop.xlane.xlu0 %3045
          %v3047 = vmul.f32 %v3040, %v1587
          %v3048 = vmul.f32 %v3042, %v1587
          %v3049 = vmul.f32 %v3044, %v1587
          %v3050 = vmul.f32 %v3046, %v1587
          %v3051 = vadd.f32 %v3047, 1e-05
          %v3052 = vadd.f32 %v3048, 1e-05
          %v3053 = vadd.f32 %v3049, 1e-05
          %v3054 = vadd.f32 %v3050, 1e-05
          %v3055 = vrsqrt.pop %v3051
          %v3056 = vrsqrt.pop %v3052
          %v3057 = vrsqrt.pop %v3053
          %v3058 = vrsqrt.pop %v3054
          %v3059 = vmul.f32 %v3031, %v3055
          %v3060 = vmul.f32 %v3032, %v3056
          %v3061 = vmul.f32 %v3033, %v3057
          %v3062 = vmul.f32 %v3034, %v3058
          %v3063 = vmul.f32 %v3059, %v3001
          %v3064 = vmul.f32 %v3060, %v3001
          %v3065 = vmul.f32 %v3061, %v3001
          %v3066 = vmul.f32 %v3062, %v3001
          %v3067 = vadd.f32 %v3063, %v3009
          %v3068 = vadd.f32 %v3064, %v3009
          %v3069 = vadd.f32 %v3065, %v3009
          %v3070 = vadd.f32 %v3066, %v3009
          %3071 = vst [vmem:[#allocation11] sm:$0xff] %v3067
          %3072 = vst [vmem:[#allocation11 + $0x8] sm:$0xff] %v3068
          %3073 = vst [vmem:[#allocation11 + $0x10] sm:$0xff] %v3069
          %3074 = vst [vmem:[#allocation11 + $0x18] sm:$0xff] %v3070
        $region208: #{graph_encoder_forward.1} parent=63 // pred_fallthru
          _
        // Predicated region
        $region209: #{graph_encoder_forward.1} parent=63 // pred_check
          %p3075 = pneg %p314
        $region210: #{graph_encoder_forward.1} parent=63 // pred_check_branch
          %3077 = sbr.rel (%p3075) target = $region212
        $region211: #{graph_encoder_forward.1} parent=63 // pred_region
          %s3079 = ssub.s32 256, 256
          %3080 = vsyncadd [#allocation10], %s3079
          %s3081 = sshll.u32 [#allocation9], 4
          %s3082 = int_to_ptr.vmem [resolvable:$true] %s3081
          %3087 = dma.vmem_to_hbm [thread:$0]  %s3082, 256, %s15, [#allocation10], 128, 128, 8
        $region212: #{graph_encoder_forward.1} parent=63 // pred_fallthru
          _
        // Predicated region
        $region213: #{graph_encoder_forward.1} parent=63 // pred_check
          %p3088 = pneg %p335
        $region214: #{graph_encoder_forward.1} parent=63 // pred_check_branch
          %3090 = sbr.rel (%p3088) target = $region216
        $region215: #{graph_encoder_forward.1} parent=63 // pred_region
          %s3092 = ssub.s32 512, 512
          %3093 = vsyncadd [#allocation12], %s3092
          %s3094 = sshll.u32 [#allocation11], 4
          %s3095 = int_to_ptr.vmem [resolvable:$true] %s3094
          %3100 = dma.vmem_to_hbm [thread:$0]  %s3095, 512, %s16, [#allocation12], 128, 128, 8
        $region216: #{graph_encoder_forward.1} parent=63 // pred_fallthru
          _
        // Predicated region
        $region217: #{graph_encoder_forward.1} parent=63 // pred_check
          %p3101 = pneg %p314
        $region218: #{graph_encoder_forward.1} parent=63 // pred_check_branch
          %3103 = sbr.rel (%p3101) target = $region220
        $region219: #{graph_encoder_forward.1} parent=63 // pred_region
          %3104 = dma.done [#allocation10], 256
        $region220: #{graph_encoder_forward.1} parent=63 // pred_fallthru
          _
        // Predicated region
        $region221: #{graph_encoder_forward.1} parent=63 // pred_check
          %p3105 = pneg %p335
        $region222: #{graph_encoder_forward.1} parent=63 // pred_check_branch
          %3107 = sbr.rel (%p3105) target = $region224
        $region223: #{graph_encoder_forward.1} parent=63 // pred_region
          %3108 = dma.done [#allocation12], 512
        $region224: #{graph_encoder_forward.1} parent=63 // pred_fallthru
          _
      $region64: #{graph_encoder_forward.1} parent=5 // pred_fallthru
        _
      %p3109 = scmp.le.s32.totalorder 2, %s25
      // Predicated region
      $region225: #{graph_encoder_forward.1} parent=5 // pred_check
        %p3110 = pneg %p3109
      $region226: #{graph_encoder_forward.1} parent=5 // pred_check_branch
        %3112 = sbr.rel (%p3110) target = $region228
      $region227: #{graph_encoder_forward.1} parent=5 // pred_region
        %s3113 = ssub.s32 %s25, 2
      $region228: #{graph_encoder_forward.1} parent=5 // pred_fallthru
        _
    $region6: #{graph_encoder_forward.1} parent=1 // loop_footer
      %s29 = sadd.s32 1, %s25
    $region7: #{graph_encoder_forward.1} parent=1 // loop_footer_branch
      %24 = sbr.rel target = $region3
    $region8: #{graph_encoder_forward.1} parent=1 // loop_exit
      _
    %3114 = vsyncpa [#allocation10], 1
    %s3115 = scalar_lea.sflag [#allocation10], 1
    %3116 = vsyncpa %s3115, 1
    %3117 = vsyncpa [#allocation12], 1
  %3118 = vsyncmov [#allocation8]
  %s3119 = vpop.sfrf %3118
  %p3120 = scmp.eq.s32.totalorder %s3119, 0
  %p3121 = pneg %p3120
  %3123 = shalt.err (%p3121)
  %s3124 = scalar_lea.sflag [#allocation8], 1
  %3125 = vsyncmov %s3124
  %s3126 = vpop.sfrf %3125
  %p3127 = scmp.eq.s32.totalorder %s3126, 0
  %p3128 = pneg %p3127
  %3130 = shalt.err (%p3128)
  %s3131 = scalar_lea.sflag [#allocation8], 2
  %3132 = vsyncmov %s3131
  %s3133 = vpop.sfrf %3132
  %p3134 = scmp.eq.s32.totalorder %s3133, 0
  %p3135 = pneg %p3134
  %3137 = shalt.err (%p3135)
  %s3138 = scalar_lea.sflag [#allocation8], 3
  %3139 = vsyncmov %s3138
  %s3140 = vpop.sfrf %3139
  %p3141 = scmp.eq.s32.totalorder %s3140, 0
  %p3142 = pneg %p3141
  %3144 = shalt.err (%p3142)

</llo_original>
